<compile_context>
chip_gen: v7x
topology: tpu7x:2x2x1
jax: 0.10.0
libtpu: 0.0.40
codegen_flags: <defaults>
</compile_context>

<pallas_src>
import functools

import jax
import jax.numpy as jnp
from jax.experimental import pallas as pl
from jax.experimental.pallas import tpu as pltpu

# Full-f32 matmul precision so the Pallas kernels and the pure-JAX reference agree tightly.
jax.config.update("jax_default_matmul_precision", "highest")


# ---------------------------------------------------------------------------
# Stage 1: MLP_params(2 -> [4, 4, 1], Tanh) over all (N*F) 2-vectors, feature-major.
# ---------------------------------------------------------------------------
def _mlp_in_kernel(*refs, n_layers):
    x_ref = refs[0]
    out_ref = refs[-1]
    params = refs[1:-1]

    h = x_ref[...]                                   # (fan_in0, T) f32; rows = features, lanes = batch
    for l in range(n_layers):
        w = params[2 * l][...]                       # (fan_out, fan_in)  (PyTorch Linear layout)
        b = params[2 * l + 1][...]                   # (fan_out, 1)
        fan_in = w.shape[1]
        # Tiny contraction (fan_in in {2, 4}) -> lane-dense VPU broadcast-FMAs.
        acc = w[:, 0:1] * h[0:1, :]                  # (fan_out, T)
        for k in range(1, fan_in):
            acc = acc + w[:, k:k + 1] * h[k:k + 1, :]
        # MLP_params appends the activation after EVERY Linear (including the last) -> Tanh.
        h = jnp.tanh(acc + b)
    out_ref[...] = h                                 # (1, T), lane-dense store


def _mlp_in_forward(x2t, layers, *, tile_b=4096):
    """x2t: (2, B) feature-major f32 inputs; layers: [(W(out,in), b(out,1)), ...]."""
    in_dim, B = x2t.shape
    out_dim = layers[-1][0].shape[0]

    # Lane tile: large, multiple of 128, but keep >= 2 grid steps when possible so
    # dimension_semantics=("parallel",) can split the batch across TensorCores (v7x).
    b128 = pl.cdiv(B, 128) * 128
    if b128 >= 256:
        tile_b = min(tile_b, max(128, (b128 // 2) // 128 * 128))
    else:
        tile_b = 128
    num_tiles = pl.cdiv(B, tile_b)
    b_pad = num_tiles * tile_b
    if b_pad != B:
        x2t = jnp.pad(x2t, ((0, 0), (0, b_pad - B)))   # padded rows are sliced off below

    flat_params = []
    in_specs = [pl.BlockSpec((in_dim, tile_b), lambda i: (0, i))]
    for w, b in layers:
        flat_params += [w, b]
        in_specs.append(pl.BlockSpec(w.shape, lambda i: (0, 0)))   # tiny, grid-invariant
        in_specs.append(pl.BlockSpec(b.shape, lambda i: (0, 0)))

    out = pl.pallas_call(
        functools.partial(_mlp_in_kernel, n_layers=len(layers)),
        out_shape=jax.ShapeDtypeStruct((out_dim, b_pad), jnp.float32),
        grid=(num_tiles,),
        in_specs=in_specs,
        out_specs=pl.BlockSpec((out_dim, tile_b), lambda i: (0, i)),
        compiler_params=pltpu.CompilerParams(
            dimension_semantics=("parallel",),
            vmem_limit_bytes=32 * 1024 * 1024,        # explicit, safe on v5e/v6e/v7x
        ),
    )(x2t, *flat_params)
    return out[:, :B]


# ---------------------------------------------------------------------------
# Stage 2: softmax(x x^T, dim=0) @ x, mean pairwise sq. distance, alpha/beta heads.
# ---------------------------------------------------------------------------
def _interaction_kernel(x_ref, wa0_ref, ba0_ref, wa1_ref, ba1_ref,
                        wb0_ref, bb0_ref, wb1_ref, bb1_ref,
                        y_ref, alpha_ref, beta_ref, *, slope):
    x = x_ref[...]                                    # (N, F) f32
    n = float(x.shape[0])

    # s = x @ x.T  (contract the feature axis of both operands, no explicit transpose).
    s = jax.lax.dot_general(x, x, (((1,), (1,)), ((), ())),
                            preferred_element_type=jnp.float32)      # (N, N)
    # softmax over dim 0 (each column sums to 1), numerically stable.
    p = jnp.exp(s - jnp.max(s, axis=0, keepdims=True))
    a = p / jnp.sum(p, axis=0, keepdims=True)
    y = jnp.dot(a, x, preferred_element_type=jnp.float32)            # (N, F)
    y_ref[...] = y

    # mean_ij ||y_i - y_j||^2 = 2*mean_i ||y_i||^2 - 2*mean_ij <y_i, y_j>
    g = jax.lax.dot_general(y, y, (((1,), (1,)), ((), ())),
                            preferred_element_type=jnp.float32)      # (N, N) Gram matrix
    sum_rn = jnp.sum(jnp.sum(y * y, axis=1, keepdims=True), axis=0, keepdims=True)  # (1,1)
    sum_g = jnp.sum(jnp.sum(g, axis=1, keepdims=True), axis=0, keepdims=True)       # (1,1)
    m = 2.0 * (sum_rn / n) - 2.0 * (sum_g / (n * n))                 # (1, 1) = mean(nodalDistance)

    def scalar_mlp(w0, b0, w1c, b1):
        # MLP_params(1 -> [2, 1], Tanh): Tanh after both Linears; pure broadcast math.
        h = jnp.tanh(w0 * m + b0)                                    # (2, 1)
        return jnp.tanh(jnp.sum(w1c * h, axis=0, keepdims=True) + b1)  # (1, 1)

    alpha_ref[...] = jnp.exp(slope * scalar_mlp(wa0_ref[...], ba0_ref[...],
                                                wa1_ref[...], ba1_ref[...]))
    beta_ref[...] = jnp.exp(-slope * scalar_mlp(wb0_ref[...], bb0_ref[...],
                                                wb1_ref[...], bb1_ref[...]))


def _interaction_forward(xf, alpha_layers, beta_layers, *, slope=3.0):
    n, f = xf.shape
    (wa0, ba0), (wa1, ba1) = alpha_layers
    (wb0, bb0), (wb1, bb1) = beta_layers
    # Second-layer weights are fed as columns so the scalar MLP is pure broadcast math.
    params = (wa0, ba0, wa1.T, ba1, wb0, bb0, wb1.T, bb1)

    def full_spec(arr):
        return pl.BlockSpec(arr.shape, lambda i: (0, 0))

    # TODO(synk): for very large agent counts, tile the (N, N) softmax instead of keeping
    # all N x N intermediates resident in VMEM (fine for typical flocking sizes).
    return pl.pallas_call(
        functools.partial(_interaction_kernel, slope=slope),
        out_shape=(jax.ShapeDtypeStruct((n, f), jnp.float32),
                   jax.ShapeDtypeStruct((1, 1), jnp.float32),
                   jax.ShapeDtypeStruct((1, 1), jnp.float32)),
        grid=(1,),
        in_specs=[full_spec(xf)] + [full_spec(p) for p in params],
        out_specs=(pl.BlockSpec((n, f), lambda i: (0, 0)),
                   pl.BlockSpec((1, 1), lambda i: (0, 0)),
                   pl.BlockSpec((1, 1), lambda i: (0, 0))),
        compiler_params=pltpu.CompilerParams(
            dimension_semantics=("arbitrary",),
            vmem_limit_bytes=32 * 1024 * 1024,
        ),
    )(xf, *params)


# ---------------------------------------------------------------------------
# Full module forward + parameter init + pure-JAX reference.
# ---------------------------------------------------------------------------
def encoder_model_flocking_forward(x, params, *, tile_b=4096, slope=3.0):
    """JAX/Pallas equivalent of encoderModelFlocking.forward.

    x: (N, F, 2) float32. Returns (x_out (N, F), alpha (1,), beta (1,)).
    """
    n, f, two = x.shape
    assert two == 2, "encoderModelFlocking reshapes its input to (-1, 2)"
    b = n * f
    x2t = jnp.transpose(x.reshape(b, 2))                         # (2, N*F) feature-major
    h = _mlp_in_forward(x2t, params["mlp_in"], tile_b=tile_b)    # (1, N*F)
    xf = h.reshape(n, f)
    y, alpha, beta = _interaction_forward(xf, params["mlp_alpha"], params["mlp_beta"],
                                          slope=slope)
    return y, alpha.reshape(1), beta.reshape(1)


def _init_linear(key, fan_in, fan_out):
    # PyTorch nn.Linear default init: U(-1/sqrt(fan_in), 1/sqrt(fan_in)).
    kw, kb = jax.random.split(key)
    bound = 1.0 / (fan_in ** 0.5)
    w = jax.random.uniform(kw, (fan_out, fan_in), jnp.float32, -bound, bound)
    b = jax.random.uniform(kb, (fan_out, 1), jnp.float32, -bound, bound)
    return w, b


def init_encoder_params(key):
    def make_mlp(key, in_ch, hidden):
        dims = [in_ch] + list(hidden)
        layers = []
        for i in range(len(hidden)):
            key, sub = jax.random.split(key)
            layers.append(_init_linear(sub, dims[i], dims[i + 1]))
        return key, layers

    key, mlp_in = make_mlp(key, 2, [4, 4, 1])
    key, mlp_alpha = make_mlp(key, 1, [2, 1])
    key, mlp_beta = make_mlp(key, 1, [2, 1])
    return {"mlp_in": mlp_in, "mlp_alpha": mlp_alpha, "mlp_beta": mlp_beta}


def reference_forward(x, params, slope=3.0):
    n, f, _ = x.shape

    def mlp(h, layers):
        for w, b in layers:                       # torch Linear: h @ W.T + b, Tanh after every layer
            h = jnp.tanh(h @ w.T + b[:, 0])
        return h

    xf = mlp(x.reshape(-1, 2), params["mlp_in"]).reshape(n, f)
    a = jax.nn.softmax(xf @ xf.T, axis=0)
    y = a @ xf
    xi = jnp.tile(y, (n, 1))                      # literal nodalDistance
    xj = jnp.repeat(y, n, axis=0)
    e = jnp.sum((xi - xj) ** 2, axis=1).reshape(n, n)
    m = jnp.reshape(jnp.mean(e), (1,))
    alpha = jnp.exp(slope * mlp(m, params["mlp_alpha"]))
    beta = jnp.exp(-slope * mlp(m, params["mlp_beta"]))
    return y, alpha, beta


if __name__ == "__main__":
    key = jax.random.PRNGKey(0)
    n_agents, n_feats = 128, 16                   # small flocking-like shapes: 2048 coord pairs
    key, kx = jax.random.split(key)
    x = jax.random.normal(kx, (n_agents, n_feats, 2), jnp.float32)
    params = init_encoder_params(key)

    fwd = jax.jit(lambda inp: encoder_model_flocking_forward(inp, params))
    y, alpha, beta = jax.block_until_ready(fwd(x))

    y_ref, alpha_ref, beta_ref = reference_forward(x, params)
    assert y.shape == (n_agents, n_feats)
    assert alpha.shape == (1,) and beta.shape == (1,)
    assert jnp.allclose(y, y_ref, atol=5e-3, rtol=5e-3), "attention output mismatch"
    assert jnp.allclose(alpha, alpha_ref, atol=5e-3, rtol=5e-3), "alpha mismatch"
    assert jnp.allclose(beta, beta_ref, atol=5e-3, rtol=5e-3), "beta mismatch"

    print("KERNEL_OK")
</pallas_src>

<mosaic_0001>
module attributes {stable_mosaic.version = 11 : i64} {
  func.func @_mlp_in_kernel(%arg0: i32, %arg1: memref<2x1024xf32, #tpu.memory_space<vmem>>, %arg2: memref<4x2xf32, #tpu.memory_space<vmem>>, %arg3: memref<4x1xf32, #tpu.memory_space<vmem>>, %arg4: memref<4x4xf32, #tpu.memory_space<vmem>>, %arg5: memref<4x1xf32, #tpu.memory_space<vmem>>, %arg6: memref<1x4xf32, #tpu.memory_space<vmem>>, %arg7: memref<1x1xf32, #tpu.memory_space<vmem>>, %arg8: memref<1x1024xf32, #tpu.memory_space<vmem>>) attributes {dimension_semantics = [#tpu.dimension_semantics<parallel>], iteration_bounds = array<i64: 2>, scalar_prefetch = 0 : i64, scratch_operands = 0 : i64, tpu.core_type = #tpu.core_type<tc>, window_params = [{transform_indices = @transform_0, window_bounds = array<i64: 2, 1024>}, {pipeline_mode = #tpu.pipeline_mode<synchronous>, transform_indices = @transform_1, window_bounds = array<i64: 4, 2>}, {pipeline_mode = #tpu.pipeline_mode<synchronous>, transform_indices = @transform_2, window_bounds = array<i64: 4, 1>}, {pipeline_mode = #tpu.pipeline_mode<synchronous>, transform_indices = @transform_3, window_bounds = array<i64: 4, 4>}, {pipeline_mode = #tpu.pipeline_mode<synchronous>, transform_indices = @transform_4, window_bounds = array<i64: 4, 1>}, {pipeline_mode = #tpu.pipeline_mode<synchronous>, transform_indices = @transform_5, window_bounds = array<i64: 1, 4>}, {pipeline_mode = #tpu.pipeline_mode<synchronous>, transform_indices = @transform_6, window_bounds = array<i64: 1, 1>}, {transform_indices = @transform_7, window_bounds = array<i64: 1, 1024>}]} {
    %c0 = arith.constant 0 : index
    %c0_0 = arith.constant 0 : index
    %0 = vector.load %arg1[%c0, %c0_0] : memref<2x1024xf32, #tpu.memory_space<vmem>>, vector<2x1024xf32>
    %c0_1 = arith.constant 0 : index
    %c0_2 = arith.constant 0 : index
    %1 = vector.load %arg2[%c0_1, %c0_2] : memref<4x2xf32, #tpu.memory_space<vmem>>, vector<4x2xf32>
    %c0_3 = arith.constant 0 : index
    %c0_4 = arith.constant 0 : index
    %2 = vector.load %arg3[%c0_3, %c0_4] : memref<4x1xf32, #tpu.memory_space<vmem>>, vector<4x1xf32>
    %3 = vector.extract_strided_slice %1 {offsets = [0, 0], sizes = [4, 1], strides = [1, 1]} : vector<4x2xf32> to vector<4x1xf32>
    %4 = vector.extract_strided_slice %0 {offsets = [0, 0], sizes = [1, 1024], strides = [1, 1]} : vector<2x1024xf32> to vector<1x1024xf32>
    %5 = vector.broadcast %3 : vector<4x1xf32> to vector<4x1024xf32>
    %6 = vector.broadcast %4 : vector<1x1024xf32> to vector<4x1024xf32>
    %7 = arith.mulf %5, %6 : vector<4x1024xf32>
    %8 = vector.extract_strided_slice %1 {offsets = [0, 1], sizes = [4, 1], strides = [1, 1]} : vector<4x2xf32> to vector<4x1xf32>
    %9 = vector.extract_strided_slice %0 {offsets = [1, 0], sizes = [1, 1024], strides = [1, 1]} : vector<2x1024xf32> to vector<1x1024xf32>
    %10 = vector.broadcast %8 : vector<4x1xf32> to vector<4x1024xf32>
    %11 = vector.broadcast %9 : vector<1x1024xf32> to vector<4x1024xf32>
    %12 = arith.mulf %10, %11 : vector<4x1024xf32>
    %13 = arith.addf %7, %12 : vector<4x1024xf32>
    %14 = vector.broadcast %2 : vector<4x1xf32> to vector<4x1024xf32>
    %15 = arith.addf %13, %14 : vector<4x1024xf32>
    %16 = math.tanh %15 : vector<4x1024xf32>
    %c0_5 = arith.constant 0 : index
    %c0_6 = arith.constant 0 : index
    %17 = vector.load %arg4[%c0_5, %c0_6] : memref<4x4xf32, #tpu.memory_space<vmem>>, vector<4x4xf32>
    %c0_7 = arith.constant 0 : index
    %c0_8 = arith.constant 0 : index
    %18 = vector.load %arg5[%c0_7, %c0_8] : memref<4x1xf32, #tpu.memory_space<vmem>>, vector<4x1xf32>
    %19 = vector.extract_strided_slice %17 {offsets = [0, 0], sizes = [4, 1], strides = [1, 1]} : vector<4x4xf32> to vector<4x1xf32>
    %20 = vector.extract_strided_slice %16 {offsets = [0, 0], sizes = [1, 1024], strides = [1, 1]} : vector<4x1024xf32> to vector<1x1024xf32>
    %21 = vector.broadcast %19 : vector<4x1xf32> to vector<4x1024xf32>
    %22 = vector.broadcast %20 : vector<1x1024xf32> to vector<4x1024xf32>
    %23 = arith.mulf %21, %22 : vector<4x1024xf32>
    %24 = vector.extract_strided_slice %17 {offsets = [0, 1], sizes = [4, 1], strides = [1, 1]} : vector<4x4xf32> to vector<4x1xf32>
    %25 = vector.extract_strided_slice %16 {offsets = [1, 0], sizes = [1, 1024], strides = [1, 1]} : vector<4x1024xf32> to vector<1x1024xf32>
    %26 = vector.broadcast %24 : vector<4x1xf32> to vector<4x1024xf32>
    %27 = vector.broadcast %25 : vector<1x1024xf32> to vector<4x1024xf32>
    %28 = arith.mulf %26, %27 : vector<4x1024xf32>
    %29 = arith.addf %23, %28 : vector<4x1024xf32>
    %30 = vector.extract_strided_slice %17 {offsets = [0, 2], sizes = [4, 1], strides = [1, 1]} : vector<4x4xf32> to vector<4x1xf32>
    %31 = vector.extract_strided_slice %16 {offsets = [2, 0], sizes = [1, 1024], strides = [1, 1]} : vector<4x1024xf32> to vector<1x1024xf32>
    %32 = vector.broadcast %30 : vector<4x1xf32> to vector<4x1024xf32>
    %33 = vector.broadcast %31 : vector<1x1024xf32> to vector<4x1024xf32>
    %34 = arith.mulf %32, %33 : vector<4x1024xf32>
    %35 = arith.addf %29, %34 : vector<4x1024xf32>
    %36 = vector.extract_strided_slice %17 {offsets = [0, 3], sizes = [4, 1], strides = [1, 1]} : vector<4x4xf32> to vector<4x1xf32>
    %37 = vector.extract_strided_slice %16 {offsets = [3, 0], sizes = [1, 1024], strides = [1, 1]} : vector<4x1024xf32> to vector<1x1024xf32>
    %38 = vector.broadcast %36 : vector<4x1xf32> to vector<4x1024xf32>
    %39 = vector.broadcast %37 : vector<1x1024xf32> to vector<4x1024xf32>
    %40 = arith.mulf %38, %39 : vector<4x1024xf32>
    %41 = arith.addf %35, %40 : vector<4x1024xf32>
    %42 = vector.broadcast %18 : vector<4x1xf32> to vector<4x1024xf32>
    %43 = arith.addf %41, %42 : vector<4x1024xf32>
    %44 = math.tanh %43 : vector<4x1024xf32>
    %c0_9 = arith.constant 0 : index
    %c0_10 = arith.constant 0 : index
    %45 = vector.load %arg6[%c0_9, %c0_10] : memref<1x4xf32, #tpu.memory_space<vmem>>, vector<1x4xf32>
    %c0_11 = arith.constant 0 : index
    %c0_12 = arith.constant 0 : index
    %46 = vector.load %arg7[%c0_11, %c0_12] : memref<1x1xf32, #tpu.memory_space<vmem>>, vector<1x1xf32>
    %47 = vector.extract_strided_slice %45 {offsets = [0, 0], sizes = [1, 1], strides = [1, 1]} : vector<1x4xf32> to vector<1x1xf32>
    %48 = vector.extract_strided_slice %44 {offsets = [0, 0], sizes = [1, 1024], strides = [1, 1]} : vector<4x1024xf32> to vector<1x1024xf32>
    %49 = vector.broadcast %47 : vector<1x1xf32> to vector<1x1024xf32>
    %50 = arith.mulf %49, %48 : vector<1x1024xf32>
    %51 = vector.extract_strided_slice %45 {offsets = [0, 1], sizes = [1, 1], strides = [1, 1]} : vector<1x4xf32> to vector<1x1xf32>
    %52 = vector.extract_strided_slice %44 {offsets = [1, 0], sizes = [1, 1024], strides = [1, 1]} : vector<4x1024xf32> to vector<1x1024xf32>
    %53 = vector.broadcast %51 : vector<1x1xf32> to vector<1x1024xf32>
    %54 = arith.mulf %53, %52 : vector<1x1024xf32>
    %55 = arith.addf %50, %54 : vector<1x1024xf32>
    %56 = vector.extract_strided_slice %45 {offsets = [0, 2], sizes = [1, 1], strides = [1, 1]} : vector<1x4xf32> to vector<1x1xf32>
    %57 = vector.extract_strided_slice %44 {offsets = [2, 0], sizes = [1, 1024], strides = [1, 1]} : vector<4x1024xf32> to vector<1x1024xf32>
    %58 = vector.broadcast %56 : vector<1x1xf32> to vector<1x1024xf32>
    %59 = arith.mulf %58, %57 : vector<1x1024xf32>
    %60 = arith.addf %55, %59 : vector<1x1024xf32>
    %61 = vector.extract_strided_slice %45 {offsets = [0, 3], sizes = [1, 1], strides = [1, 1]} : vector<1x4xf32> to vector<1x1xf32>
    %62 = vector.extract_strided_slice %44 {offsets = [3, 0], sizes = [1, 1024], strides = [1, 1]} : vector<4x1024xf32> to vector<1x1024xf32>
    %63 = vector.broadcast %61 : vector<1x1xf32> to vector<1x1024xf32>
    %64 = arith.mulf %63, %62 : vector<1x1024xf32>
    %65 = arith.addf %60, %64 : vector<1x1024xf32>
    %66 = vector.broadcast %46 : vector<1x1xf32> to vector<1x1024xf32>
    %67 = arith.addf %65, %66 : vector<1x1024xf32>
    %68 = math.tanh %67 : vector<1x1024xf32>
    %c0_13 = arith.constant 0 : index
    %c0_14 = arith.constant 0 : index
    %69 = vector.load %arg8[%c0_13, %c0_14] : memref<1x1024xf32, #tpu.memory_space<vmem>>, vector<1x1024xf32>
    tpu.vector_store %arg8[%c0_13, %c0_14], %68 {strides = array<i32>} : memref<1x1024xf32, #tpu.memory_space<vmem>>, vector<1x1024xf32>,
    return
  }
  func.func @transform_0(%arg0: i32) -> (i32, i32) {
    %c0_i32 = arith.constant 0 : i32
    %c0_i32_0 = arith.constant 0 : i32
    return %c0_i32, %arg0 : i32, i32
  }
  func.func @transform_1(%arg0: i32) -> (i32, i32) {
    %c0_i32 = arith.constant 0 : i32
    %c0_i32_0 = arith.constant 0 : i32
    %c0_i32_1 = arith.constant 0 : i32
    return %c0_i32, %c0_i32_0 : i32, i32
  }
  func.func @transform_2(%arg0: i32) -> (i32, i32) {
    %c0_i32 = arith.constant 0 : i32
    %c0_i32_0 = arith.constant 0 : i32
    %c0_i32_1 = arith.constant 0 : i32
    return %c0_i32, %c0_i32_0 : i32, i32
  }
  func.func @transform_3(%arg0: i32) -> (i32, i32) {
    %c0_i32 = arith.constant 0 : i32
    %c0_i32_0 = arith.constant 0 : i32
    %c0_i32_1 = arith.constant 0 : i32
    return %c0_i32, %c0_i32_0 : i32, i32
  }
  func.func @transform_4(%arg0: i32) -> (i32, i32) {
    %c0_i32 = arith.constant 0 : i32
    %c0_i32_0 = arith.constant 0 : i32
    %c0_i32_1 = arith.constant 0 : i32
    return %c0_i32, %c0_i32_0 : i32, i32
  }
  func.func @transform_5(%arg0: i32) -> (i32, i32) {
    %c0_i32 = arith.constant 0 : i32
    %c0_i32_0 = arith.constant 0 : i32
    %c0_i32_1 = arith.constant 0 : i32
    return %c0_i32, %c0_i32_0 : i32, i32
  }
  func.func @transform_6(%arg0: i32) -> (i32, i32) {
    %c0_i32 = arith.constant 0 : i32
    %c0_i32_0 = arith.constant 0 : i32
    %c0_i32_1 = arith.constant 0 : i32
    return %c0_i32, %c0_i32_0 : i32, i32
  }
  func.func @transform_7(%arg0: i32) -> (i32, i32) {
    %c0_i32 = arith.constant 0 : i32
    %c0_i32_0 = arith.constant 0 : i32
    return %c0_i32, %arg0 : i32, i32
  }
}

module attributes {stable_mosaic.version = 11 : i64} {
  func.func @_interaction_kernel(%arg0: i32, %arg1: memref<128x16xf32, #tpu.memory_space<vmem>>, %arg2: memref<2x1xf32, #tpu.memory_space<vmem>>, %arg3: memref<2x1xf32, #tpu.memory_space<vmem>>, %arg4: memref<2x1xf32, #tpu.memory_space<vmem>>, %arg5: memref<1x1xf32, #tpu.memory_space<vmem>>, %arg6: memref<2x1xf32, #tpu.memory_space<vmem>>, %arg7: memref<2x1xf32, #tpu.memory_space<vmem>>, %arg8: memref<2x1xf32, #tpu.memory_space<vmem>>, %arg9: memref<1x1xf32, #tpu.memory_space<vmem>>, %arg10: memref<128x16xf32, #tpu.memory_space<vmem>>, %arg11: memref<1x1xf32, #tpu.memory_space<vmem>>, %arg12: memref<1x1xf32, #tpu.memory_space<vmem>>) attributes {dimension_semantics = [#tpu.dimension_semantics<arbitrary>], iteration_bounds = array<i64: 1>, scalar_prefetch = 0 : i64, scratch_operands = 0 : i64, tpu.core_type = #tpu.core_type<tc>, window_params = [{pipeline_mode = #tpu.pipeline_mode<synchronous>, transform_indices = @transform_0, window_bounds = array<i64: 128, 16>}, {pipeline_mode = #tpu.pipeline_mode<synchronous>, transform_indices = @transform_1, window_bounds = array<i64: 2, 1>}, {pipeline_mode = #tpu.pipeline_mode<synchronous>, transform_indices = @transform_2, window_bounds = array<i64: 2, 1>}, {pipeline_mode = #tpu.pipeline_mode<synchronous>, transform_indices = @transform_3, window_bounds = array<i64: 2, 1>}, {pipeline_mode = #tpu.pipeline_mode<synchronous>, transform_indices = @transform_4, window_bounds = array<i64: 1, 1>}, {pipeline_mode = #tpu.pipeline_mode<synchronous>, transform_indices = @transform_5, window_bounds = array<i64: 2, 1>}, {pipeline_mode = #tpu.pipeline_mode<synchronous>, transform_indices = @transform_6, window_bounds = array<i64: 2, 1>}, {pipeline_mode = #tpu.pipeline_mode<synchronous>, transform_indices = @transform_7, window_bounds = array<i64: 2, 1>}, {pipeline_mode = #tpu.pipeline_mode<synchronous>, transform_indices = @transform_8, window_bounds = array<i64: 1, 1>}, {pipeline_mode = #tpu.pipeline_mode<synchronous>, transform_indices = @transform_9, window_bounds = array<i64: 128, 16>}, {pipeline_mode = #tpu.pipeline_mode<synchronous>, transform_indices = @transform_10, window_bounds = array<i64: 1, 1>}, {pipeline_mode = #tpu.pipeline_mode<synchronous>, transform_indices = @transform_11, window_bounds = array<i64: 1, 1>}]} {
    %c0 = arith.constant 0 : index
    %c0_0 = arith.constant 0 : index
    %0 = vector.load %arg1[%c0, %c0_0] : memref<128x16xf32, #tpu.memory_space<vmem>>, vector<128x16xf32>
    %cst = arith.constant dense<0.000000e+00> : vector<128x128xf32>
    %1 = tpu.matmul %0, %0, %cst {dimension_numbers = #tpu.dot_dimension_numbers<[1], [1], [0], [0], [0, 0, 1, 0], [], []>, precision = #tpu.contract_precision<fp32>} : vector<128x16xf32>, vector<128x16xf32>, vector<128x128xf32> -> vector<128x128xf32>
    %cst_1 = arith.constant dense<0xFF800000> : vector<128xf32>
    %2 = vector.multi_reduction <maximumf>, %1, %cst_1 [0] : vector<128x128xf32> to vector<128xf32>
    %3 = vector.shape_cast %2 : vector<128xf32> to vector<1x128xf32>
    %4 = vector.broadcast %3 : vector<1x128xf32> to vector<128x128xf32>
    %5 = arith.subf %1, %4 : vector<128x128xf32>
    %6 = math.exp %5 : vector<128x128xf32>
    %cst_2 = arith.constant dense<0.000000e+00> : vector<128xf32>
    %7 = vector.multi_reduction <add>, %6, %cst_2 [0] : vector<128x128xf32> to vector<128xf32>
    %8 = vector.shape_cast %7 : vector<128xf32> to vector<1x128xf32>
    %9 = vector.broadcast %8 : vector<1x128xf32> to vector<128x128xf32>
    %10 = arith.divf %6, %9 : vector<128x128xf32>
    %cst_3 = arith.constant dense<0.000000e+00> : vector<128x16xf32>
    %11 = tpu.matmul %10, %0, %cst_3 {dimension_numbers = #tpu.dot_dimension_numbers<[1], [0], [0], [1], [0, 0, 1, 1], [], []>, precision = #tpu.contract_precision<fp32>} : vector<128x128xf32>, vector<128x16xf32>, vector<128x16xf32> -> vector<128x16xf32>
    %c0_4 = arith.constant 0 : index
    %c0_5 = arith.constant 0 : index
    %12 = vector.load %arg10[%c0_4, %c0_5] : memref<128x16xf32, #tpu.memory_space<vmem>>, vector<128x16xf32>
    tpu.vector_store %arg10[%c0_4, %c0_5], %11 {strides = array<i32>} : memref<128x16xf32, #tpu.memory_space<vmem>>, vector<128x16xf32>,
    %cst_6 = arith.constant dense<0.000000e+00> : vector<128x128xf32>
    %13 = tpu.matmul %11, %11, %cst_6 {dimension_numbers = #tpu.dot_dimension_numbers<[1], [1], [0], [0], [0, 0, 1, 0], [], []>, precision = #tpu.contract_precision<fp32>} : vector<128x16xf32>, vector<128x16xf32>, vector<128x128xf32> -> vector<128x128xf32>
    %14 = arith.mulf %11, %11 : vector<128x16xf32>
    %cst_7 = arith.constant dense<0.000000e+00> : vector<128xf32>
    %15 = vector.multi_reduction <add>, %14, %cst_7 [1] : vector<128x16xf32> to vector<128xf32>
    %16 = vector.shape_cast %15 : vector<128xf32> to vector<128x1xf32>
    %cst_8 = arith.constant dense<0.000000e+00> : vector<1xf32>
    %17 = vector.multi_reduction <add>, %16, %cst_8 [0] : vector<128x1xf32> to vector<1xf32>
    %18 = vector.shape_cast %17 : vector<1xf32> to vector<1x1xf32>
    %cst_9 = arith.constant dense<0.000000e+00> : vector<128xf32>
    %19 = vector.multi_reduction <add>, %13, %cst_9 [1] : vector<128x128xf32> to vector<128xf32>
    %20 = vector.shape_cast %19 : vector<128xf32> to vector<128x1xf32>
    %cst_10 = arith.constant dense<0.000000e+00> : vector<1xf32>
    %21 = vector.multi_reduction <add>, %20, %cst_10 [0] : vector<128x1xf32> to vector<1xf32>
    %22 = vector.shape_cast %21 : vector<1xf32> to vector<1x1xf32>
    %cst_11 = arith.constant 1.280000e+02 : f32
    %23 = vector.broadcast %cst_11 : f32 to vector<1x1xf32>
    %24 = arith.divf %18, %23 : vector<1x1xf32>
    %cst_12 = arith.constant 2.000000e+00 : f32
    %25 = vector.broadcast %cst_12 : f32 to vector<1x1xf32>
    %26 = arith.mulf %25, %24 : vector<1x1xf32>
    %cst_13 = arith.constant 1.638400e+04 : f32
    %27 = vector.broadcast %cst_13 : f32 to vector<1x1xf32>
    %28 = arith.divf %22, %27 : vector<1x1xf32>
    %cst_14 = arith.constant 2.000000e+00 : f32
    %29 = vector.broadcast %cst_14 : f32 to vector<1x1xf32>
    %30 = arith.mulf %29, %28 : vector<1x1xf32>
    %31 = arith.subf %26, %30 : vector<1x1xf32>
    %c0_15 = arith.constant 0 : index
    %c0_16 = arith.constant 0 : index
    %32 = vector.load %arg2[%c0_15, %c0_16] : memref<2x1xf32, #tpu.memory_space<vmem>>, vector<2x1xf32>
    %c0_17 = arith.constant 0 : index
    %c0_18 = arith.constant 0 : index
    %33 = vector.load %arg3[%c0_17, %c0_18] : memref<2x1xf32, #tpu.memory_space<vmem>>, vector<2x1xf32>
    %c0_19 = arith.constant 0 : index
    %c0_20 = arith.constant 0 : index
    %34 = vector.load %arg4[%c0_19, %c0_20] : memref<2x1xf32, #tpu.memory_space<vmem>>, vector<2x1xf32>
    %c0_21 = arith.constant 0 : index
    %c0_22 = arith.constant 0 : index
    %35 = vector.load %arg5[%c0_21, %c0_22] : memref<1x1xf32, #tpu.memory_space<vmem>>, vector<1x1xf32>
    %36 = vector.broadcast %31 : vector<1x1xf32> to vector<2x1xf32>
    %37 = arith.mulf %32, %36 : vector<2x1xf32>
    %38 = arith.addf %37, %33 : vector<2x1xf32>
    %39 = math.tanh %38 : vector<2x1xf32>
    %40 = arith.mulf %34, %39 : vector<2x1xf32>
    %cst_23 = arith.constant dense<0.000000e+00> : vector<1xf32>
    %41 = vector.multi_reduction <add>, %40, %cst_23 [0] : vector<2x1xf32> to vector<1xf32>
    %42 = vector.shape_cast %41 : vector<1xf32> to vector<1x1xf32>
    %43 = arith.addf %42, %35 : vector<1x1xf32>
    %44 = math.tanh %43 : vector<1x1xf32>
    %cst_24 = arith.constant 3.000000e+00 : f32
    %45 = vector.broadcast %cst_24 : f32 to vector<1x1xf32>
    %46 = arith.mulf %45, %44 : vector<1x1xf32>
    %47 = math.exp %46 : vector<1x1xf32>
    %c0_25 = arith.constant 0 : index
    %c0_26 = arith.constant 0 : index
    %48 = vector.load %arg11[%c0_25, %c0_26] : memref<1x1xf32, #tpu.memory_space<vmem>>, vector<1x1xf32>
    tpu.vector_store %arg11[%c0_25, %c0_26], %47 {strides = array<i32>} : memref<1x1xf32, #tpu.memory_space<vmem>>, vector<1x1xf32>,
    %c0_27 = arith.constant 0 : index
    %c0_28 = arith.constant 0 : index
    %49 = vector.load %arg6[%c0_27, %c0_28] : memref<2x1xf32, #tpu.memory_space<vmem>>, vector<2x1xf32>
    %c0_29 = arith.constant 0 : index
    %c0_30 = arith.constant 0 : index
    %50 = vector.load %arg7[%c0_29, %c0_30] : memref<2x1xf32, #tpu.memory_space<vmem>>, vector<2x1xf32>
    %c0_31 = arith.constant 0 : index
    %c0_32 = arith.constant 0 : index
    %51 = vector.load %arg8[%c0_31, %c0_32] : memref<2x1xf32, #tpu.memory_space<vmem>>, vector<2x1xf32>
    %c0_33 = arith.constant 0 : index
    %c0_34 = arith.constant 0 : index
    %52 = vector.load %arg9[%c0_33, %c0_34] : memref<1x1xf32, #tpu.memory_space<vmem>>, vector<1x1xf32>
    %53 = vector.broadcast %31 : vector<1x1xf32> to vector<2x1xf32>
    %54 = arith.mulf %49, %53 : vector<2x1xf32>
    %55 = arith.addf %54, %50 : vector<2x1xf32>
    %56 = math.tanh %55 : vector<2x1xf32>
    %57 = arith.mulf %51, %56 : vector<2x1xf32>
    %cst_35 = arith.constant dense<0.000000e+00> : vector<1xf32>
    %58 = vector.multi_reduction <add>, %57, %cst_35 [0] : vector<2x1xf32> to vector<1xf32>
    %59 = vector.shape_cast %58 : vector<1xf32> to vector<1x1xf32>
    %60 = arith.addf %59, %52 : vector<1x1xf32>
    %61 = math.tanh %60 : vector<1x1xf32>
    %cst_36 = arith.constant -3.000000e+00 : f32
    %62 = vector.broadcast %cst_36 : f32 to vector<1x1xf32>
    %63 = arith.mulf %62, %61 : vector<1x1xf32>
    %64 = math.exp %63 : vector<1x1xf32>
    %c0_37 = arith.constant 0 : index
    %c0_38 = arith.constant 0 : index
    %65 = vector.load %arg12[%c0_37, %c0_38] : memref<1x1xf32, #tpu.memory_space<vmem>>, vector<1x1xf32>
    tpu.vector_store %arg12[%c0_37, %c0_38], %64 {strides = array<i32>} : memref<1x1xf32, #tpu.memory_space<vmem>>, vector<1x1xf32>,
    return
  }
  func.func @transform_0(%arg0: i32) -> (i32, i32) {
    %c0_i32 = arith.constant 0 : i32
    %c0_i32_0 = arith.constant 0 : i32
    %c0_i32_1 = arith.constant 0 : i32
    return %c0_i32, %c0_i32_0 : i32, i32
  }
  func.func @transform_1(%arg0: i32) -> (i32, i32) {
    %c0_i32 = arith.constant 0 : i32
    %c0_i32_0 = arith.constant 0 : i32
    %c0_i32_1 = arith.constant 0 : i32
    return %c0_i32, %c0_i32_0 : i32, i32
  }
  func.func @transform_2(%arg0: i32) -> (i32, i32) {
    %c0_i32 = arith.constant 0 : i32
    %c0_i32_0 = arith.constant 0 : i32
    %c0_i32_1 = arith.constant 0 : i32
    return %c0_i32, %c0_i32_0 : i32, i32
  }
  func.func @transform_3(%arg0: i32) -> (i32, i32) {
    %c0_i32 = arith.constant 0 : i32
    %c0_i32_0 = arith.constant 0 : i32
    %c0_i32_1 = arith.constant 0 : i32
    return %c0_i32, %c0_i32_0 : i32, i32
  }
  func.func @transform_4(%arg0: i32) -> (i32, i32) {
    %c0_i32 = arith.constant 0 : i32
    %c0_i32_0 = arith.constant 0 : i32
    %c0_i32_1 = arith.constant 0 : i32
    return %c0_i32, %c0_i32_0 : i32, i32
  }
  func.func @transform_5(%arg0: i32) -> (i32, i32) {
    %c0_i32 = arith.constant 0 : i32
    %c0_i32_0 = arith.constant 0 : i32
    %c0_i32_1 = arith.constant 0 : i32
    return %c0_i32, %c0_i32_0 : i32, i32
  }
  func.func @transform_6(%arg0: i32) -> (i32, i32) {
    %c0_i32 = arith.constant 0 : i32
    %c0_i32_0 = arith.constant 0 : i32
    %c0_i32_1 = arith.constant 0 : i32
    return %c0_i32, %c0_i32_0 : i32, i32
  }
  func.func @transform_7(%arg0: i32) -> (i32, i32) {
    %c0_i32 = arith.constant 0 : i32
    %c0_i32_0 = arith.constant 0 : i32
    %c0_i32_1 = arith.constant 0 : i32
    return %c0_i32, %c0_i32_0 : i32, i32
  }
  func.func @transform_8(%arg0: i32) -> (i32, i32) {
    %c0_i32 = arith.constant 0 : i32
    %c0_i32_0 = arith.constant 0 : i32
    %c0_i32_1 = arith.constant 0 : i32
    return %c0_i32, %c0_i32_0 : i32, i32
  }
  func.func @transform_9(%arg0: i32) -> (i32, i32) {
    %c0_i32 = arith.constant 0 : i32
    %c0_i32_0 = arith.constant 0 : i32
    %c0_i32_1 = arith.constant 0 : i32
    return %c0_i32, %c0_i32_0 : i32, i32
  }
  func.func @transform_10(%arg0: i32) -> (i32, i32) {
    %c0_i32 = arith.constant 0 : i32
    %c0_i32_0 = arith.constant 0 : i32
    %c0_i32_1 = arith.constant 0 : i32
    return %c0_i32, %c0_i32_0 : i32, i32
  }
  func.func @transform_11(%arg0: i32) -> (i32, i32) {
    %c0_i32 = arith.constant 0 : i32
    %c0_i32_0 = arith.constant 0 : i32
    %c0_i32_1 = arith.constant 0 : i32
    return %c0_i32, %c0_i32_0 : i32, i32
  }
}

</mosaic_0001>

<llo_original>
// kernel: _lambda_.2
$region0: #{_lambda_.2}
  #allocation0 [shape = 'u32[]', space=smem, size = 0x4, offset = 0x4, fixed_abs, tag = 'smem constant byte address 0x4 - core index']
  #allocation1 [shape = 'u32[144,128]{1,0:T(1,128)}', space=vmem, size = 0x12000, scoped, tag = 'internal scratch']
  #allocation2 [shape = 'f32[1,1]{1,0:T(1,128)S(1)}', space=vmem, size = 0x200, scoped, tag = 'scoped memory for _lambda_.2']
  %s0 = inlined_call_operand.vmem [shape: f32[2,2048], index: 0, kind: input, shape index: {}]
  %s1 = inlined_call_operand.vmem [shape: f32[4,2], index: 1, kind: input, shape index: {}]
  %s2 = inlined_call_operand.vmem [shape: f32[4,1], index: 2, kind: input, shape index: {}]
  %s3 = inlined_call_operand.vmem [shape: f32[4,4], index: 3, kind: input, shape index: {}]
  %s4 = inlined_call_operand.vmem [shape: f32[4,1], index: 4, kind: input, shape index: {}]
  %s5 = inlined_call_operand.vmem [shape: f32[1,4], index: 5, kind: input, shape index: {}]
  %s6 = inlined_call_operand.<no memory space> [shape: f32[1,1], index: 6, kind: input, shape index: {}]
  %s7 = inlined_call_operand.vmem [shape: f32[1,2048], index: 7, kind: output, shape index: {}]
  %s8 = sld [smem:[#allocation0]]
  $region61: #{_lambda_.2} parent=0
    _
  %s10 = ssub.s32 1, %s8
  %s11 = scalar_select 0, %s10, %s8
  %v12 = vstv %s6
  %13 = vst [vmem:[#allocation2] sm:$0x1] %v12
  loop: start=0, step=1, limit=4
  $region2: #{_lambda_.2} parent=0 // loop_pre_header
    _
  $region3: #{_lambda_.2} parent=0 // loop_header
    %s15 = sphi 0, %s19
    %p16 = scmp.ge.s32.totalorder %s15, 4
    %s25 = sphi 0, %s27
    %s28 = sphi 0, %s25
    %s29 = sphi 0, %s28
    %s45 = sphi 0, %s29
    %s49 = sphi 0, %s49
    %s51 = sphi 0, %s49
    %s52 = sphi 0, %s51
    %s66 = sphi 0, %s52
    %s70 = sphi 0, %s70
    %s72 = sphi 0, %s70
    %s73 = sphi 0, %s72
    %s87 = sphi 0, %s73
    %s91 = sphi 0, %s91
    %s93 = sphi 0, %s91
    %s94 = sphi 0, %s93
    %s108 = sphi 0, %s94
    %s112 = sphi 0, %s112
    %s114 = sphi 0, %s112
    %s115 = sphi 0, %s114
    %s129 = sphi 0, %s115
    %s133 = sphi 0, %s133
    %s135 = sphi 0, %s133
    %s136 = sphi 0, %s135
    %s150 = sphi 0, %s136
    %s154 = sphi 0, %s154
    %s156 = sphi 0, %s154
    %s157 = sphi 0, %s156
    %s171 = sphi 0, %s157
    %s177 = sphi 0, %s179
    %s180 = sphi 0, %s177
    %s181 = sphi 0, %s180
    %s197 = sphi 0, %s181
  $region4: #{_lambda_.2} parent=0 // loop_header_branch
    %18 = sbr.rel (%p16) target = $region8
  $region5: #{_lambda_.2} parent=0 // loop_body
    %s20 = ssub.s32 %s15, 1
    %s21 = ssub.s32 %s15, 2
    %s22 = sadd.s32 %s15, 1
    %s23 = ssub.s32 %s15, %s22
    %p24 = scmp.eq.s32.totalorder %s23, 0
    %s26 = sadd.s32 %s25, 1
    %s27 = scalar_select %p24, %s25, %s26
    %p30 = pneg %p24
    %p31 = scmp.eq.s32.totalorder %s15, 1
    %p32 = por %p30, %p31
    %p33 = scmp.ne.s32.totalorder %s25, %s28
    %p34 = scmp.eq.s32.totalorder %s15, 0
    %p35 = por %p33, %p34
    %p36 = scmp.ne.s32.totalorder %s25, %s28
    %p37 = scmp.eq.s32.totalorder %s20, 1
    %p38 = por %p36, %p37
    %p39 = scmp.ne.s32.totalorder %s28, %s29
    %p40 = scmp.eq.s32.totalorder %s20, 0
    %p41 = por %p39, %p40
    %p42 = scmp.ne.s32.totalorder %s28, %s29
    %p43 = scmp.eq.s32.totalorder %s21, 1
    %p44 = por %p42, %p43
    %p46 = scmp.ne.s32.totalorder %s29, %s45
    %p47 = scmp.eq.s32.totalorder %s21, 0
    %p48 = por %p46, %p47
    %s50 = sadd.s32 %s49, 1
    %p53 = scmp.eq.s32.totalorder %s15, 1
    %p54 = scmp.ne.s32.totalorder %s49, %s51
    %p55 = scmp.eq.s32.totalorder %s15, 0
    %p56 = por %p54, %p55
    %p57 = scmp.ne.s32.totalorder %s49, %s51
    %p58 = scmp.eq.s32.totalorder %s20, 1
    %p59 = por %p57, %p58
    %p60 = scmp.ne.s32.totalorder %s51, %s52
    %p61 = scmp.eq.s32.totalorder %s20, 0
    %p62 = por %p60, %p61
    %p63 = scmp.ne.s32.totalorder %s51, %s52
    %p64 = scmp.eq.s32.totalorder %s21, 1
    %p65 = por %p63, %p64
    %p67 = scmp.ne.s32.totalorder %s52, %s66
    %p68 = scmp.eq.s32.totalorder %s21, 0
    %p69 = por %p67, %p68
    %s71 = sadd.s32 %s70, 1
    %p74 = scmp.eq.s32.totalorder %s15, 1
    %p75 = scmp.ne.s32.totalorder %s70, %s72
    %p76 = scmp.eq.s32.totalorder %s15, 0
    %p77 = por %p75, %p76
    %p78 = scmp.ne.s32.totalorder %s70, %s72
    %p79 = scmp.eq.s32.totalorder %s20, 1
    %p80 = por %p78, %p79
    %p81 = scmp.ne.s32.totalorder %s72, %s73
    %p82 = scmp.eq.s32.totalorder %s20, 0
    %p83 = por %p81, %p82
    %p84 = scmp.ne.s32.totalorder %s72, %s73
    %p85 = scmp.eq.s32.totalorder %s21, 1
    %p86 = por %p84, %p85
    %p88 = scmp.ne.s32.totalorder %s73, %s87
    %p89 = scmp.eq.s32.totalorder %s21, 0
    %p90 = por %p88, %p89
    %s92 = sadd.s32 %s91, 1
    %p95 = scmp.eq.s32.totalorder %s15, 1
    %p96 = scmp.ne.s32.totalorder %s91, %s93
    %p97 = scmp.eq.s32.totalorder %s15, 0
    %p98 = por %p96, %p97
    %p99 = scmp.ne.s32.totalorder %s91, %s93
    %p100 = scmp.eq.s32.totalorder %s20, 1
    %p101 = por %p99, %p100
    %p102 = scmp.ne.s32.totalorder %s93, %s94
    %p103 = scmp.eq.s32.totalorder %s20, 0
    %p104 = por %p102, %p103
    %p105 = scmp.ne.s32.totalorder %s93, %s94
    %p106 = scmp.eq.s32.totalorder %s21, 1
    %p107 = por %p105, %p106
    %p109 = scmp.ne.s32.totalorder %s94, %s108
    %p110 = scmp.eq.s32.totalorder %s21, 0
    %p111 = por %p109, %p110
    %s113 = sadd.s32 %s112, 1
    %p116 = scmp.eq.s32.totalorder %s15, 1
    %p117 = scmp.ne.s32.totalorder %s112, %s114
    %p118 = scmp.eq.s32.totalorder %s15, 0
    %p119 = por %p117, %p118
    %p120 = scmp.ne.s32.totalorder %s112, %s114
    %p121 = scmp.eq.s32.totalorder %s20, 1
    %p122 = por %p120, %p121
    %p123 = scmp.ne.s32.totalorder %s114, %s115
    %p124 = scmp.eq.s32.totalorder %s20, 0
    %p125 = por %p123, %p124
    %p126 = scmp.ne.s32.totalorder %s114, %s115
    %p127 = scmp.eq.s32.totalorder %s21, 1
    %p128 = por %p126, %p127
    %p130 = scmp.ne.s32.totalorder %s115, %s129
    %p131 = scmp.eq.s32.totalorder %s21, 0
    %p132 = por %p130, %p131
    %s134 = sadd.s32 %s133, 1
    %p137 = scmp.eq.s32.totalorder %s15, 1
    %p138 = scmp.ne.s32.totalorder %s133, %s135
    %p139 = scmp.eq.s32.totalorder %s15, 0
    %p140 = por %p138, %p139
    %p141 = scmp.ne.s32.totalorder %s133, %s135
    %p142 = scmp.eq.s32.totalorder %s20, 1
    %p143 = por %p141, %p142
    %p144 = scmp.ne.s32.totalorder %s135, %s136
    %p145 = scmp.eq.s32.totalorder %s20, 0
    %p146 = por %p144, %p145
    %p147 = scmp.ne.s32.totalorder %s135, %s136
    %p148 = scmp.eq.s32.totalorder %s21, 1
    %p149 = por %p147, %p148
    %p151 = scmp.ne.s32.totalorder %s136, %s150
    %p152 = scmp.eq.s32.totalorder %s21, 0
    %p153 = por %p151, %p152
    %s155 = sadd.s32 %s154, 1
    %p158 = scmp.eq.s32.totalorder %s15, 1
    %p159 = scmp.ne.s32.totalorder %s154, %s156
    %p160 = scmp.eq.s32.totalorder %s15, 0
    %p161 = por %p159, %p160
    %p162 = scmp.ne.s32.totalorder %s154, %s156
    %p163 = scmp.eq.s32.totalorder %s20, 1
    %p164 = por %p162, %p163
    %p165 = scmp.ne.s32.totalorder %s156, %s157
    %p166 = scmp.eq.s32.totalorder %s20, 0
    %p167 = por %p165, %p166
    %p168 = scmp.ne.s32.totalorder %s156, %s157
    %p169 = scmp.eq.s32.totalorder %s21, 1
    %p170 = por %p168, %p169
    %p172 = scmp.ne.s32.totalorder %s157, %s171
    %p173 = scmp.eq.s32.totalorder %s21, 0
    %p174 = por %p172, %p173
    %s175 = ssub.s32 %s15, %s22
    %p176 = scmp.eq.s32.totalorder %s175, 0
    %s178 = sadd.s32 %s177, 1
    %s179 = scalar_select %p176, %s177, %s178
    %p182 = pneg %p176
    %p183 = scmp.eq.s32.totalorder %s15, 1
    %p184 = por %p182, %p183
    %p185 = scmp.ne.s32.totalorder %s177, %s180
    %p186 = scmp.eq.s32.totalorder %s15, 0
    %p187 = por %p185, %p186
    %p188 = scmp.ne.s32.totalorder %s177, %s180
    %p189 = scmp.eq.s32.totalorder %s20, 1
    %p190 = por %p188, %p189
    %p191 = scmp.ne.s32.totalorder %s180, %s181
    %p192 = scmp.eq.s32.totalorder %s20, 0
    %p193 = por %p191, %p192
    %p194 = scmp.ne.s32.totalorder %s180, %s181
    %p195 = scmp.eq.s32.totalorder %s21, 1
    %p196 = por %p194, %p195
    %p198 = scmp.ne.s32.totalorder %s181, %s197
    %p199 = scmp.eq.s32.totalorder %s21, 0
    %p200 = por %p198, %p199
    %p201 = scmp.le.s32.totalorder 1, %s15
    %p202 = scmp.lt.s32.totalorder %s15, 3
    %p203 = pnand %p201, %p202
    %p204 = pneg %p203
    // Predicated region
    $region9: #{_lambda_.2} parent=5 // pred_check
      _
    $region10: #{_lambda_.2} parent=5 // pred_check_branch
      %206 = sbr.rel (%p203) target = $region12
    $region11: #{_lambda_.2} parent=5 // pred_region
      %s207 = ssub.s32 %s15, 1
      // Predicated region
      $region13: #{_lambda_.2} parent=11 // pred_check
        %p208 = pneg %p62
      $region14: #{_lambda_.2} parent=11 // pred_check_branch
        %210 = sbr.rel (%p208) target = $region16
      $region15: #{_lambda_.2} parent=11 // pred_region
        _
      $region16: #{_lambda_.2} parent=11 // pred_fallthru
        _
      // Predicated region
      $region17: #{_lambda_.2} parent=11 // pred_check
        %p211 = pneg %p83
      $region18: #{_lambda_.2} parent=11 // pred_check_branch
        %213 = sbr.rel (%p211) target = $region20
      $region19: #{_lambda_.2} parent=11 // pred_region
        _
      $region20: #{_lambda_.2} parent=11 // pred_fallthru
        _
      // Predicated region
      $region21: #{_lambda_.2} parent=11 // pred_check
        %p214 = pneg %p104
      $region22: #{_lambda_.2} parent=11 // pred_check_branch
        %216 = sbr.rel (%p214) target = $region24
      $region23: #{_lambda_.2} parent=11 // pred_region
        _
      $region24: #{_lambda_.2} parent=11 // pred_fallthru
        _
      // Predicated region
      $region25: #{_lambda_.2} parent=11 // pred_check
        %p217 = pneg %p125
      $region26: #{_lambda_.2} parent=11 // pred_check_branch
        %219 = sbr.rel (%p217) target = $region28
      $region27: #{_lambda_.2} parent=11 // pred_region
        _
      $region28: #{_lambda_.2} parent=11 // pred_fallthru
        _
      // Predicated region
      $region29: #{_lambda_.2} parent=11 // pred_check
        %p220 = pneg %p146
      $region30: #{_lambda_.2} parent=11 // pred_check_branch
        %222 = sbr.rel (%p220) target = $region32
      $region31: #{_lambda_.2} parent=11 // pred_region
        _
      $region32: #{_lambda_.2} parent=11 // pred_fallthru
        _
      // Predicated region
      $region33: #{_lambda_.2} parent=11 // pred_check
        %p223 = pneg %p167
      $region34: #{_lambda_.2} parent=11 // pred_check_branch
        %225 = sbr.rel (%p223) target = $region36
      $region35: #{_lambda_.2} parent=11 // pred_region
        _
      $region36: #{_lambda_.2} parent=11 // pred_fallthru
        _
    $region12: #{_lambda_.2} parent=5 // pred_fallthru
      _
    %p226 = scmp.lt.s32.totalorder %s15, 2
    // Predicated region
    $region37: #{_lambda_.2} parent=5 // pred_check
      %p227 = pneg %p226
    $region38: #{_lambda_.2} parent=5 // pred_check_branch
      %229 = sbr.rel (%p227) target = $region40
    $region39: #{_lambda_.2} parent=5 // pred_region
      // Predicated region
      $region41: #{_lambda_.2} parent=39 // pred_check
        %p230 = pneg %p35
      $region42: #{_lambda_.2} parent=39 // pred_check_branch
        %232 = sbr.rel (%p230) target = $region44
      $region43: #{_lambda_.2} parent=39 // pred_region
        %s233 = smul.u32 8, %s15
        %p234 = scmp.lt.s32.totalorder %s233, 15
        %s235 = scalar_select %p234, %s233, 15
        %s236 = smul.addr %s235, 2
        %s237 = scalar_lea.vmem %s0, %s236
        %s238 = smul.u32 8, %s15
      $region44: #{_lambda_.2} parent=39 // pred_fallthru
        _
    $region40: #{_lambda_.2} parent=5 // pred_fallthru
      _
    %p239 = scmp.le.s32.totalorder 1, %s15
    %p240 = scmp.lt.s32.totalorder %s15, 3
    %p241 = pnand %p239, %p240
    %p242 = pneg %p241
    // Predicated region
    $region45: #{_lambda_.2} parent=5 // pred_check
      _
    $region46: #{_lambda_.2} parent=5 // pred_check_branch
      %244 = sbr.rel (%p241) target = $region48
    $region47: #{_lambda_.2} parent=5 // pred_region
      %s245 = ssub.s32 %s15, 1
      %s246 = smul.u32 8, %s20
      %p247 = scmp.lt.s32.totalorder %s246, 15
      %s248 = scalar_select %p247, %s246, 15
      %s249 = smul.addr %s248, 2
      %s250 = scalar_lea.vmem %s0, %s249
      %p251 = pneg %p41
      %p252 = pneg %p38
      %p253 = pneg %p62
      %p254 = pneg %p59
      %p255 = pneg %p83
      %p256 = pneg %p80
      %p257 = pneg %p104
      %p258 = pneg %p101
      %p259 = pneg %p125
      %p260 = pneg %p122
      %p261 = pneg %p146
      %p262 = pneg %p143
      %p263 = pneg %p167
      %p264 = pneg %p164
      %p265 = pneg %p193
      %p266 = pneg %p190
      %s267 = smul.u32 8, %s20
      %p268 = scmp.lt.s32.totalorder %s267, 15
      %s269 = scalar_select %p268, %s267, 15
      %s270 = scalar_lea.vmem %s7, %s269
      %s271 = smul.u32 8, %s20
      %p272 = scmp.lt.s32.totalorder %s271, 15
      %s273 = scalar_select %p272, %s271, 15
      %s274 = smul.addr %s273, 2
      %s275 = scalar_lea.vmem %s0, %s274
      %s276 = smul.u32 8, %s20
      %s277 = smul.u32 8, %s20
      %p278 = scmp.lt.s32.totalorder %s277, 15
      %s279 = scalar_select %p278, %s277, 15
      %s280 = scalar_lea.vmem %s7, %s279
      %s281 = smul.u32 8, %s20
      %v282 = vld [vmem:[%s275] sm:$0xff]
      %v283 = vld [vmem:[%s275 + $0x8] sm:$0xff]
      %v284 = vld [vmem:[%s1] sm:$0xf]
      %v285 = vld [vmem:[%s2] sm:$0xf]
      %287 = vset.pattern.permute.xlu0 0
      %288 = vperm.xlu0 %287, %v284
      %v289 = vpop.permute.xlu0 %288
      %v293 = vlaneseq
      %v294 = vshrl.u32 %v293, 7
      %v295 = vsub.s32 0, %v294
      %v296 = vrot.slane %v282, %v295
      %v297 = vlaneseq
      %v298 = vshrl.u32 %v297, 7
      %v299 = vsub.s32 2, %v298
      %v300 = vrot.slane %v282, %v299
      %v301 = vlaneseq
      %v302 = vshrl.u32 %v301, 7
      %v303 = vsub.s32 4, %v302
      %v304 = vrot.slane %v282, %v303
      %v305 = vlaneseq
      %v306 = vshrl.u32 %v305, 7
      %v307 = vsub.s32 6, %v306
      %v308 = vrot.slane %v282, %v307
      %v309 = vlaneseq
      %v310 = vshrl.u32 %v309, 7
      %v311 = vsub.s32 0, %v310
      %v312 = vrot.slane %v283, %v311
      %v313 = vlaneseq
      %v314 = vshrl.u32 %v313, 7
      %v315 = vsub.s32 2, %v314
      %v316 = vrot.slane %v283, %v315
      %v317 = vlaneseq
      %v318 = vshrl.u32 %v317, 7
      %v319 = vsub.s32 4, %v318
      %v320 = vrot.slane %v283, %v319
      %v321 = vlaneseq
      %v322 = vshrl.u32 %v321, 7
      %v323 = vsub.s32 6, %v322
      %v324 = vrot.slane %v283, %v323
      %v333 = vlaneseq
      %v334 = vshrl.u32 %v333, 7
      %v335 = vsub.s32 0, %v334
      %v336 = vrot.slane %v296, %v335
      %v337 = vlaneseq
      %v338 = vshrl.u32 %v337, 7
      %v339 = vsub.s32 0, %v338
      %v340 = vrot.slane %v300, %v339
      %v341 = vlaneseq
      %v342 = vshrl.u32 %v341, 7
      %v343 = vsub.s32 0, %v342
      %v344 = vrot.slane %v304, %v343
      %v345 = vlaneseq
      %v346 = vshrl.u32 %v345, 7
      %v347 = vsub.s32 0, %v346
      %v348 = vrot.slane %v308, %v347
      %v349 = vlaneseq
      %v350 = vshrl.u32 %v349, 7
      %v351 = vsub.s32 0, %v350
      %v352 = vrot.slane %v312, %v351
      %v353 = vlaneseq
      %v354 = vshrl.u32 %v353, 7
      %v355 = vsub.s32 0, %v354
      %v356 = vrot.slane %v316, %v355
      %v357 = vlaneseq
      %v358 = vshrl.u32 %v357, 7
      %v359 = vsub.s32 0, %v358
      %v360 = vrot.slane %v320, %v359
      %v361 = vlaneseq
      %v362 = vshrl.u32 %v361, 7
      %v363 = vsub.s32 0, %v362
      %v364 = vrot.slane %v324, %v363
      %v365 = vmul.f32 %v289, %v336
      %v366 = vmul.f32 %v289, %v340
      %v367 = vmul.f32 %v289, %v344
      %v368 = vmul.f32 %v289, %v348
      %v369 = vmul.f32 %v289, %v352
      %v370 = vmul.f32 %v289, %v356
      %v371 = vmul.f32 %v289, %v360
      %v372 = vmul.f32 %v289, %v364
      %373 = vset.pattern.permute.xlu0 1
      %374 = vperm.xlu0 %373, %v284
      %v375 = vpop.permute.xlu0 %374
      %v377 = vlaneseq
      %v378 = vshrl.u32 %v377, 7
      %v379 = vsub.s32 1, %v378
      %v380 = vrot.slane %v282, %v379
      %v381 = vlaneseq
      %v382 = vshrl.u32 %v381, 7
      %v383 = vsub.s32 3, %v382
      %v384 = vrot.slane %v282, %v383
      %v385 = vlaneseq
      %v386 = vshrl.u32 %v385, 7
      %v387 = vsub.s32 5, %v386
      %v388 = vrot.slane %v282, %v387
      %v389 = vlaneseq
      %v390 = vshrl.u32 %v389, 7
      %v391 = vsub.s32 7, %v390
      %v392 = vrot.slane %v282, %v391
      %v393 = vlaneseq
      %v394 = vshrl.u32 %v393, 7
      %v395 = vsub.s32 1, %v394
      %v396 = vrot.slane %v283, %v395
      %v397 = vlaneseq
      %v398 = vshrl.u32 %v397, 7
      %v399 = vsub.s32 3, %v398
      %v400 = vrot.slane %v283, %v399
      %v401 = vlaneseq
      %v402 = vshrl.u32 %v401, 7
      %v403 = vsub.s32 5, %v402
      %v404 = vrot.slane %v283, %v403
      %v405 = vlaneseq
      %v406 = vshrl.u32 %v405, 7
      %v407 = vsub.s32 7, %v406
      %v408 = vrot.slane %v283, %v407
      %v417 = vlaneseq
      %v418 = vshrl.u32 %v417, 7
      %v419 = vsub.s32 1, %v418
      %v420 = vrot.slane %v380, %v419
      %v421 = vlaneseq
      %v422 = vshrl.u32 %v421, 7
      %v423 = vsub.s32 1, %v422
      %v424 = vrot.slane %v384, %v423
      %v425 = vlaneseq
      %v426 = vshrl.u32 %v425, 7
      %v427 = vsub.s32 1, %v426
      %v428 = vrot.slane %v388, %v427
      %v429 = vlaneseq
      %v430 = vshrl.u32 %v429, 7
      %v431 = vsub.s32 1, %v430
      %v432 = vrot.slane %v392, %v431
      %v433 = vlaneseq
      %v434 = vshrl.u32 %v433, 7
      %v435 = vsub.s32 1, %v434
      %v436 = vrot.slane %v396, %v435
      %v437 = vlaneseq
      %v438 = vshrl.u32 %v437, 7
      %v439 = vsub.s32 1, %v438
      %v440 = vrot.slane %v400, %v439
      %v441 = vlaneseq
      %v442 = vshrl.u32 %v441, 7
      %v443 = vsub.s32 1, %v442
      %v444 = vrot.slane %v404, %v443
      %v445 = vlaneseq
      %v446 = vshrl.u32 %v445, 7
      %v447 = vsub.s32 1, %v446
      %v448 = vrot.slane %v408, %v447
      %v449 = vmul.f32 %v375, %v420
      %v450 = vmul.f32 %v375, %v424
      %v451 = vmul.f32 %v375, %v428
      %v452 = vmul.f32 %v375, %v432
      %v453 = vmul.f32 %v375, %v436
      %v454 = vmul.f32 %v375, %v440
      %v455 = vmul.f32 %v375, %v444
      %v456 = vmul.f32 %v375, %v448
      %v457 = vadd.f32 %v365, %v449
      %v458 = vadd.f32 %v366, %v450
      %v459 = vadd.f32 %v367, %v451
      %v460 = vadd.f32 %v368, %v452
      %v461 = vadd.f32 %v369, %v453
      %v462 = vadd.f32 %v370, %v454
      %v463 = vadd.f32 %v371, %v455
      %v464 = vadd.f32 %v372, %v456
      %466 = vset.pattern.permute.xlu0 0
      %467 = vperm.xlu0 %466, %v285
      %v468 = vpop.permute.xlu0 %467
      %v470 = vadd.f32 %v457, %v468
      %v471 = vadd.f32 %v458, %v468
      %v472 = vadd.f32 %v459, %v468
      %v473 = vadd.f32 %v460, %v468
      %v474 = vadd.f32 %v461, %v468
      %v475 = vadd.f32 %v462, %v468
      %v476 = vadd.f32 %v463, %v468
      %v477 = vadd.f32 %v464, %v468
      %v478 = vtanh.pop %v470
      %v479 = vtanh.pop %v471
      %v480 = vtanh.pop %v472
      %v481 = vtanh.pop %v473
      %v482 = vtanh.pop %v474
      %v483 = vtanh.pop %v475
      %v484 = vtanh.pop %v476
      %v485 = vtanh.pop %v477
      %v486 = vld [vmem:[%s3] sm:$0xf]
      %v487 = vld [vmem:[%s4] sm:$0xf]
      %489 = vset.pattern.permute.xlu0 0
      %490 = vperm.xlu0 %489, %v486
      %v491 = vpop.permute.xlu0 %490
      %v493 = vlaneseq
      %v494 = vshrl.u32 %v493, 7
      %v495 = vsub.s32 0, %v494
      %v496 = vrot.slane %v478, %v495
      %v497 = vlaneseq
      %v498 = vshrl.u32 %v497, 7
      %v499 = vsub.s32 0, %v498
      %v500 = vrot.slane %v479, %v499
      %v501 = vlaneseq
      %v502 = vshrl.u32 %v501, 7
      %v503 = vsub.s32 0, %v502
      %v504 = vrot.slane %v480, %v503
      %v505 = vlaneseq
      %v506 = vshrl.u32 %v505, 7
      %v507 = vsub.s32 0, %v506
      %v508 = vrot.slane %v481, %v507
      %v509 = vlaneseq
      %v510 = vshrl.u32 %v509, 7
      %v511 = vsub.s32 0, %v510
      %v512 = vrot.slane %v482, %v511
      %v513 = vlaneseq
      %v514 = vshrl.u32 %v513, 7
      %v515 = vsub.s32 0, %v514
      %v516 = vrot.slane %v483, %v515
      %v517 = vlaneseq
      %v518 = vshrl.u32 %v517, 7
      %v519 = vsub.s32 0, %v518
      %v520 = vrot.slane %v484, %v519
      %v521 = vlaneseq
      %v522 = vshrl.u32 %v521, 7
      %v523 = vsub.s32 0, %v522
      %v524 = vrot.slane %v485, %v523
      %v525 = vmul.f32 %v491, %v496
      %v526 = vmul.f32 %v491, %v500
      %v527 = vmul.f32 %v491, %v504
      %v528 = vmul.f32 %v491, %v508
      %v529 = vmul.f32 %v491, %v512
      %v530 = vmul.f32 %v491, %v516
      %v531 = vmul.f32 %v491, %v520
      %v532 = vmul.f32 %v491, %v524
      %533 = vset.pattern.permute.xlu0 1
      %534 = vperm.xlu0 %533, %v486
      %v535 = vpop.permute.xlu0 %534
      %v537 = vlaneseq
      %v538 = vshrl.u32 %v537, 7
      %v539 = vsub.s32 1, %v538
      %v540 = vrot.slane %v478, %v539
      %v541 = vlaneseq
      %v542 = vshrl.u32 %v541, 7
      %v543 = vsub.s32 1, %v542
      %v544 = vrot.slane %v479, %v543
      %v545 = vlaneseq
      %v546 = vshrl.u32 %v545, 7
      %v547 = vsub.s32 1, %v546
      %v548 = vrot.slane %v480, %v547
      %v549 = vlaneseq
      %v550 = vshrl.u32 %v549, 7
      %v551 = vsub.s32 1, %v550
      %v552 = vrot.slane %v481, %v551
      %v553 = vlaneseq
      %v554 = vshrl.u32 %v553, 7
      %v555 = vsub.s32 1, %v554
      %v556 = vrot.slane %v482, %v555
      %v557 = vlaneseq
      %v558 = vshrl.u32 %v557, 7
      %v559 = vsub.s32 1, %v558
      %v560 = vrot.slane %v483, %v559
      %v561 = vlaneseq
      %v562 = vshrl.u32 %v561, 7
      %v563 = vsub.s32 1, %v562
      %v564 = vrot.slane %v484, %v563
      %v565 = vlaneseq
      %v566 = vshrl.u32 %v565, 7
      %v567 = vsub.s32 1, %v566
      %v568 = vrot.slane %v485, %v567
      %v569 = vmul.f32 %v535, %v540
      %v570 = vmul.f32 %v535, %v544
      %v571 = vmul.f32 %v535, %v548
      %v572 = vmul.f32 %v535, %v552
      %v573 = vmul.f32 %v535, %v556
      %v574 = vmul.f32 %v535, %v560
      %v575 = vmul.f32 %v535, %v564
      %v576 = vmul.f32 %v535, %v568
      %v577 = vadd.f32 %v525, %v569
      %v578 = vadd.f32 %v526, %v570
      %v579 = vadd.f32 %v527, %v571
      %v580 = vadd.f32 %v528, %v572
      %v581 = vadd.f32 %v529, %v573
      %v582 = vadd.f32 %v530, %v574
      %v583 = vadd.f32 %v531, %v575
      %v584 = vadd.f32 %v532, %v576
      %585 = vset.pattern.permute.xlu0 2
      %586 = vperm.xlu0 %585, %v486
      %v587 = vpop.permute.xlu0 %586
      %v589 = vlaneseq
      %v590 = vshrl.u32 %v589, 7
      %v591 = vsub.s32 2, %v590
      %v592 = vrot.slane %v478, %v591
      %v593 = vlaneseq
      %v594 = vshrl.u32 %v593, 7
      %v595 = vsub.s32 2, %v594
      %v596 = vrot.slane %v479, %v595
      %v597 = vlaneseq
      %v598 = vshrl.u32 %v597, 7
      %v599 = vsub.s32 2, %v598
      %v600 = vrot.slane %v480, %v599
      %v601 = vlaneseq
      %v602 = vshrl.u32 %v601, 7
      %v603 = vsub.s32 2, %v602
      %v604 = vrot.slane %v481, %v603
      %v605 = vlaneseq
      %v606 = vshrl.u32 %v605, 7
      %v607 = vsub.s32 2, %v606
      %v608 = vrot.slane %v482, %v607
      %v609 = vlaneseq
      %v610 = vshrl.u32 %v609, 7
      %v611 = vsub.s32 2, %v610
      %v612 = vrot.slane %v483, %v611
      %v613 = vlaneseq
      %v614 = vshrl.u32 %v613, 7
      %v615 = vsub.s32 2, %v614
      %v616 = vrot.slane %v484, %v615
      %v617 = vlaneseq
      %v618 = vshrl.u32 %v617, 7
      %v619 = vsub.s32 2, %v618
      %v620 = vrot.slane %v485, %v619
      %v621 = vmul.f32 %v587, %v592
      %v622 = vmul.f32 %v587, %v596
      %v623 = vmul.f32 %v587, %v600
      %v624 = vmul.f32 %v587, %v604
      %v625 = vmul.f32 %v587, %v608
      %v626 = vmul.f32 %v587, %v612
      %v627 = vmul.f32 %v587, %v616
      %v628 = vmul.f32 %v587, %v620
      %v629 = vadd.f32 %v577, %v621
      %v630 = vadd.f32 %v578, %v622
      %v631 = vadd.f32 %v579, %v623
      %v632 = vadd.f32 %v580, %v624
      %v633 = vadd.f32 %v581, %v625
      %v634 = vadd.f32 %v582, %v626
      %v635 = vadd.f32 %v583, %v627
      %v636 = vadd.f32 %v584, %v628
      %637 = vset.pattern.permute.xlu0 3
      %638 = vperm.xlu0 %637, %v486
      %v639 = vpop.permute.xlu0 %638
      %v641 = vlaneseq
      %v642 = vshrl.u32 %v641, 7
      %v643 = vsub.s32 3, %v642
      %v644 = vrot.slane %v478, %v643
      %v645 = vlaneseq
      %v646 = vshrl.u32 %v645, 7
      %v647 = vsub.s32 3, %v646
      %v648 = vrot.slane %v479, %v647
      %v649 = vlaneseq
      %v650 = vshrl.u32 %v649, 7
      %v651 = vsub.s32 3, %v650
      %v652 = vrot.slane %v480, %v651
      %v653 = vlaneseq
      %v654 = vshrl.u32 %v653, 7
      %v655 = vsub.s32 3, %v654
      %v656 = vrot.slane %v481, %v655
      %v657 = vlaneseq
      %v658 = vshrl.u32 %v657, 7
      %v659 = vsub.s32 3, %v658
      %v660 = vrot.slane %v482, %v659
      %v661 = vlaneseq
      %v662 = vshrl.u32 %v661, 7
      %v663 = vsub.s32 3, %v662
      %v664 = vrot.slane %v483, %v663
      %v665 = vlaneseq
      %v666 = vshrl.u32 %v665, 7
      %v667 = vsub.s32 3, %v666
      %v668 = vrot.slane %v484, %v667
      %v669 = vlaneseq
      %v670 = vshrl.u32 %v669, 7
      %v671 = vsub.s32 3, %v670
      %v672 = vrot.slane %v485, %v671
      %v673 = vmul.f32 %v639, %v644
      %v674 = vmul.f32 %v639, %v648
      %v675 = vmul.f32 %v639, %v652
      %v676 = vmul.f32 %v639, %v656
      %v677 = vmul.f32 %v639, %v660
      %v678 = vmul.f32 %v639, %v664
      %v679 = vmul.f32 %v639, %v668
      %v680 = vmul.f32 %v639, %v672
      %v681 = vadd.f32 %v629, %v673
      %v682 = vadd.f32 %v630, %v674
      %v683 = vadd.f32 %v631, %v675
      %v684 = vadd.f32 %v632, %v676
      %v685 = vadd.f32 %v633, %v677
      %v686 = vadd.f32 %v634, %v678
      %v687 = vadd.f32 %v635, %v679
      %v688 = vadd.f32 %v636, %v680
      %690 = vset.pattern.permute.xlu0 0
      %691 = vperm.xlu0 %690, %v487
      %v692 = vpop.permute.xlu0 %691
      %v694 = vadd.f32 %v681, %v692
      %v695 = vadd.f32 %v682, %v692
      %v696 = vadd.f32 %v683, %v692
      %v697 = vadd.f32 %v684, %v692
      %v698 = vadd.f32 %v685, %v692
      %v699 = vadd.f32 %v686, %v692
      %v700 = vadd.f32 %v687, %v692
      %v701 = vadd.f32 %v688, %v692
      %v702 = vtanh.pop %v694
      %v703 = vtanh.pop %v695
      %v704 = vtanh.pop %v696
      %v705 = vtanh.pop %v697
      %v706 = vtanh.pop %v698
      %v707 = vtanh.pop %v699
      %v708 = vtanh.pop %v700
      %v709 = vtanh.pop %v701
      %v710 = vld [vmem:[%s5] sm:$0x1]
      %v711 = vld [vmem:[#allocation2] sm:$0x1]
      %713 = vset.pattern.permute.xlu0 0
      %714 = vperm.xlu0 %713, %v710
      %v715 = vpop.permute.xlu0 %714
      %v717 = vlaneseq
      %v718 = vshrl.u32 %v717, 7
      %v719 = vsub.s32 0, %v718
      %v720 = vrot.slane %v715, %v719
      %v721 = vmul.f32 %v720, %v702
      %v722 = vmul.f32 %v720, %v703
      %v723 = vmul.f32 %v720, %v704
      %v724 = vmul.f32 %v720, %v705
      %v725 = vmul.f32 %v720, %v706
      %v726 = vmul.f32 %v720, %v707
      %v727 = vmul.f32 %v720, %v708
      %v728 = vmul.f32 %v720, %v709
      %729 = vset.pattern.permute.xlu0 1
      %730 = vperm.xlu0 %729, %v710
      %v731 = vpop.permute.xlu0 %730
      %v733 = vlaneseq
      %v734 = vshrl.u32 %v733, 7
      %v735 = vsub.s32 0, %v734
      %v736 = vrot.slane %v731, %v735
      %v737 = vmul.f32 %v736, %v702
      %v738 = vmul.f32 %v736, %v703
      %v739 = vmul.f32 %v736, %v704
      %v740 = vmul.f32 %v736, %v705
      %v741 = vmul.f32 %v736, %v706
      %v742 = vmul.f32 %v736, %v707
      %v743 = vmul.f32 %v736, %v708
      %v744 = vmul.f32 %v736, %v709
      %v753 = vrot.slane %v737, 1
      %v754 = vrot.slane %v738, 1
      %v755 = vrot.slane %v739, 1
      %v756 = vrot.slane %v740, 1
      %v757 = vrot.slane %v741, 1
      %v758 = vrot.slane %v742, 1
      %v759 = vrot.slane %v743, 1
      %v760 = vrot.slane %v744, 1
      %v769 = vadd.f32 %v721, %v753
      %v770 = vadd.f32 %v722, %v754
      %v771 = vadd.f32 %v723, %v755
      %v772 = vadd.f32 %v724, %v756
      %v773 = vadd.f32 %v725, %v757
      %v774 = vadd.f32 %v726, %v758
      %v775 = vadd.f32 %v727, %v759
      %v776 = vadd.f32 %v728, %v760
      %777 = vset.pattern.permute.xlu0 2
      %778 = vperm.xlu0 %777, %v710
      %v779 = vpop.permute.xlu0 %778
      %v781 = vlaneseq
      %v782 = vshrl.u32 %v781, 7
      %v783 = vsub.s32 0, %v782
      %v784 = vrot.slane %v779, %v783
      %v785 = vmul.f32 %v784, %v702
      %v786 = vmul.f32 %v784, %v703
      %v787 = vmul.f32 %v784, %v704
      %v788 = vmul.f32 %v784, %v705
      %v789 = vmul.f32 %v784, %v706
      %v790 = vmul.f32 %v784, %v707
      %v791 = vmul.f32 %v784, %v708
      %v792 = vmul.f32 %v784, %v709
      %v801 = vrot.slane %v785, 2
      %v802 = vrot.slane %v786, 2
      %v803 = vrot.slane %v787, 2
      %v804 = vrot.slane %v788, 2
      %v805 = vrot.slane %v789, 2
      %v806 = vrot.slane %v790, 2
      %v807 = vrot.slane %v791, 2
      %v808 = vrot.slane %v792, 2
      %v817 = vadd.f32 %v769, %v801
      %v818 = vadd.f32 %v770, %v802
      %v819 = vadd.f32 %v771, %v803
      %v820 = vadd.f32 %v772, %v804
      %v821 = vadd.f32 %v773, %v805
      %v822 = vadd.f32 %v774, %v806
      %v823 = vadd.f32 %v775, %v807
      %v824 = vadd.f32 %v776, %v808
      %825 = vset.pattern.permute.xlu0 3
      %826 = vperm.xlu0 %825, %v710
      %v827 = vpop.permute.xlu0 %826
      %v829 = vlaneseq
      %v830 = vshrl.u32 %v829, 7
      %v831 = vsub.s32 0, %v830
      %v832 = vrot.slane %v827, %v831
      %v833 = vmul.f32 %v832, %v702
      %v834 = vmul.f32 %v832, %v703
      %v835 = vmul.f32 %v832, %v704
      %v836 = vmul.f32 %v832, %v705
      %v837 = vmul.f32 %v832, %v706
      %v838 = vmul.f32 %v832, %v707
      %v839 = vmul.f32 %v832, %v708
      %v840 = vmul.f32 %v832, %v709
      %v849 = vrot.slane %v833, 3
      %v850 = vrot.slane %v834, 3
      %v851 = vrot.slane %v835, 3
      %v852 = vrot.slane %v836, 3
      %v853 = vrot.slane %v837, 3
      %v854 = vrot.slane %v838, 3
      %v855 = vrot.slane %v839, 3
      %v856 = vrot.slane %v840, 3
      %v865 = vadd.f32 %v817, %v849
      %v866 = vadd.f32 %v818, %v850
      %v867 = vadd.f32 %v819, %v851
      %v868 = vadd.f32 %v820, %v852
      %v869 = vadd.f32 %v821, %v853
      %v870 = vadd.f32 %v822, %v854
      %v871 = vadd.f32 %v823, %v855
      %v872 = vadd.f32 %v824, %v856
      %874 = vset.pattern.permute.xlu0 0
      %875 = vperm.xlu0 %874, %v711
      %v876 = vpop.permute.xlu0 %875
      %v878 = vlaneseq
      %v879 = vshrl.u32 %v878, 7
      %v880 = vsub.s32 0, %v879
      %v881 = vrot.slane %v876, %v880
      %v882 = vadd.f32 %v865, %v881
      %v883 = vadd.f32 %v866, %v881
      %v884 = vadd.f32 %v867, %v881
      %v885 = vadd.f32 %v868, %v881
      %v886 = vadd.f32 %v869, %v881
      %v887 = vadd.f32 %v870, %v881
      %v888 = vadd.f32 %v871, %v881
      %v889 = vadd.f32 %v872, %v881
      %v890 = vtanh.pop %v882
      %v891 = vtanh.pop %v883
      %v892 = vtanh.pop %v884
      %v893 = vtanh.pop %v885
      %v894 = vtanh.pop %v886
      %v895 = vtanh.pop %v887
      %v896 = vtanh.pop %v888
      %v897 = vtanh.pop %v889
      %v906 = vcombine.low %v890, %v891
      %v907 = vcombine.low %v892, %v893
      %v908 = vcombine.low %v894, %v895
      %v909 = vcombine.low %v896, %v897
      %v911 = vunpack.c.l.s4 1966171168
      %v912 = vunpack.c.0.s8 %v911
      %v913 = vlaneseq
      %v914 = vshrl.u32 %v913, 7
      %v915 = vsub.s32 %v912, %v914
      %v916 = vrot.slane %v906, %v915
      %v918 = vunpack.c.l.s4 1966171168
      %v919 = vunpack.c.0.s8 %v918
      %v920 = vlaneseq
      %v921 = vshrl.u32 %v920, 7
      %v922 = vsub.s32 %v919, %v921
      %v923 = vrot.slane %v907, %v922
      %v925 = vunpack.c.l.s4 1966171168
      %v926 = vunpack.c.0.s8 %v925
      %v927 = vlaneseq
      %v928 = vshrl.u32 %v927, 7
      %v929 = vsub.s32 %v926, %v928
      %v930 = vrot.slane %v908, %v929
      %v932 = vunpack.c.l.s4 1966171168
      %v933 = vunpack.c.0.s8 %v932
      %v934 = vlaneseq
      %v935 = vshrl.u32 %v934, 7
      %v936 = vsub.s32 %v933, %v935
      %v937 = vrot.slane %v909, %v936
      %v938 = vcombine.low %v916, %v923
      %v939 = vcombine.low %v930, %v937
      %v941 = vunpack.c.l.s4 1966171168
      %v942 = vunpack.c.0.s8 %v941
      %v943 = vlaneseq
      %v944 = vshrl.u32 %v943, 7
      %v945 = vsub.s32 %v942, %v944
      %v946 = vrot.slane %v938, %v945
      %v948 = vunpack.c.l.s4 1966171168
      %v949 = vunpack.c.0.s8 %v948
      %v950 = vlaneseq
      %v951 = vshrl.u32 %v950, 7
      %v952 = vsub.s32 %v949, %v951
      %v953 = vrot.slane %v939, %v952
      %v954 = vcombine.low %v946, %v953
      %956 = vst [vmem:[%s280] sm:$0xff] %v954
      %s957 = smul.u32 8, %s20
      %p958 = scmp.lt.s32.totalorder %s957, 15
      %s959 = scalar_select %p958, %s957, 15
      %s960 = scalar_lea.vmem %s7, %s959
      // Predicated region
      $region49: #{_lambda_.2} parent=47 // pred_check
        %p961 = pneg %p190
      $region50: #{_lambda_.2} parent=47 // pred_check_branch
        %963 = sbr.rel (%p961) target = $region52
      $region51: #{_lambda_.2} parent=47 // pred_region
        %s964 = smul.u32 8, %s20
      $region52: #{_lambda_.2} parent=47 // pred_fallthru
        _
    $region48: #{_lambda_.2} parent=5 // pred_fallthru
      _
    %p965 = scmp.le.s32.totalorder 2, %s15
    // Predicated region
    $region53: #{_lambda_.2} parent=5 // pred_check
      %p966 = pneg %p965
    $region54: #{_lambda_.2} parent=5 // pred_check_branch
      %968 = sbr.rel (%p966) target = $region56
    $region55: #{_lambda_.2} parent=5 // pred_region
      %s969 = ssub.s32 %s15, 2
      // Predicated region
      $region57: #{_lambda_.2} parent=55 // pred_check
        %p970 = pneg %p196
      $region58: #{_lambda_.2} parent=55 // pred_check_branch
        %972 = sbr.rel (%p970) target = $region60
      $region59: #{_lambda_.2} parent=55 // pred_region
        %s973 = smul.u32 8, %s21
        %p974 = scmp.lt.s32.totalorder %s973, 15
        %s975 = scalar_select %p974, %s973, 15
        %s976 = scalar_lea.vmem %s7, %s975
      $region60: #{_lambda_.2} parent=55 // pred_fallthru
        _
    $region56: #{_lambda_.2} parent=5 // pred_fallthru
      _
  $region6: #{_lambda_.2} parent=0 // loop_footer
    %s19 = sadd.s32 1, %s15
  $region7: #{_lambda_.2} parent=0 // loop_footer_branch
    %14 = sbr.rel target = $region3
  $region8: #{_lambda_.2} parent=0 // loop_exit
    _

// kernel: _lambda_.3
$region0: #{_lambda_.3}
  #allocation0 [shape = 'u32[]', space=smem, size = 0x4, offset = 0x4, fixed_abs, tag = 'smem constant byte address 0x4 - core index']
  #allocation1 [shape = 'u32[144,128]{1,0:T(1,128)}', space=vmem, size = 0x12000, scoped, tag = 'internal scratch']
  #allocation2 [shape = 'f32[1,1]{1,0:T(1,128)S(1)}', space=vmem, size = 0x200, scoped, tag = 'scoped memory for _lambda_.3']
  #allocation3 [shape = 'f32[1,1]{1,0:T(1,128)S(1)}', space=vmem, size = 0x200, scoped, tag = 'scoped memory for _lambda_.3']
  %s0 = inlined_call_operand.vmem [shape: f32[128,16], index: 0, kind: input, shape index: {}]
  %s1 = inlined_call_operand.vmem [shape: f32[2,1], index: 1, kind: input, shape index: {}]
  %s2 = inlined_call_operand.vmem [shape: f32[2,1], index: 2, kind: input, shape index: {}]
  %s3 = inlined_call_operand.vmem [shape: f32[2,1], index: 3, kind: input, shape index: {}]
  %s4 = inlined_call_operand.<no memory space> [shape: f32[1,1], index: 4, kind: input, shape index: {}]
  %s5 = inlined_call_operand.vmem [shape: f32[2,1], index: 5, kind: input, shape index: {}]
  %s6 = inlined_call_operand.vmem [shape: f32[2,1], index: 6, kind: input, shape index: {}]
  %s7 = inlined_call_operand.vmem [shape: f32[2,1], index: 7, kind: input, shape index: {}]
  %s8 = inlined_call_operand.<no memory space> [shape: f32[1,1], index: 8, kind: input, shape index: {}]
  %s9 = inlined_call_operand.vmem [shape: f32[128,16], index: 9, kind: output, shape index: {0}]
  %s10 = inlined_call_operand.hbm [shape: f32[1,1], index: 10, kind: output, shape index: {1}]
  %s11 = inlined_call_operand.hbm [shape: f32[1,1], index: 11, kind: output, shape index: {2}]
  %12 = xla_tuple %s9, %s10, %s11
  %s13 = sld [smem:[#allocation0]]
  $region62: #{_lambda_.3} parent=0
    _
  %s15 = ssub.s32 1, %s13
  %s16 = scalar_select 0, %s15, %s13
  %v17 = vstv %s4
  %18 = vst [vmem:[#allocation2] sm:$0x1] %v17
  %v19 = vstv %s8
  %20 = vst [vmem:[#allocation3] sm:$0x1] %v19
  $region1: #{_lambda_.3} parent=0
    #allocation4 [shape = 'u8[512]{0}', space=vmem, size = 0x400, scoped, tag = 'output window, operand 1, single buffered']
    #allocation5 [shape = 's32[1]{0}', space=sflag, size = 0x4, scoped, tag = 'scoped memory for _lambda_.3']
    #allocation6 [shape = 'u8[512]{0}', space=vmem, size = 0x400, scoped, tag = 'output window, operand 2, single buffered']
    #allocation7 [shape = 's32[1]{0}', space=sflag, size = 0x4, scoped, tag = 'scoped memory for _lambda_.3']
    %21 = vsyncpa [#allocation5], 0
    %22 = vsyncpa [#allocation7], 0
    // Predicated region
    $region2: #{_lambda_.3} parent=1 // pred_check
      _
    $region3: #{_lambda_.3} parent=1 // pred_check_branch
      %24 = sbr.rel (0) target = $region5
    $region4: #{_lambda_.3} parent=1 // pred_region
      _
    $region5: #{_lambda_.3} parent=1 // pred_fallthru
      _
    // Predicated region
    $region6: #{_lambda_.3} parent=1 // pred_check
      _
    $region7: #{_lambda_.3} parent=1 // pred_check_branch
      %26 = sbr.rel (0) target = $region9
    $region8: #{_lambda_.3} parent=1 // pred_region
      _
    $region9: #{_lambda_.3} parent=1 // pred_fallthru
      _
    // Predicated region
    $region10: #{_lambda_.3} parent=1 // pred_check
      _
    $region11: #{_lambda_.3} parent=1 // pred_check_branch
      %28 = sbr.rel (0) target = $region13
    $region12: #{_lambda_.3} parent=1 // pred_region
      _
    $region13: #{_lambda_.3} parent=1 // pred_fallthru
      _
    // Predicated region
    $region14: #{_lambda_.3} parent=1 // pred_check
      _
    $region15: #{_lambda_.3} parent=1 // pred_check_branch
      %30 = sbr.rel (0) target = $region17
    $region16: #{_lambda_.3} parent=1 // pred_region
      _
    $region17: #{_lambda_.3} parent=1 // pred_fallthru
      _
    // Predicated region
    $region18: #{_lambda_.3} parent=1 // pred_check
      _
    $region19: #{_lambda_.3} parent=1 // pred_check_branch
      %32 = sbr.rel (0) target = $region21
    $region20: #{_lambda_.3} parent=1 // pred_region
      _
    $region21: #{_lambda_.3} parent=1 // pred_fallthru
      _
    // Predicated region
    $region22: #{_lambda_.3} parent=1 // pred_check
      _
    $region23: #{_lambda_.3} parent=1 // pred_check_branch
      %34 = sbr.rel (0) target = $region25
    $region24: #{_lambda_.3} parent=1 // pred_region
      _
    $region25: #{_lambda_.3} parent=1 // pred_fallthru
      _
    // Predicated region
    $region26: #{_lambda_.3} parent=1 // pred_check
      _
    $region27: #{_lambda_.3} parent=1 // pred_check_branch
      %36 = sbr.rel (0) target = $region29
    $region28: #{_lambda_.3} parent=1 // pred_region
      _
    $region29: #{_lambda_.3} parent=1 // pred_fallthru
      _
    // Predicated region
    $region30: #{_lambda_.3} parent=1 // pred_check
      _
    $region31: #{_lambda_.3} parent=1 // pred_check_branch
      %38 = sbr.rel (0) target = $region33
    $region32: #{_lambda_.3} parent=1 // pred_region
      _
    $region33: #{_lambda_.3} parent=1 // pred_fallthru
      _
    // Predicated region
    $region34: #{_lambda_.3} parent=1 // pred_check
      _
    $region35: #{_lambda_.3} parent=1 // pred_check_branch
      %40 = sbr.rel (0) target = $region37
    $region36: #{_lambda_.3} parent=1 // pred_region
      _
    $region37: #{_lambda_.3} parent=1 // pred_fallthru
      _
    %v41 = vld [vmem:[%s0] sm:$0xff]
    %v42 = vld [vmem:[%s0 + $0x8] sm:$0xff]
    %v43 = vld [vmem:[%s0 + $0x10] sm:$0xff]
    %v44 = vld [vmem:[%s0 + $0x18] sm:$0xff]
    %v45 = vld [vmem:[%s0 + $0x20] sm:$0xff]
    %v46 = vld [vmem:[%s0 + $0x28] sm:$0xff]
    %v47 = vld [vmem:[%s0 + $0x30] sm:$0xff]
    %v48 = vld [vmem:[%s0 + $0x38] sm:$0xff]
    %v49 = vld [vmem:[%s0 + $0x40] sm:$0xff]
    %v50 = vld [vmem:[%s0 + $0x48] sm:$0xff]
    %v51 = vld [vmem:[%s0 + $0x50] sm:$0xff]
    %v52 = vld [vmem:[%s0 + $0x58] sm:$0xff]
    %v53 = vld [vmem:[%s0 + $0x60] sm:$0xff]
    %v54 = vld [vmem:[%s0 + $0x68] sm:$0xff]
    %v55 = vld [vmem:[%s0 + $0x70] sm:$0xff]
    %v56 = vld [vmem:[%s0 + $0x78] sm:$0xff]
    %vm57 = vcmask 130048
    %v59 = vsel %vm57, %v41, 0
    %v62 = vsel %vm57, %v42, 0
    %v65 = vsel %vm57, %v43, 0
    %v68 = vsel %vm57, %v44, 0
    %v71 = vsel %vm57, %v45, 0
    %v74 = vsel %vm57, %v46, 0
    %v77 = vsel %vm57, %v47, 0
    %v80 = vsel %vm57, %v48, 0
    %v83 = vsel %vm57, %v49, 0
    %v86 = vsel %vm57, %v50, 0
    %v89 = vsel %vm57, %v51, 0
    %v92 = vsel %vm57, %v52, 0
    %v95 = vsel %vm57, %v53, 0
    %v98 = vsel %vm57, %v54, 0
    %v101 = vsel %vm57, %v55, 0
    %v104 = vsel %vm57, %v56, 0
    %106 = vmatprep.subr.mxu0 0.0
    %v107 = vand.u32 %v59, 4294901760
    %108 = vmatpush1.xpose.msra.mxu0 %v107
    %109 = vmatprep.subr.mxu0 0.0
    %v110 = vand.u32 %v62, 4294901760
    %111 = vmatpush1.xpose.msra.mxu0 %v110
    %112 = vmatprep.subr.mxu0 0.0
    %v113 = vand.u32 %v65, 4294901760
    %114 = vmatpush1.xpose.msra.mxu0 %v113
    %115 = vmatprep.subr.mxu0 0.0
    %v116 = vand.u32 %v68, 4294901760
    %117 = vmatpush1.xpose.msra.mxu0 %v116
    %118 = vmatprep.subr.mxu0 0.0
    %v119 = vand.u32 %v71, 4294901760
    %120 = vmatpush1.xpose.msra.mxu0 %v119
    %121 = vmatprep.subr.mxu0 0.0
    %v122 = vand.u32 %v74, 4294901760
    %123 = vmatpush1.xpose.msra.mxu0 %v122
    %124 = vmatprep.subr.mxu0 0.0
    %v125 = vand.u32 %v77, 4294901760
    %126 = vmatpush1.xpose.msra.mxu0 %v125
    %127 = vmatprep.subr.mxu0 0.0
    %v128 = vand.u32 %v80, 4294901760
    %129 = vmatpush1.xpose.msra.mxu0 %v128
    %130 = vmatprep.subr.mxu0 0.0
    %v131 = vand.u32 %v83, 4294901760
    %132 = vmatpush1.xpose.msra.mxu0 %v131
    %133 = vmatprep.subr.mxu0 0.0
    %v134 = vand.u32 %v86, 4294901760
    %135 = vmatpush1.xpose.msra.mxu0 %v134
    %136 = vmatprep.subr.mxu0 0.0
    %v137 = vand.u32 %v89, 4294901760
    %138 = vmatpush1.xpose.msra.mxu0 %v137
    %139 = vmatprep.subr.mxu0 0.0
    %v140 = vand.u32 %v92, 4294901760
    %141 = vmatpush1.xpose.msra.mxu0 %v140
    %142 = vmatprep.subr.mxu0 0.0
    %v143 = vand.u32 %v95, 4294901760
    %144 = vmatpush1.xpose.msra.mxu0 %v143
    %145 = vmatprep.subr.mxu0 0.0
    %v146 = vand.u32 %v98, 4294901760
    %147 = vmatpush1.xpose.msra.mxu0 %v146
    %148 = vmatprep.subr.mxu0 0.0
    %v149 = vand.u32 %v101, 4294901760
    %150 = vmatpush1.xpose.msra.mxu0 %v149
    %151 = vmatprep.subr.mxu0 0.0
    %v152 = vand.u32 %v104, 4294901760
    %153 = vmatpush1.xpose.msra.mxu0 %v152
    %154 = vmatprep.subr.mxu0 0.0
    %155 = vmatpush1.xpose.msra.mxu0 0.0
    %156 = vmatprep.subr.mxu0 0.0
    %157 = vmatpush1.xpose.msra.mxu0 0.0
    %158 = vmatprep.subr.mxu0 0.0
    %159 = vmatpush1.xpose.msra.mxu0 0.0
    %160 = vmatprep.subr.mxu0 0.0
    %161 = vmatpush1.xpose.msra.mxu0 0.0
    %162 = vmatprep.subr.mxu0 0.0
    %163 = vmatpush1.xpose.msra.mxu0 0.0
    %164 = vmatprep.subr.mxu0 0.0
    %165 = vmatpush1.xpose.msra.mxu0 0.0
    %166 = vmatprep.subr.mxu0 0.0
    %167 = vmatpush1.xpose.msra.mxu0 0.0
    %168 = vmatprep.subr.mxu0 0.0
    %169 = vmatpush1.xpose.msra.mxu0 0.0
    %170 = vmatprep.subr.mxu0 0.0
    %171 = vmatpush1.xpose.msra.mxu0 0.0
    %172 = vmatprep.subr.mxu0 0.0
    %173 = vmatpush1.xpose.msra.mxu0 0.0
    %174 = vmatprep.subr.mxu0 0.0
    %175 = vmatpush1.xpose.msra.mxu0 0.0
    %176 = vmatprep.subr.mxu0 0.0
    %177 = vmatpush1.xpose.msra.mxu0 0.0
    %178 = vmatprep.subr.mxu0 0.0
    %179 = vmatpush1.xpose.msra.mxu0 0.0
    %180 = vmatprep.subr.mxu0 0.0
    %181 = vmatpush1.xpose.msra.mxu0 0.0
    %182 = vmatprep.subr.mxu0 0.0
    %183 = vmatpush1.xpose.msra.mxu0 0.0
    %184 = vmatprep.subr.mxu0 0.0
    %185 = vmatpush1.xpose.msra.mxu0 0.0
    %186 = vmatprep.mubr.f32.mxu0 0.0
    %v187 = vand.u32 %v59, 4294901760
    %v188 = vsub.f32 %v59, %v187
    %v189 = vand.u32 %v188, 4294901760
    %v190 = vsub.f32 %v188, %v189
    %v191 = vand.u32 %v190, 4294901760
    %192 = vmatmul.mubr.f32.gmra.mrb[0].mxu0 %v191
    %v193 = vpop.f32.mrb[0].mxu0
    %v194 = vadd.f32 0.0, %v193
    %v195 = vpop.f32.mrb[0].mxu0
    %196 = vmatprep.mubr.f32.mxu0 0.0
    %v197 = vand.u32 %v62, 4294901760
    %v198 = vsub.f32 %v62, %v197
    %v199 = vand.u32 %v198, 4294901760
    %v200 = vsub.f32 %v198, %v199
    %v201 = vand.u32 %v200, 4294901760
    %202 = vmatmul.mubr.f32.gmra.mrb[0].mxu0 %v201
    %v203 = vpop.f32.mrb[0].mxu0
    %v204 = vadd.f32 0.0, %v203
    %v205 = vpop.f32.mrb[0].mxu0
    %206 = vmatprep.mubr.f32.mxu0 0.0
    %v207 = vand.u32 %v65, 4294901760
    %v208 = vsub.f32 %v65, %v207
    %v209 = vand.u32 %v208, 4294901760
    %v210 = vsub.f32 %v208, %v209
    %v211 = vand.u32 %v210, 4294901760
    %212 = vmatmul.mubr.f32.gmra.mrb[0].mxu0 %v211
    %v213 = vpop.f32.mrb[0].mxu0
    %v214 = vadd.f32 0.0, %v213
    %v215 = vpop.f32.mrb[0].mxu0
    %216 = vmatprep.mubr.f32.mxu0 0.0
    %v217 = vand.u32 %v68, 4294901760
    %v218 = vsub.f32 %v68, %v217
    %v219 = vand.u32 %v218, 4294901760
    %v220 = vsub.f32 %v218, %v219
    %v221 = vand.u32 %v220, 4294901760
    %222 = vmatmul.mubr.f32.gmra.mrb[0].mxu0 %v221
    %v223 = vpop.f32.mrb[0].mxu0
    %v224 = vadd.f32 0.0, %v223
    %v225 = vpop.f32.mrb[0].mxu0
    %226 = vmatprep.mubr.f32.mxu0 0.0
    %v227 = vand.u32 %v71, 4294901760
    %v228 = vsub.f32 %v71, %v227
    %v229 = vand.u32 %v228, 4294901760
    %v230 = vsub.f32 %v228, %v229
    %v231 = vand.u32 %v230, 4294901760
    %232 = vmatmul.mubr.f32.gmra.mrb[0].mxu0 %v231
    %v233 = vpop.f32.mrb[0].mxu0
    %v234 = vadd.f32 0.0, %v233
    %v235 = vpop.f32.mrb[0].mxu0
    %236 = vmatprep.mubr.f32.mxu0 0.0
    %v237 = vand.u32 %v74, 4294901760
    %v238 = vsub.f32 %v74, %v237
    %v239 = vand.u32 %v238, 4294901760
    %v240 = vsub.f32 %v238, %v239
    %v241 = vand.u32 %v240, 4294901760
    %242 = vmatmul.mubr.f32.gmra.mrb[0].mxu0 %v241
    %v243 = vpop.f32.mrb[0].mxu0
    %v244 = vadd.f32 0.0, %v243
    %v245 = vpop.f32.mrb[0].mxu0
    %246 = vmatprep.mubr.f32.mxu0 0.0
    %v247 = vand.u32 %v77, 4294901760
    %v248 = vsub.f32 %v77, %v247
    %v249 = vand.u32 %v248, 4294901760
    %v250 = vsub.f32 %v248, %v249
    %v251 = vand.u32 %v250, 4294901760
    %252 = vmatmul.mubr.f32.gmra.mrb[0].mxu0 %v251
    %v253 = vpop.f32.mrb[0].mxu0
    %v254 = vadd.f32 0.0, %v253
    %v255 = vpop.f32.mrb[0].mxu0
    %256 = vmatprep.mubr.f32.mxu0 0.0
    %v257 = vand.u32 %v80, 4294901760
    %v258 = vsub.f32 %v80, %v257
    %v259 = vand.u32 %v258, 4294901760
    %v260 = vsub.f32 %v258, %v259
    %v261 = vand.u32 %v260, 4294901760
    %262 = vmatmul.mubr.f32.gmra.mrb[0].mxu0 %v261
    %v263 = vpop.f32.mrb[0].mxu0
    %v264 = vadd.f32 0.0, %v263
    %v265 = vpop.f32.mrb[0].mxu0
    %266 = vmatprep.mubr.f32.mxu0 0.0
    %v267 = vand.u32 %v83, 4294901760
    %v268 = vsub.f32 %v83, %v267
    %v269 = vand.u32 %v268, 4294901760
    %v270 = vsub.f32 %v268, %v269
    %v271 = vand.u32 %v270, 4294901760
    %272 = vmatmul.mubr.f32.gmra.mrb[0].mxu0 %v271
    %v273 = vpop.f32.mrb[0].mxu0
    %v274 = vadd.f32 0.0, %v273
    %v275 = vpop.f32.mrb[0].mxu0
    %276 = vmatprep.mubr.f32.mxu0 0.0
    %v277 = vand.u32 %v86, 4294901760
    %v278 = vsub.f32 %v86, %v277
    %v279 = vand.u32 %v278, 4294901760
    %v280 = vsub.f32 %v278, %v279
    %v281 = vand.u32 %v280, 4294901760
    %282 = vmatmul.mubr.f32.gmra.mrb[0].mxu0 %v281
    %v283 = vpop.f32.mrb[0].mxu0
    %v284 = vadd.f32 0.0, %v283
    %v285 = vpop.f32.mrb[0].mxu0
    %286 = vmatprep.mubr.f32.mxu0 0.0
    %v287 = vand.u32 %v89, 4294901760
    %v288 = vsub.f32 %v89, %v287
    %v289 = vand.u32 %v288, 4294901760
    %v290 = vsub.f32 %v288, %v289
    %v291 = vand.u32 %v290, 4294901760
    %292 = vmatmul.mubr.f32.gmra.mrb[0].mxu0 %v291
    %v293 = vpop.f32.mrb[0].mxu0
    %v294 = vadd.f32 0.0, %v293
    %v295 = vpop.f32.mrb[0].mxu0
    %296 = vmatprep.mubr.f32.mxu0 0.0
    %v297 = vand.u32 %v92, 4294901760
    %v298 = vsub.f32 %v92, %v297
    %v299 = vand.u32 %v298, 4294901760
    %v300 = vsub.f32 %v298, %v299
    %v301 = vand.u32 %v300, 4294901760
    %302 = vmatmul.mubr.f32.gmra.mrb[0].mxu0 %v301
    %v303 = vpop.f32.mrb[0].mxu0
    %v304 = vadd.f32 0.0, %v303
    %v305 = vpop.f32.mrb[0].mxu0
    %306 = vmatprep.mubr.f32.mxu0 0.0
    %v307 = vand.u32 %v95, 4294901760
    %v308 = vsub.f32 %v95, %v307
    %v309 = vand.u32 %v308, 4294901760
    %v310 = vsub.f32 %v308, %v309
    %v311 = vand.u32 %v310, 4294901760
    %312 = vmatmul.mubr.f32.gmra.mrb[0].mxu0 %v311
    %v313 = vpop.f32.mrb[0].mxu0
    %v314 = vadd.f32 0.0, %v313
    %v315 = vpop.f32.mrb[0].mxu0
    %316 = vmatprep.mubr.f32.mxu0 0.0
    %v317 = vand.u32 %v98, 4294901760
    %v318 = vsub.f32 %v98, %v317
    %v319 = vand.u32 %v318, 4294901760
    %v320 = vsub.f32 %v318, %v319
    %v321 = vand.u32 %v320, 4294901760
    %322 = vmatmul.mubr.f32.gmra.mrb[0].mxu0 %v321
    %v323 = vpop.f32.mrb[0].mxu0
    %v324 = vadd.f32 0.0, %v323
    %v325 = vpop.f32.mrb[0].mxu0
    %326 = vmatprep.mubr.f32.mxu0 0.0
    %v327 = vand.u32 %v101, 4294901760
    %v328 = vsub.f32 %v101, %v327
    %v329 = vand.u32 %v328, 4294901760
    %v330 = vsub.f32 %v328, %v329
    %v331 = vand.u32 %v330, 4294901760
    %332 = vmatmul.mubr.f32.gmra.mrb[0].mxu0 %v331
    %v333 = vpop.f32.mrb[0].mxu0
    %v334 = vadd.f32 0.0, %v333
    %v335 = vpop.f32.mrb[0].mxu0
    %336 = vmatprep.mubr.f32.mxu0 0.0
    %v337 = vand.u32 %v104, 4294901760
    %v338 = vsub.f32 %v104, %v337
    %v339 = vand.u32 %v338, 4294901760
    %v340 = vsub.f32 %v338, %v339
    %v341 = vand.u32 %v340, 4294901760
    %342 = vmatmul.mubr.f32.gmra.mrb[0].mxu0 %v341
    %v343 = vpop.f32.mrb[0].mxu0
    %v344 = vadd.f32 0.0, %v343
    %v345 = vpop.f32.mrb[0].mxu0
    %346 = vdwg.mxu0
    %347 = vmatprep.subr.mxu0 0.0
    %v348 = vand.u32 %v59, 4294901760
    %v349 = vsub.f32 %v59, %v348
    %v350 = vand.u32 %v349, 4294901760
    %v351 = vsub.f32 %v349, %v350
    %v352 = vand.u32 %v351, 4294901760
    %353 = vmatpush1.xpose.msra.mxu0 %v352
    %354 = vmatprep.subr.mxu0 0.0
    %v355 = vand.u32 %v62, 4294901760
    %v356 = vsub.f32 %v62, %v355
    %v357 = vand.u32 %v356, 4294901760
    %v358 = vsub.f32 %v356, %v357
    %v359 = vand.u32 %v358, 4294901760
    %360 = vmatpush1.xpose.msra.mxu0 %v359
    %361 = vmatprep.subr.mxu0 0.0
    %v362 = vand.u32 %v65, 4294901760
    %v363 = vsub.f32 %v65, %v362
    %v364 = vand.u32 %v363, 4294901760
    %v365 = vsub.f32 %v363, %v364
    %v366 = vand.u32 %v365, 4294901760
    %367 = vmatpush1.xpose.msra.mxu0 %v366
    %368 = vmatprep.subr.mxu0 0.0
    %v369 = vand.u32 %v68, 4294901760
    %v370 = vsub.f32 %v68, %v369
    %v371 = vand.u32 %v370, 4294901760
    %v372 = vsub.f32 %v370, %v371
    %v373 = vand.u32 %v372, 4294901760
    %374 = vmatpush1.xpose.msra.mxu0 %v373
    %375 = vmatprep.subr.mxu0 0.0
    %v376 = vand.u32 %v71, 4294901760
    %v377 = vsub.f32 %v71, %v376
    %v378 = vand.u32 %v377, 4294901760
    %v379 = vsub.f32 %v377, %v378
    %v380 = vand.u32 %v379, 4294901760
    %381 = vmatpush1.xpose.msra.mxu0 %v380
    %382 = vmatprep.subr.mxu0 0.0
    %v383 = vand.u32 %v74, 4294901760
    %v384 = vsub.f32 %v74, %v383
    %v385 = vand.u32 %v384, 4294901760
    %v386 = vsub.f32 %v384, %v385
    %v387 = vand.u32 %v386, 4294901760
    %388 = vmatpush1.xpose.msra.mxu0 %v387
    %389 = vmatprep.subr.mxu0 0.0
    %v390 = vand.u32 %v77, 4294901760
    %v391 = vsub.f32 %v77, %v390
    %v392 = vand.u32 %v391, 4294901760
    %v393 = vsub.f32 %v391, %v392
    %v394 = vand.u32 %v393, 4294901760
    %395 = vmatpush1.xpose.msra.mxu0 %v394
    %396 = vmatprep.subr.mxu0 0.0
    %v397 = vand.u32 %v80, 4294901760
    %v398 = vsub.f32 %v80, %v397
    %v399 = vand.u32 %v398, 4294901760
    %v400 = vsub.f32 %v398, %v399
    %v401 = vand.u32 %v400, 4294901760
    %402 = vmatpush1.xpose.msra.mxu0 %v401
    %403 = vmatprep.subr.mxu0 0.0
    %v404 = vand.u32 %v83, 4294901760
    %v405 = vsub.f32 %v83, %v404
    %v406 = vand.u32 %v405, 4294901760
    %v407 = vsub.f32 %v405, %v406
    %v408 = vand.u32 %v407, 4294901760
    %409 = vmatpush1.xpose.msra.mxu0 %v408
    %410 = vmatprep.subr.mxu0 0.0
    %v411 = vand.u32 %v86, 4294901760
    %v412 = vsub.f32 %v86, %v411
    %v413 = vand.u32 %v412, 4294901760
    %v414 = vsub.f32 %v412, %v413
    %v415 = vand.u32 %v414, 4294901760
    %416 = vmatpush1.xpose.msra.mxu0 %v415
    %417 = vmatprep.subr.mxu0 0.0
    %v418 = vand.u32 %v89, 4294901760
    %v419 = vsub.f32 %v89, %v418
    %v420 = vand.u32 %v419, 4294901760
    %v421 = vsub.f32 %v419, %v420
    %v422 = vand.u32 %v421, 4294901760
    %423 = vmatpush1.xpose.msra.mxu0 %v422
    %424 = vmatprep.subr.mxu0 0.0
    %v425 = vand.u32 %v92, 4294901760
    %v426 = vsub.f32 %v92, %v425
    %v427 = vand.u32 %v426, 4294901760
    %v428 = vsub.f32 %v426, %v427
    %v429 = vand.u32 %v428, 4294901760
    %430 = vmatpush1.xpose.msra.mxu0 %v429
    %431 = vmatprep.subr.mxu0 0.0
    %v432 = vand.u32 %v95, 4294901760
    %v433 = vsub.f32 %v95, %v432
    %v434 = vand.u32 %v433, 4294901760
    %v435 = vsub.f32 %v433, %v434
    %v436 = vand.u32 %v435, 4294901760
    %437 = vmatpush1.xpose.msra.mxu0 %v436
    %438 = vmatprep.subr.mxu0 0.0
    %v439 = vand.u32 %v98, 4294901760
    %v440 = vsub.f32 %v98, %v439
    %v441 = vand.u32 %v440, 4294901760
    %v442 = vsub.f32 %v440, %v441
    %v443 = vand.u32 %v442, 4294901760
    %444 = vmatpush1.xpose.msra.mxu0 %v443
    %445 = vmatprep.subr.mxu0 0.0
    %v446 = vand.u32 %v101, 4294901760
    %v447 = vsub.f32 %v101, %v446
    %v448 = vand.u32 %v447, 4294901760
    %v449 = vsub.f32 %v447, %v448
    %v450 = vand.u32 %v449, 4294901760
    %451 = vmatpush1.xpose.msra.mxu0 %v450
    %452 = vmatprep.subr.mxu0 0.0
    %v453 = vand.u32 %v104, 4294901760
    %v454 = vsub.f32 %v104, %v453
    %v455 = vand.u32 %v454, 4294901760
    %v456 = vsub.f32 %v454, %v455
    %v457 = vand.u32 %v456, 4294901760
    %458 = vmatpush1.xpose.msra.mxu0 %v457
    %459 = vmatprep.subr.mxu0 0.0
    %460 = vmatpush1.xpose.msra.mxu0 0.0
    %461 = vmatprep.subr.mxu0 0.0
    %462 = vmatpush1.xpose.msra.mxu0 0.0
    %463 = vmatprep.subr.mxu0 0.0
    %464 = vmatpush1.xpose.msra.mxu0 0.0
    %465 = vmatprep.subr.mxu0 0.0
    %466 = vmatpush1.xpose.msra.mxu0 0.0
    %467 = vmatprep.subr.mxu0 0.0
    %468 = vmatpush1.xpose.msra.mxu0 0.0
    %469 = vmatprep.subr.mxu0 0.0
    %470 = vmatpush1.xpose.msra.mxu0 0.0
    %471 = vmatprep.subr.mxu0 0.0
    %472 = vmatpush1.xpose.msra.mxu0 0.0
    %473 = vmatprep.subr.mxu0 0.0
    %474 = vmatpush1.xpose.msra.mxu0 0.0
    %475 = vmatprep.subr.mxu0 0.0
    %476 = vmatpush1.xpose.msra.mxu0 0.0
    %477 = vmatprep.subr.mxu0 0.0
    %478 = vmatpush1.xpose.msra.mxu0 0.0
    %479 = vmatprep.subr.mxu0 0.0
    %480 = vmatpush1.xpose.msra.mxu0 0.0
    %481 = vmatprep.subr.mxu0 0.0
    %482 = vmatpush1.xpose.msra.mxu0 0.0
    %483 = vmatprep.subr.mxu0 0.0
    %484 = vmatpush1.xpose.msra.mxu0 0.0
    %485 = vmatprep.subr.mxu0 0.0
    %486 = vmatpush1.xpose.msra.mxu0 0.0
    %487 = vmatprep.subr.mxu0 0.0
    %488 = vmatpush1.xpose.msra.mxu0 0.0
    %489 = vmatprep.subr.mxu0 0.0
    %490 = vmatpush1.xpose.msra.mxu0 0.0
    %491 = vmatprep.mubr.f32.mxu0 0.0
    %v492 = vand.u32 %v59, 4294901760
    %493 = vmatmul.mubr.f32.gmra.mrb[0].mxu0 %v492
    %v494 = vpop.f32.mrb[0].mxu0
    %v495 = vadd.f32 %v194, %v494
    %v496 = vpop.f32.mrb[0].mxu0
    %497 = vmatprep.mubr.f32.mxu0 0.0
    %v498 = vand.u32 %v62, 4294901760
    %499 = vmatmul.mubr.f32.gmra.mrb[0].mxu0 %v498
    %v500 = vpop.f32.mrb[0].mxu0
    %v501 = vadd.f32 %v204, %v500
    %v502 = vpop.f32.mrb[0].mxu0
    %503 = vmatprep.mubr.f32.mxu0 0.0
    %v504 = vand.u32 %v65, 4294901760
    %505 = vmatmul.mubr.f32.gmra.mrb[0].mxu0 %v504
    %v506 = vpop.f32.mrb[0].mxu0
    %v507 = vadd.f32 %v214, %v506
    %v508 = vpop.f32.mrb[0].mxu0
    %509 = vmatprep.mubr.f32.mxu0 0.0
    %v510 = vand.u32 %v68, 4294901760
    %511 = vmatmul.mubr.f32.gmra.mrb[0].mxu0 %v510
    %v512 = vpop.f32.mrb[0].mxu0
    %v513 = vadd.f32 %v224, %v512
    %v514 = vpop.f32.mrb[0].mxu0
    %515 = vmatprep.mubr.f32.mxu0 0.0
    %v516 = vand.u32 %v71, 4294901760
    %517 = vmatmul.mubr.f32.gmra.mrb[0].mxu0 %v516
    %v518 = vpop.f32.mrb[0].mxu0
    %v519 = vadd.f32 %v234, %v518
    %v520 = vpop.f32.mrb[0].mxu0
    %521 = vmatprep.mubr.f32.mxu0 0.0
    %v522 = vand.u32 %v74, 4294901760
    %523 = vmatmul.mubr.f32.gmra.mrb[0].mxu0 %v522
    %v524 = vpop.f32.mrb[0].mxu0
    %v525 = vadd.f32 %v244, %v524
    %v526 = vpop.f32.mrb[0].mxu0
    %527 = vmatprep.mubr.f32.mxu0 0.0
    %v528 = vand.u32 %v77, 4294901760
    %529 = vmatmul.mubr.f32.gmra.mrb[0].mxu0 %v528
    %v530 = vpop.f32.mrb[0].mxu0
    %v531 = vadd.f32 %v254, %v530
    %v532 = vpop.f32.mrb[0].mxu0
    %533 = vmatprep.mubr.f32.mxu0 0.0
    %v534 = vand.u32 %v80, 4294901760
    %535 = vmatmul.mubr.f32.gmra.mrb[0].mxu0 %v534
    %v536 = vpop.f32.mrb[0].mxu0
    %v537 = vadd.f32 %v264, %v536
    %v538 = vpop.f32.mrb[0].mxu0
    %539 = vmatprep.mubr.f32.mxu0 0.0
    %v540 = vand.u32 %v83, 4294901760
    %541 = vmatmul.mubr.f32.gmra.mrb[0].mxu0 %v540
    %v542 = vpop.f32.mrb[0].mxu0
    %v543 = vadd.f32 %v274, %v542
    %v544 = vpop.f32.mrb[0].mxu0
    %545 = vmatprep.mubr.f32.mxu0 0.0
    %v546 = vand.u32 %v86, 4294901760
    %547 = vmatmul.mubr.f32.gmra.mrb[0].mxu0 %v546
    %v548 = vpop.f32.mrb[0].mxu0
    %v549 = vadd.f32 %v284, %v548
    %v550 = vpop.f32.mrb[0].mxu0
    %551 = vmatprep.mubr.f32.mxu0 0.0
    %v552 = vand.u32 %v89, 4294901760
    %553 = vmatmul.mubr.f32.gmra.mrb[0].mxu0 %v552
    %v554 = vpop.f32.mrb[0].mxu0
    %v555 = vadd.f32 %v294, %v554
    %v556 = vpop.f32.mrb[0].mxu0
    %557 = vmatprep.mubr.f32.mxu0 0.0
    %v558 = vand.u32 %v92, 4294901760
    %559 = vmatmul.mubr.f32.gmra.mrb[0].mxu0 %v558
    %v560 = vpop.f32.mrb[0].mxu0
    %v561 = vadd.f32 %v304, %v560
    %v562 = vpop.f32.mrb[0].mxu0
    %563 = vmatprep.mubr.f32.mxu0 0.0
    %v564 = vand.u32 %v95, 4294901760
    %565 = vmatmul.mubr.f32.gmra.mrb[0].mxu0 %v564
    %v566 = vpop.f32.mrb[0].mxu0
    %v567 = vadd.f32 %v314, %v566
    %v568 = vpop.f32.mrb[0].mxu0
    %569 = vmatprep.mubr.f32.mxu0 0.0
    %v570 = vand.u32 %v98, 4294901760
    %571 = vmatmul.mubr.f32.gmra.mrb[0].mxu0 %v570
    %v572 = vpop.f32.mrb[0].mxu0
    %v573 = vadd.f32 %v324, %v572
    %v574 = vpop.f32.mrb[0].mxu0
    %575 = vmatprep.mubr.f32.mxu0 0.0
    %v576 = vand.u32 %v101, 4294901760
    %577 = vmatmul.mubr.f32.gmra.mrb[0].mxu0 %v576
    %v578 = vpop.f32.mrb[0].mxu0
    %v579 = vadd.f32 %v334, %v578
    %v580 = vpop.f32.mrb[0].mxu0
    %581 = vmatprep.mubr.f32.mxu0 0.0
    %v582 = vand.u32 %v104, 4294901760
    %583 = vmatmul.mubr.f32.gmra.mrb[0].mxu0 %v582
    %v584 = vpop.f32.mrb[0].mxu0
    %v585 = vadd.f32 %v344, %v584
    %v586 = vpop.f32.mrb[0].mxu0
    %587 = vdwg.mxu0
    %588 = vmatprep.subr.mxu0 0.0
    %v589 = vand.u32 %v59, 4294901760
    %v590 = vsub.f32 %v59, %v589
    %591 = vmatpush1.xpose.msra.mxu0 %v590
    %592 = vmatprep.subr.mxu0 0.0
    %v593 = vand.u32 %v62, 4294901760
    %v594 = vsub.f32 %v62, %v593
    %595 = vmatpush1.xpose.msra.mxu0 %v594
    %596 = vmatprep.subr.mxu0 0.0
    %v597 = vand.u32 %v65, 4294901760
    %v598 = vsub.f32 %v65, %v597
    %599 = vmatpush1.xpose.msra.mxu0 %v598
    %600 = vmatprep.subr.mxu0 0.0
    %v601 = vand.u32 %v68, 4294901760
    %v602 = vsub.f32 %v68, %v601
    %603 = vmatpush1.xpose.msra.mxu0 %v602
    %604 = vmatprep.subr.mxu0 0.0
    %v605 = vand.u32 %v71, 4294901760
    %v606 = vsub.f32 %v71, %v605
    %607 = vmatpush1.xpose.msra.mxu0 %v606
    %608 = vmatprep.subr.mxu0 0.0
    %v609 = vand.u32 %v74, 4294901760
    %v610 = vsub.f32 %v74, %v609
    %611 = vmatpush1.xpose.msra.mxu0 %v610
    %612 = vmatprep.subr.mxu0 0.0
    %v613 = vand.u32 %v77, 4294901760
    %v614 = vsub.f32 %v77, %v613
    %615 = vmatpush1.xpose.msra.mxu0 %v614
    %616 = vmatprep.subr.mxu0 0.0
    %v617 = vand.u32 %v80, 4294901760
    %v618 = vsub.f32 %v80, %v617
    %619 = vmatpush1.xpose.msra.mxu0 %v618
    %620 = vmatprep.subr.mxu0 0.0
    %v621 = vand.u32 %v83, 4294901760
    %v622 = vsub.f32 %v83, %v621
    %623 = vmatpush1.xpose.msra.mxu0 %v622
    %624 = vmatprep.subr.mxu0 0.0
    %v625 = vand.u32 %v86, 4294901760
    %v626 = vsub.f32 %v86, %v625
    %627 = vmatpush1.xpose.msra.mxu0 %v626
    %628 = vmatprep.subr.mxu0 0.0
    %v629 = vand.u32 %v89, 4294901760
    %v630 = vsub.f32 %v89, %v629
    %631 = vmatpush1.xpose.msra.mxu0 %v630
    %632 = vmatprep.subr.mxu0 0.0
    %v633 = vand.u32 %v92, 4294901760
    %v634 = vsub.f32 %v92, %v633
    %635 = vmatpush1.xpose.msra.mxu0 %v634
    %636 = vmatprep.subr.mxu0 0.0
    %v637 = vand.u32 %v95, 4294901760
    %v638 = vsub.f32 %v95, %v637
    %639 = vmatpush1.xpose.msra.mxu0 %v638
    %640 = vmatprep.subr.mxu0 0.0
    %v641 = vand.u32 %v98, 4294901760
    %v642 = vsub.f32 %v98, %v641
    %643 = vmatpush1.xpose.msra.mxu0 %v642
    %644 = vmatprep.subr.mxu0 0.0
    %v645 = vand.u32 %v101, 4294901760
    %v646 = vsub.f32 %v101, %v645
    %647 = vmatpush1.xpose.msra.mxu0 %v646
    %648 = vmatprep.subr.mxu0 0.0
    %v649 = vand.u32 %v104, 4294901760
    %v650 = vsub.f32 %v104, %v649
    %651 = vmatpush1.xpose.msra.mxu0 %v650
    %652 = vmatprep.subr.mxu0 0.0
    %653 = vmatpush1.xpose.msra.mxu0 0.0
    %654 = vmatprep.subr.mxu0 0.0
    %655 = vmatpush1.xpose.msra.mxu0 0.0
    %656 = vmatprep.subr.mxu0 0.0
    %657 = vmatpush1.xpose.msra.mxu0 0.0
    %658 = vmatprep.subr.mxu0 0.0
    %659 = vmatpush1.xpose.msra.mxu0 0.0
    %660 = vmatprep.subr.mxu0 0.0
    %661 = vmatpush1.xpose.msra.mxu0 0.0
    %662 = vmatprep.subr.mxu0 0.0
    %663 = vmatpush1.xpose.msra.mxu0 0.0
    %664 = vmatprep.subr.mxu0 0.0
    %665 = vmatpush1.xpose.msra.mxu0 0.0
    %666 = vmatprep.subr.mxu0 0.0
    %667 = vmatpush1.xpose.msra.mxu0 0.0
    %668 = vmatprep.subr.mxu0 0.0
    %669 = vmatpush1.xpose.msra.mxu0 0.0
    %670 = vmatprep.subr.mxu0 0.0
    %671 = vmatpush1.xpose.msra.mxu0 0.0
    %672 = vmatprep.subr.mxu0 0.0
    %673 = vmatpush1.xpose.msra.mxu0 0.0
    %674 = vmatprep.subr.mxu0 0.0
    %675 = vmatpush1.xpose.msra.mxu0 0.0
    %676 = vmatprep.subr.mxu0 0.0
    %677 = vmatpush1.xpose.msra.mxu0 0.0
    %678 = vmatprep.subr.mxu0 0.0
    %679 = vmatpush1.xpose.msra.mxu0 0.0
    %680 = vmatprep.subr.mxu0 0.0
    %681 = vmatpush1.xpose.msra.mxu0 0.0
    %682 = vmatprep.subr.mxu0 0.0
    %683 = vmatpush1.xpose.msra.mxu0 0.0
    %684 = vmatprep.mubr.f32.mxu0 0.0
    %v685 = vand.u32 %v59, 4294901760
    %v686 = vsub.f32 %v59, %v685
    %687 = vmatmul.mubr.f32.gmra.mrb[0].mxu0 %v686
    %v688 = vpop.f32.mrb[0].mxu0
    %v689 = vadd.f32 %v495, %v688
    %v690 = vpop.f32.mrb[0].mxu0
    %691 = vmatprep.mubr.f32.mxu0 0.0
    %v692 = vand.u32 %v62, 4294901760
    %v693 = vsub.f32 %v62, %v692
    %694 = vmatmul.mubr.f32.gmra.mrb[0].mxu0 %v693
    %v695 = vpop.f32.mrb[0].mxu0
    %v696 = vadd.f32 %v501, %v695
    %v697 = vpop.f32.mrb[0].mxu0
    %698 = vmatprep.mubr.f32.mxu0 0.0
    %v699 = vand.u32 %v65, 4294901760
    %v700 = vsub.f32 %v65, %v699
    %701 = vmatmul.mubr.f32.gmra.mrb[0].mxu0 %v700
    %v702 = vpop.f32.mrb[0].mxu0
    %v703 = vadd.f32 %v507, %v702
    %v704 = vpop.f32.mrb[0].mxu0
    %705 = vmatprep.mubr.f32.mxu0 0.0
    %v706 = vand.u32 %v68, 4294901760
    %v707 = vsub.f32 %v68, %v706
    %708 = vmatmul.mubr.f32.gmra.mrb[0].mxu0 %v707
    %v709 = vpop.f32.mrb[0].mxu0
    %v710 = vadd.f32 %v513, %v709
    %v711 = vpop.f32.mrb[0].mxu0
    %712 = vmatprep.mubr.f32.mxu0 0.0
    %v713 = vand.u32 %v71, 4294901760
    %v714 = vsub.f32 %v71, %v713
    %715 = vmatmul.mubr.f32.gmra.mrb[0].mxu0 %v714
    %v716 = vpop.f32.mrb[0].mxu0
    %v717 = vadd.f32 %v519, %v716
    %v718 = vpop.f32.mrb[0].mxu0
    %719 = vmatprep.mubr.f32.mxu0 0.0
    %v720 = vand.u32 %v74, 4294901760
    %v721 = vsub.f32 %v74, %v720
    %722 = vmatmul.mubr.f32.gmra.mrb[0].mxu0 %v721
    %v723 = vpop.f32.mrb[0].mxu0
    %v724 = vadd.f32 %v525, %v723
    %v725 = vpop.f32.mrb[0].mxu0
    %726 = vmatprep.mubr.f32.mxu0 0.0
    %v727 = vand.u32 %v77, 4294901760
    %v728 = vsub.f32 %v77, %v727
    %729 = vmatmul.mubr.f32.gmra.mrb[0].mxu0 %v728
    %v730 = vpop.f32.mrb[0].mxu0
    %v731 = vadd.f32 %v531, %v730
    %v732 = vpop.f32.mrb[0].mxu0
    %733 = vmatprep.mubr.f32.mxu0 0.0
    %v734 = vand.u32 %v80, 4294901760
    %v735 = vsub.f32 %v80, %v734
    %736 = vmatmul.mubr.f32.gmra.mrb[0].mxu0 %v735
    %v737 = vpop.f32.mrb[0].mxu0
    %v738 = vadd.f32 %v537, %v737
    %v739 = vpop.f32.mrb[0].mxu0
    %740 = vmatprep.mubr.f32.mxu0 0.0
    %v741 = vand.u32 %v83, 4294901760
    %v742 = vsub.f32 %v83, %v741
    %743 = vmatmul.mubr.f32.gmra.mrb[0].mxu0 %v742
    %v744 = vpop.f32.mrb[0].mxu0
    %v745 = vadd.f32 %v543, %v744
    %v746 = vpop.f32.mrb[0].mxu0
    %747 = vmatprep.mubr.f32.mxu0 0.0
    %v748 = vand.u32 %v86, 4294901760
    %v749 = vsub.f32 %v86, %v748
    %750 = vmatmul.mubr.f32.gmra.mrb[0].mxu0 %v749
    %v751 = vpop.f32.mrb[0].mxu0
    %v752 = vadd.f32 %v549, %v751
    %v753 = vpop.f32.mrb[0].mxu0
    %754 = vmatprep.mubr.f32.mxu0 0.0
    %v755 = vand.u32 %v89, 4294901760
    %v756 = vsub.f32 %v89, %v755
    %757 = vmatmul.mubr.f32.gmra.mrb[0].mxu0 %v756
    %v758 = vpop.f32.mrb[0].mxu0
    %v759 = vadd.f32 %v555, %v758
    %v760 = vpop.f32.mrb[0].mxu0
    %761 = vmatprep.mubr.f32.mxu0 0.0
    %v762 = vand.u32 %v92, 4294901760
    %v763 = vsub.f32 %v92, %v762
    %764 = vmatmul.mubr.f32.gmra.mrb[0].mxu0 %v763
    %v765 = vpop.f32.mrb[0].mxu0
    %v766 = vadd.f32 %v561, %v765
    %v767 = vpop.f32.mrb[0].mxu0
    %768 = vmatprep.mubr.f32.mxu0 0.0
    %v769 = vand.u32 %v95, 4294901760
    %v770 = vsub.f32 %v95, %v769
    %771 = vmatmul.mubr.f32.gmra.mrb[0].mxu0 %v770
    %v772 = vpop.f32.mrb[0].mxu0
    %v773 = vadd.f32 %v567, %v772
    %v774 = vpop.f32.mrb[0].mxu0
    %775 = vmatprep.mubr.f32.mxu0 0.0
    %v776 = vand.u32 %v98, 4294901760
    %v777 = vsub.f32 %v98, %v776
    %778 = vmatmul.mubr.f32.gmra.mrb[0].mxu0 %v777
    %v779 = vpop.f32.mrb[0].mxu0
    %v780 = vadd.f32 %v573, %v779
    %v781 = vpop.f32.mrb[0].mxu0
    %782 = vmatprep.mubr.f32.mxu0 0.0
    %v783 = vand.u32 %v101, 4294901760
    %v784 = vsub.f32 %v101, %v783
    %785 = vmatmul.mubr.f32.gmra.mrb[0].mxu0 %v784
    %v786 = vpop.f32.mrb[0].mxu0
    %v787 = vadd.f32 %v579, %v786
    %v788 = vpop.f32.mrb[0].mxu0
    %789 = vmatprep.mubr.f32.mxu0 0.0
    %v790 = vand.u32 %v104, 4294901760
    %v791 = vsub.f32 %v104, %v790
    %792 = vmatmul.mubr.f32.gmra.mrb[0].mxu0 %v791
    %v793 = vpop.f32.mrb[0].mxu0
    %v794 = vadd.f32 %v585, %v793
    %v795 = vpop.f32.mrb[0].mxu0
    %796 = vdwg.mxu0
    %797 = vmatprep.subr.mxu0 0.0
    %v798 = vand.u32 %v59, 4294901760
    %799 = vmatpush1.xpose.msra.mxu0 %v798
    %800 = vmatprep.subr.mxu0 0.0
    %v801 = vand.u32 %v62, 4294901760
    %802 = vmatpush1.xpose.msra.mxu0 %v801
    %803 = vmatprep.subr.mxu0 0.0
    %v804 = vand.u32 %v65, 4294901760
    %805 = vmatpush1.xpose.msra.mxu0 %v804
    %806 = vmatprep.subr.mxu0 0.0
    %v807 = vand.u32 %v68, 4294901760
    %808 = vmatpush1.xpose.msra.mxu0 %v807
    %809 = vmatprep.subr.mxu0 0.0
    %v810 = vand.u32 %v71, 4294901760
    %811 = vmatpush1.xpose.msra.mxu0 %v810
    %812 = vmatprep.subr.mxu0 0.0
    %v813 = vand.u32 %v74, 4294901760
    %814 = vmatpush1.xpose.msra.mxu0 %v813
    %815 = vmatprep.subr.mxu0 0.0
    %v816 = vand.u32 %v77, 4294901760
    %817 = vmatpush1.xpose.msra.mxu0 %v816
    %818 = vmatprep.subr.mxu0 0.0
    %v819 = vand.u32 %v80, 4294901760
    %820 = vmatpush1.xpose.msra.mxu0 %v819
    %821 = vmatprep.subr.mxu0 0.0
    %v822 = vand.u32 %v83, 4294901760
    %823 = vmatpush1.xpose.msra.mxu0 %v822
    %824 = vmatprep.subr.mxu0 0.0
    %v825 = vand.u32 %v86, 4294901760
    %826 = vmatpush1.xpose.msra.mxu0 %v825
    %827 = vmatprep.subr.mxu0 0.0
    %v828 = vand.u32 %v89, 4294901760
    %829 = vmatpush1.xpose.msra.mxu0 %v828
    %830 = vmatprep.subr.mxu0 0.0
    %v831 = vand.u32 %v92, 4294901760
    %832 = vmatpush1.xpose.msra.mxu0 %v831
    %833 = vmatprep.subr.mxu0 0.0
    %v834 = vand.u32 %v95, 4294901760
    %835 = vmatpush1.xpose.msra.mxu0 %v834
    %836 = vmatprep.subr.mxu0 0.0
    %v837 = vand.u32 %v98, 4294901760
    %838 = vmatpush1.xpose.msra.mxu0 %v837
    %839 = vmatprep.subr.mxu0 0.0
    %v840 = vand.u32 %v101, 4294901760
    %841 = vmatpush1.xpose.msra.mxu0 %v840
    %842 = vmatprep.subr.mxu0 0.0
    %v843 = vand.u32 %v104, 4294901760
    %844 = vmatpush1.xpose.msra.mxu0 %v843
    %845 = vmatprep.subr.mxu0 0.0
    %846 = vmatpush1.xpose.msra.mxu0 0.0
    %847 = vmatprep.subr.mxu0 0.0
    %848 = vmatpush1.xpose.msra.mxu0 0.0
    %849 = vmatprep.subr.mxu0 0.0
    %850 = vmatpush1.xpose.msra.mxu0 0.0
    %851 = vmatprep.subr.mxu0 0.0
    %852 = vmatpush1.xpose.msra.mxu0 0.0
    %853 = vmatprep.subr.mxu0 0.0
    %854 = vmatpush1.xpose.msra.mxu0 0.0
    %855 = vmatprep.subr.mxu0 0.0
    %856 = vmatpush1.xpose.msra.mxu0 0.0
    %857 = vmatprep.subr.mxu0 0.0
    %858 = vmatpush1.xpose.msra.mxu0 0.0
    %859 = vmatprep.subr.mxu0 0.0
    %860 = vmatpush1.xpose.msra.mxu0 0.0
    %861 = vmatprep.subr.mxu0 0.0
    %862 = vmatpush1.xpose.msra.mxu0 0.0
    %863 = vmatprep.subr.mxu0 0.0
    %864 = vmatpush1.xpose.msra.mxu0 0.0
    %865 = vmatprep.subr.mxu0 0.0
    %866 = vmatpush1.xpose.msra.mxu0 0.0
    %867 = vmatprep.subr.mxu0 0.0
    %868 = vmatpush1.xpose.msra.mxu0 0.0
    %869 = vmatprep.subr.mxu0 0.0
    %870 = vmatpush1.xpose.msra.mxu0 0.0
    %871 = vmatprep.subr.mxu0 0.0
    %872 = vmatpush1.xpose.msra.mxu0 0.0
    %873 = vmatprep.subr.mxu0 0.0
    %874 = vmatpush1.xpose.msra.mxu0 0.0
    %875 = vmatprep.subr.mxu0 0.0
    %876 = vmatpush1.xpose.msra.mxu0 0.0
    %877 = vmatprep.mubr.f32.mxu0 0.0
    %v878 = vand.u32 %v59, 4294901760
    %v879 = vsub.f32 %v59, %v878
    %v880 = vand.u32 %v879, 4294901760
    %881 = vmatmul.mubr.f32.gmra.mrb[0].mxu0 %v880
    %v882 = vpop.f32.mrb[0].mxu0
    %v883 = vadd.f32 %v689, %v882
    %v884 = vpop.f32.mrb[0].mxu0
    %885 = vmatprep.mubr.f32.mxu0 0.0
    %v886 = vand.u32 %v62, 4294901760
    %v887 = vsub.f32 %v62, %v886
    %v888 = vand.u32 %v887, 4294901760
    %889 = vmatmul.mubr.f32.gmra.mrb[0].mxu0 %v888
    %v890 = vpop.f32.mrb[0].mxu0
    %v891 = vadd.f32 %v696, %v890
    %v892 = vpop.f32.mrb[0].mxu0
    %893 = vmatprep.mubr.f32.mxu0 0.0
    %v894 = vand.u32 %v65, 4294901760
    %v895 = vsub.f32 %v65, %v894
    %v896 = vand.u32 %v895, 4294901760
    %897 = vmatmul.mubr.f32.gmra.mrb[0].mxu0 %v896
    %v898 = vpop.f32.mrb[0].mxu0
    %v899 = vadd.f32 %v703, %v898
    %v900 = vpop.f32.mrb[0].mxu0
    %901 = vmatprep.mubr.f32.mxu0 0.0
    %v902 = vand.u32 %v68, 4294901760
    %v903 = vsub.f32 %v68, %v902
    %v904 = vand.u32 %v903, 4294901760
    %905 = vmatmul.mubr.f32.gmra.mrb[0].mxu0 %v904
    %v906 = vpop.f32.mrb[0].mxu0
    %v907 = vadd.f32 %v710, %v906
    %v908 = vpop.f32.mrb[0].mxu0
    %909 = vmatprep.mubr.f32.mxu0 0.0
    %v910 = vand.u32 %v71, 4294901760
    %v911 = vsub.f32 %v71, %v910
    %v912 = vand.u32 %v911, 4294901760
    %913 = vmatmul.mubr.f32.gmra.mrb[0].mxu0 %v912
    %v914 = vpop.f32.mrb[0].mxu0
    %v915 = vadd.f32 %v717, %v914
    %v916 = vpop.f32.mrb[0].mxu0
    %917 = vmatprep.mubr.f32.mxu0 0.0
    %v918 = vand.u32 %v74, 4294901760
    %v919 = vsub.f32 %v74, %v918
    %v920 = vand.u32 %v919, 4294901760
    %921 = vmatmul.mubr.f32.gmra.mrb[0].mxu0 %v920
    %v922 = vpop.f32.mrb[0].mxu0
    %v923 = vadd.f32 %v724, %v922
    %v924 = vpop.f32.mrb[0].mxu0
    %925 = vmatprep.mubr.f32.mxu0 0.0
    %v926 = vand.u32 %v77, 4294901760
    %v927 = vsub.f32 %v77, %v926
    %v928 = vand.u32 %v927, 4294901760
    %929 = vmatmul.mubr.f32.gmra.mrb[0].mxu0 %v928
    %v930 = vpop.f32.mrb[0].mxu0
    %v931 = vadd.f32 %v731, %v930
    %v932 = vpop.f32.mrb[0].mxu0
    %933 = vmatprep.mubr.f32.mxu0 0.0
    %v934 = vand.u32 %v80, 4294901760
    %v935 = vsub.f32 %v80, %v934
    %v936 = vand.u32 %v935, 4294901760
    %937 = vmatmul.mubr.f32.gmra.mrb[0].mxu0 %v936
    %v938 = vpop.f32.mrb[0].mxu0
    %v939 = vadd.f32 %v738, %v938
    %v940 = vpop.f32.mrb[0].mxu0
    %941 = vmatprep.mubr.f32.mxu0 0.0
    %v942 = vand.u32 %v83, 4294901760
    %v943 = vsub.f32 %v83, %v942
    %v944 = vand.u32 %v943, 4294901760
    %945 = vmatmul.mubr.f32.gmra.mrb[0].mxu0 %v944
    %v946 = vpop.f32.mrb[0].mxu0
    %v947 = vadd.f32 %v745, %v946
    %v948 = vpop.f32.mrb[0].mxu0
    %949 = vmatprep.mubr.f32.mxu0 0.0
    %v950 = vand.u32 %v86, 4294901760
    %v951 = vsub.f32 %v86, %v950
    %v952 = vand.u32 %v951, 4294901760
    %953 = vmatmul.mubr.f32.gmra.mrb[0].mxu0 %v952
    %v954 = vpop.f32.mrb[0].mxu0
    %v955 = vadd.f32 %v752, %v954
    %v956 = vpop.f32.mrb[0].mxu0
    %957 = vmatprep.mubr.f32.mxu0 0.0
    %v958 = vand.u32 %v89, 4294901760
    %v959 = vsub.f32 %v89, %v958
    %v960 = vand.u32 %v959, 4294901760
    %961 = vmatmul.mubr.f32.gmra.mrb[0].mxu0 %v960
    %v962 = vpop.f32.mrb[0].mxu0
    %v963 = vadd.f32 %v759, %v962
    %v964 = vpop.f32.mrb[0].mxu0
    %965 = vmatprep.mubr.f32.mxu0 0.0
    %v966 = vand.u32 %v92, 4294901760
    %v967 = vsub.f32 %v92, %v966
    %v968 = vand.u32 %v967, 4294901760
    %969 = vmatmul.mubr.f32.gmra.mrb[0].mxu0 %v968
    %v970 = vpop.f32.mrb[0].mxu0
    %v971 = vadd.f32 %v766, %v970
    %v972 = vpop.f32.mrb[0].mxu0
    %973 = vmatprep.mubr.f32.mxu0 0.0
    %v974 = vand.u32 %v95, 4294901760
    %v975 = vsub.f32 %v95, %v974
    %v976 = vand.u32 %v975, 4294901760
    %977 = vmatmul.mubr.f32.gmra.mrb[0].mxu0 %v976
    %v978 = vpop.f32.mrb[0].mxu0
    %v979 = vadd.f32 %v773, %v978
    %v980 = vpop.f32.mrb[0].mxu0
    %981 = vmatprep.mubr.f32.mxu0 0.0
    %v982 = vand.u32 %v98, 4294901760
    %v983 = vsub.f32 %v98, %v982
    %v984 = vand.u32 %v983, 4294901760
    %985 = vmatmul.mubr.f32.gmra.mrb[0].mxu0 %v984
    %v986 = vpop.f32.mrb[0].mxu0
    %v987 = vadd.f32 %v780, %v986
    %v988 = vpop.f32.mrb[0].mxu0
    %989 = vmatprep.mubr.f32.mxu0 0.0
    %v990 = vand.u32 %v101, 4294901760
    %v991 = vsub.f32 %v101, %v990
    %v992 = vand.u32 %v991, 4294901760
    %993 = vmatmul.mubr.f32.gmra.mrb[0].mxu0 %v992
    %v994 = vpop.f32.mrb[0].mxu0
    %v995 = vadd.f32 %v787, %v994
    %v996 = vpop.f32.mrb[0].mxu0
    %997 = vmatprep.mubr.f32.mxu0 0.0
    %v998 = vand.u32 %v104, 4294901760
    %v999 = vsub.f32 %v104, %v998
    %v1000 = vand.u32 %v999, 4294901760
    %1001 = vmatmul.mubr.f32.gmra.mrb[0].mxu0 %v1000
    %v1002 = vpop.f32.mrb[0].mxu0
    %v1003 = vadd.f32 %v794, %v1002
    %v1004 = vpop.f32.mrb[0].mxu0
    %1005 = vdwg.mxu0
    %1006 = vmatprep.subr.mxu0 0.0
    %v1007 = vand.u32 %v59, 4294901760
    %v1008 = vsub.f32 %v59, %v1007
    %v1009 = vand.u32 %v1008, 4294901760
    %1010 = vmatpush1.xpose.msra.mxu0 %v1009
    %1011 = vmatprep.subr.mxu0 0.0
    %v1012 = vand.u32 %v62, 4294901760
    %v1013 = vsub.f32 %v62, %v1012
    %v1014 = vand.u32 %v1013, 4294901760
    %1015 = vmatpush1.xpose.msra.mxu0 %v1014
    %1016 = vmatprep.subr.mxu0 0.0
    %v1017 = vand.u32 %v65, 4294901760
    %v1018 = vsub.f32 %v65, %v1017
    %v1019 = vand.u32 %v1018, 4294901760
    %1020 = vmatpush1.xpose.msra.mxu0 %v1019
    %1021 = vmatprep.subr.mxu0 0.0
    %v1022 = vand.u32 %v68, 4294901760
    %v1023 = vsub.f32 %v68, %v1022
    %v1024 = vand.u32 %v1023, 4294901760
    %1025 = vmatpush1.xpose.msra.mxu0 %v1024
    %1026 = vmatprep.subr.mxu0 0.0
    %v1027 = vand.u32 %v71, 4294901760
    %v1028 = vsub.f32 %v71, %v1027
    %v1029 = vand.u32 %v1028, 4294901760
    %1030 = vmatpush1.xpose.msra.mxu0 %v1029
    %1031 = vmatprep.subr.mxu0 0.0
    %v1032 = vand.u32 %v74, 4294901760
    %v1033 = vsub.f32 %v74, %v1032
    %v1034 = vand.u32 %v1033, 4294901760
    %1035 = vmatpush1.xpose.msra.mxu0 %v1034
    %1036 = vmatprep.subr.mxu0 0.0
    %v1037 = vand.u32 %v77, 4294901760
    %v1038 = vsub.f32 %v77, %v1037
    %v1039 = vand.u32 %v1038, 4294901760
    %1040 = vmatpush1.xpose.msra.mxu0 %v1039
    %1041 = vmatprep.subr.mxu0 0.0
    %v1042 = vand.u32 %v80, 4294901760
    %v1043 = vsub.f32 %v80, %v1042
    %v1044 = vand.u32 %v1043, 4294901760
    %1045 = vmatpush1.xpose.msra.mxu0 %v1044
    %1046 = vmatprep.subr.mxu0 0.0
    %v1047 = vand.u32 %v83, 4294901760
    %v1048 = vsub.f32 %v83, %v1047
    %v1049 = vand.u32 %v1048, 4294901760
    %1050 = vmatpush1.xpose.msra.mxu0 %v1049
    %1051 = vmatprep.subr.mxu0 0.0
    %v1052 = vand.u32 %v86, 4294901760
    %v1053 = vsub.f32 %v86, %v1052
    %v1054 = vand.u32 %v1053, 4294901760
    %1055 = vmatpush1.xpose.msra.mxu0 %v1054
    %1056 = vmatprep.subr.mxu0 0.0
    %v1057 = vand.u32 %v89, 4294901760
    %v1058 = vsub.f32 %v89, %v1057
    %v1059 = vand.u32 %v1058, 4294901760
    %1060 = vmatpush1.xpose.msra.mxu0 %v1059
    %1061 = vmatprep.subr.mxu0 0.0
    %v1062 = vand.u32 %v92, 4294901760
    %v1063 = vsub.f32 %v92, %v1062
    %v1064 = vand.u32 %v1063, 4294901760
    %1065 = vmatpush1.xpose.msra.mxu0 %v1064
    %1066 = vmatprep.subr.mxu0 0.0
    %v1067 = vand.u32 %v95, 4294901760
    %v1068 = vsub.f32 %v95, %v1067
    %v1069 = vand.u32 %v1068, 4294901760
    %1070 = vmatpush1.xpose.msra.mxu0 %v1069
    %1071 = vmatprep.subr.mxu0 0.0
    %v1072 = vand.u32 %v98, 4294901760
    %v1073 = vsub.f32 %v98, %v1072
    %v1074 = vand.u32 %v1073, 4294901760
    %1075 = vmatpush1.xpose.msra.mxu0 %v1074
    %1076 = vmatprep.subr.mxu0 0.0
    %v1077 = vand.u32 %v101, 4294901760
    %v1078 = vsub.f32 %v101, %v1077
    %v1079 = vand.u32 %v1078, 4294901760
    %1080 = vmatpush1.xpose.msra.mxu0 %v1079
    %1081 = vmatprep.subr.mxu0 0.0
    %v1082 = vand.u32 %v104, 4294901760
    %v1083 = vsub.f32 %v104, %v1082
    %v1084 = vand.u32 %v1083, 4294901760
    %1085 = vmatpush1.xpose.msra.mxu0 %v1084
    %1086 = vmatprep.subr.mxu0 0.0
    %1087 = vmatpush1.xpose.msra.mxu0 0.0
    %1088 = vmatprep.subr.mxu0 0.0
    %1089 = vmatpush1.xpose.msra.mxu0 0.0
    %1090 = vmatprep.subr.mxu0 0.0
    %1091 = vmatpush1.xpose.msra.mxu0 0.0
    %1092 = vmatprep.subr.mxu0 0.0
    %1093 = vmatpush1.xpose.msra.mxu0 0.0
    %1094 = vmatprep.subr.mxu0 0.0
    %1095 = vmatpush1.xpose.msra.mxu0 0.0
    %1096 = vmatprep.subr.mxu0 0.0
    %1097 = vmatpush1.xpose.msra.mxu0 0.0
    %1098 = vmatprep.subr.mxu0 0.0
    %1099 = vmatpush1.xpose.msra.mxu0 0.0
    %1100 = vmatprep.subr.mxu0 0.0
    %1101 = vmatpush1.xpose.msra.mxu0 0.0
    %1102 = vmatprep.subr.mxu0 0.0
    %1103 = vmatpush1.xpose.msra.mxu0 0.0
    %1104 = vmatprep.subr.mxu0 0.0
    %1105 = vmatpush1.xpose.msra.mxu0 0.0
    %1106 = vmatprep.subr.mxu0 0.0
    %1107 = vmatpush1.xpose.msra.mxu0 0.0
    %1108 = vmatprep.subr.mxu0 0.0
    %1109 = vmatpush1.xpose.msra.mxu0 0.0
    %1110 = vmatprep.subr.mxu0 0.0
    %1111 = vmatpush1.xpose.msra.mxu0 0.0
    %1112 = vmatprep.subr.mxu0 0.0
    %1113 = vmatpush1.xpose.msra.mxu0 0.0
    %1114 = vmatprep.subr.mxu0 0.0
    %1115 = vmatpush1.xpose.msra.mxu0 0.0
    %1116 = vmatprep.subr.mxu0 0.0
    %1117 = vmatpush1.xpose.msra.mxu0 0.0
    %1118 = vmatprep.mubr.f32.mxu0 0.0
    %v1119 = vand.u32 %v59, 4294901760
    %1120 = vmatmul.mubr.f32.gmra.mrb[0].mxu0 %v1119
    %v1121 = vpop.f32.mrb[0].mxu0
    %v1122 = vadd.f32 %v883, %v1121
    %v1123 = vpop.f32.mrb[0].mxu0
    %1124 = vmatprep.mubr.f32.mxu0 0.0
    %v1125 = vand.u32 %v62, 4294901760
    %1126 = vmatmul.mubr.f32.gmra.mrb[0].mxu0 %v1125
    %v1127 = vpop.f32.mrb[0].mxu0
    %v1128 = vadd.f32 %v891, %v1127
    %v1129 = vpop.f32.mrb[0].mxu0
    %1130 = vmatprep.mubr.f32.mxu0 0.0
    %v1131 = vand.u32 %v65, 4294901760
    %1132 = vmatmul.mubr.f32.gmra.mrb[0].mxu0 %v1131
    %v1133 = vpop.f32.mrb[0].mxu0
    %v1134 = vadd.f32 %v899, %v1133
    %v1135 = vpop.f32.mrb[0].mxu0
    %1136 = vmatprep.mubr.f32.mxu0 0.0
    %v1137 = vand.u32 %v68, 4294901760
    %1138 = vmatmul.mubr.f32.gmra.mrb[0].mxu0 %v1137
    %v1139 = vpop.f32.mrb[0].mxu0
    %v1140 = vadd.f32 %v907, %v1139
    %v1141 = vpop.f32.mrb[0].mxu0
    %1142 = vmatprep.mubr.f32.mxu0 0.0
    %v1143 = vand.u32 %v71, 4294901760
    %1144 = vmatmul.mubr.f32.gmra.mrb[0].mxu0 %v1143
    %v1145 = vpop.f32.mrb[0].mxu0
    %v1146 = vadd.f32 %v915, %v1145
    %v1147 = vpop.f32.mrb[0].mxu0
    %1148 = vmatprep.mubr.f32.mxu0 0.0
    %v1149 = vand.u32 %v74, 4294901760
    %1150 = vmatmul.mubr.f32.gmra.mrb[0].mxu0 %v1149
    %v1151 = vpop.f32.mrb[0].mxu0
    %v1152 = vadd.f32 %v923, %v1151
    %v1153 = vpop.f32.mrb[0].mxu0
    %1154 = vmatprep.mubr.f32.mxu0 0.0
    %v1155 = vand.u32 %v77, 4294901760
    %1156 = vmatmul.mubr.f32.gmra.mrb[0].mxu0 %v1155
    %v1157 = vpop.f32.mrb[0].mxu0
    %v1158 = vadd.f32 %v931, %v1157
    %v1159 = vpop.f32.mrb[0].mxu0
    %1160 = vmatprep.mubr.f32.mxu0 0.0
    %v1161 = vand.u32 %v80, 4294901760
    %1162 = vmatmul.mubr.f32.gmra.mrb[0].mxu0 %v1161
    %v1163 = vpop.f32.mrb[0].mxu0
    %v1164 = vadd.f32 %v939, %v1163
    %v1165 = vpop.f32.mrb[0].mxu0
    %1166 = vmatprep.mubr.f32.mxu0 0.0
    %v1167 = vand.u32 %v83, 4294901760
    %1168 = vmatmul.mubr.f32.gmra.mrb[0].mxu0 %v1167
    %v1169 = vpop.f32.mrb[0].mxu0
    %v1170 = vadd.f32 %v947, %v1169
    %v1171 = vpop.f32.mrb[0].mxu0
    %1172 = vmatprep.mubr.f32.mxu0 0.0
    %v1173 = vand.u32 %v86, 4294901760
    %1174 = vmatmul.mubr.f32.gmra.mrb[0].mxu0 %v1173
    %v1175 = vpop.f32.mrb[0].mxu0
    %v1176 = vadd.f32 %v955, %v1175
    %v1177 = vpop.f32.mrb[0].mxu0
    %1178 = vmatprep.mubr.f32.mxu0 0.0
    %v1179 = vand.u32 %v89, 4294901760
    %1180 = vmatmul.mubr.f32.gmra.mrb[0].mxu0 %v1179
    %v1181 = vpop.f32.mrb[0].mxu0
    %v1182 = vadd.f32 %v963, %v1181
    %v1183 = vpop.f32.mrb[0].mxu0
    %1184 = vmatprep.mubr.f32.mxu0 0.0
    %v1185 = vand.u32 %v92, 4294901760
    %1186 = vmatmul.mubr.f32.gmra.mrb[0].mxu0 %v1185
    %v1187 = vpop.f32.mrb[0].mxu0
    %v1188 = vadd.f32 %v971, %v1187
    %v1189 = vpop.f32.mrb[0].mxu0
    %1190 = vmatprep.mubr.f32.mxu0 0.0
    %v1191 = vand.u32 %v95, 4294901760
    %1192 = vmatmul.mubr.f32.gmra.mrb[0].mxu0 %v1191
    %v1193 = vpop.f32.mrb[0].mxu0
    %v1194 = vadd.f32 %v979, %v1193
    %v1195 = vpop.f32.mrb[0].mxu0
    %1196 = vmatprep.mubr.f32.mxu0 0.0
    %v1197 = vand.u32 %v98, 4294901760
    %1198 = vmatmul.mubr.f32.gmra.mrb[0].mxu0 %v1197
    %v1199 = vpop.f32.mrb[0].mxu0
    %v1200 = vadd.f32 %v987, %v1199
    %v1201 = vpop.f32.mrb[0].mxu0
    %1202 = vmatprep.mubr.f32.mxu0 0.0
    %v1203 = vand.u32 %v101, 4294901760
    %1204 = vmatmul.mubr.f32.gmra.mrb[0].mxu0 %v1203
    %v1205 = vpop.f32.mrb[0].mxu0
    %v1206 = vadd.f32 %v995, %v1205
    %v1207 = vpop.f32.mrb[0].mxu0
    %1208 = vmatprep.mubr.f32.mxu0 0.0
    %v1209 = vand.u32 %v104, 4294901760
    %1210 = vmatmul.mubr.f32.gmra.mrb[0].mxu0 %v1209
    %v1211 = vpop.f32.mrb[0].mxu0
    %v1212 = vadd.f32 %v1003, %v1211
    %v1213 = vpop.f32.mrb[0].mxu0
    %1214 = vdwg.mxu0
    %1215 = vmatprep.subr.mxu0 0.0
    %v1216 = vand.u32 %v59, 4294901760
    %1217 = vmatpush1.xpose.msra.mxu0 %v1216
    %1218 = vmatprep.subr.mxu0 0.0
    %v1219 = vand.u32 %v62, 4294901760
    %1220 = vmatpush1.xpose.msra.mxu0 %v1219
    %1221 = vmatprep.subr.mxu0 0.0
    %v1222 = vand.u32 %v65, 4294901760
    %1223 = vmatpush1.xpose.msra.mxu0 %v1222
    %1224 = vmatprep.subr.mxu0 0.0
    %v1225 = vand.u32 %v68, 4294901760
    %1226 = vmatpush1.xpose.msra.mxu0 %v1225
    %1227 = vmatprep.subr.mxu0 0.0
    %v1228 = vand.u32 %v71, 4294901760
    %1229 = vmatpush1.xpose.msra.mxu0 %v1228
    %1230 = vmatprep.subr.mxu0 0.0
    %v1231 = vand.u32 %v74, 4294901760
    %1232 = vmatpush1.xpose.msra.mxu0 %v1231
    %1233 = vmatprep.subr.mxu0 0.0
    %v1234 = vand.u32 %v77, 4294901760
    %1235 = vmatpush1.xpose.msra.mxu0 %v1234
    %1236 = vmatprep.subr.mxu0 0.0
    %v1237 = vand.u32 %v80, 4294901760
    %1238 = vmatpush1.xpose.msra.mxu0 %v1237
    %1239 = vmatprep.subr.mxu0 0.0
    %v1240 = vand.u32 %v83, 4294901760
    %1241 = vmatpush1.xpose.msra.mxu0 %v1240
    %1242 = vmatprep.subr.mxu0 0.0
    %v1243 = vand.u32 %v86, 4294901760
    %1244 = vmatpush1.xpose.msra.mxu0 %v1243
    %1245 = vmatprep.subr.mxu0 0.0
    %v1246 = vand.u32 %v89, 4294901760
    %1247 = vmatpush1.xpose.msra.mxu0 %v1246
    %1248 = vmatprep.subr.mxu0 0.0
    %v1249 = vand.u32 %v92, 4294901760
    %1250 = vmatpush1.xpose.msra.mxu0 %v1249
    %1251 = vmatprep.subr.mxu0 0.0
    %v1252 = vand.u32 %v95, 4294901760
    %1253 = vmatpush1.xpose.msra.mxu0 %v1252
    %1254 = vmatprep.subr.mxu0 0.0
    %v1255 = vand.u32 %v98, 4294901760
    %1256 = vmatpush1.xpose.msra.mxu0 %v1255
    %1257 = vmatprep.subr.mxu0 0.0
    %v1258 = vand.u32 %v101, 4294901760
    %1259 = vmatpush1.xpose.msra.mxu0 %v1258
    %1260 = vmatprep.subr.mxu0 0.0
    %v1261 = vand.u32 %v104, 4294901760
    %1262 = vmatpush1.xpose.msra.mxu0 %v1261
    %1263 = vmatprep.subr.mxu0 0.0
    %1264 = vmatpush1.xpose.msra.mxu0 0.0
    %1265 = vmatprep.subr.mxu0 0.0
    %1266 = vmatpush1.xpose.msra.mxu0 0.0
    %1267 = vmatprep.subr.mxu0 0.0
    %1268 = vmatpush1.xpose.msra.mxu0 0.0
    %1269 = vmatprep.subr.mxu0 0.0
    %1270 = vmatpush1.xpose.msra.mxu0 0.0
    %1271 = vmatprep.subr.mxu0 0.0
    %1272 = vmatpush1.xpose.msra.mxu0 0.0
    %1273 = vmatprep.subr.mxu0 0.0
    %1274 = vmatpush1.xpose.msra.mxu0 0.0
    %1275 = vmatprep.subr.mxu0 0.0
    %1276 = vmatpush1.xpose.msra.mxu0 0.0
    %1277 = vmatprep.subr.mxu0 0.0
    %1278 = vmatpush1.xpose.msra.mxu0 0.0
    %1279 = vmatprep.subr.mxu0 0.0
    %1280 = vmatpush1.xpose.msra.mxu0 0.0
    %1281 = vmatprep.subr.mxu0 0.0
    %1282 = vmatpush1.xpose.msra.mxu0 0.0
    %1283 = vmatprep.subr.mxu0 0.0
    %1284 = vmatpush1.xpose.msra.mxu0 0.0
    %1285 = vmatprep.subr.mxu0 0.0
    %1286 = vmatpush1.xpose.msra.mxu0 0.0
    %1287 = vmatprep.subr.mxu0 0.0
    %1288 = vmatpush1.xpose.msra.mxu0 0.0
    %1289 = vmatprep.subr.mxu0 0.0
    %1290 = vmatpush1.xpose.msra.mxu0 0.0
    %1291 = vmatprep.subr.mxu0 0.0
    %1292 = vmatpush1.xpose.msra.mxu0 0.0
    %1293 = vmatprep.subr.mxu0 0.0
    %1294 = vmatpush1.xpose.msra.mxu0 0.0
    %1295 = vmatprep.mubr.f32.mxu0 0.0
    %v1296 = vand.u32 %v59, 4294901760
    %1297 = vmatmul.mubr.f32.gmra.mrb[0].mxu0 %v1296
    %v1298 = vpop.f32.mrb[0].mxu0
    %v1299 = vadd.f32 %v1122, %v1298
    %v1300 = vpop.f32.mrb[0].mxu0
    %1301 = vmatprep.mubr.f32.mxu0 0.0
    %v1302 = vand.u32 %v62, 4294901760
    %1303 = vmatmul.mubr.f32.gmra.mrb[0].mxu0 %v1302
    %v1304 = vpop.f32.mrb[0].mxu0
    %v1305 = vadd.f32 %v1128, %v1304
    %v1306 = vpop.f32.mrb[0].mxu0
    %1307 = vmatprep.mubr.f32.mxu0 0.0
    %v1308 = vand.u32 %v65, 4294901760
    %1309 = vmatmul.mubr.f32.gmra.mrb[0].mxu0 %v1308
    %v1310 = vpop.f32.mrb[0].mxu0
    %v1311 = vadd.f32 %v1134, %v1310
    %v1312 = vpop.f32.mrb[0].mxu0
    %1313 = vmatprep.mubr.f32.mxu0 0.0
    %v1314 = vand.u32 %v68, 4294901760
    %1315 = vmatmul.mubr.f32.gmra.mrb[0].mxu0 %v1314
    %v1316 = vpop.f32.mrb[0].mxu0
    %v1317 = vadd.f32 %v1140, %v1316
    %v1318 = vpop.f32.mrb[0].mxu0
    %1319 = vmatprep.mubr.f32.mxu0 0.0
    %v1320 = vand.u32 %v71, 4294901760
    %1321 = vmatmul.mubr.f32.gmra.mrb[0].mxu0 %v1320
    %v1322 = vpop.f32.mrb[0].mxu0
    %v1323 = vadd.f32 %v1146, %v1322
    %v1324 = vpop.f32.mrb[0].mxu0
    %1325 = vmatprep.mubr.f32.mxu0 0.0
    %v1326 = vand.u32 %v74, 4294901760
    %1327 = vmatmul.mubr.f32.gmra.mrb[0].mxu0 %v1326
    %v1328 = vpop.f32.mrb[0].mxu0
    %v1329 = vadd.f32 %v1152, %v1328
    %v1330 = vpop.f32.mrb[0].mxu0
    %1331 = vmatprep.mubr.f32.mxu0 0.0
    %v1332 = vand.u32 %v77, 4294901760
    %1333 = vmatmul.mubr.f32.gmra.mrb[0].mxu0 %v1332
    %v1334 = vpop.f32.mrb[0].mxu0
    %v1335 = vadd.f32 %v1158, %v1334
    %v1336 = vpop.f32.mrb[0].mxu0
    %1337 = vmatprep.mubr.f32.mxu0 0.0
    %v1338 = vand.u32 %v80, 4294901760
    %1339 = vmatmul.mubr.f32.gmra.mrb[0].mxu0 %v1338
    %v1340 = vpop.f32.mrb[0].mxu0
    %v1341 = vadd.f32 %v1164, %v1340
    %v1342 = vpop.f32.mrb[0].mxu0
    %1343 = vmatprep.mubr.f32.mxu0 0.0
    %v1344 = vand.u32 %v83, 4294901760
    %1345 = vmatmul.mubr.f32.gmra.mrb[0].mxu0 %v1344
    %v1346 = vpop.f32.mrb[0].mxu0
    %v1347 = vadd.f32 %v1170, %v1346
    %v1348 = vpop.f32.mrb[0].mxu0
    %1349 = vmatprep.mubr.f32.mxu0 0.0
    %v1350 = vand.u32 %v86, 4294901760
    %1351 = vmatmul.mubr.f32.gmra.mrb[0].mxu0 %v1350
    %v1352 = vpop.f32.mrb[0].mxu0
    %v1353 = vadd.f32 %v1176, %v1352
    %v1354 = vpop.f32.mrb[0].mxu0
    %1355 = vmatprep.mubr.f32.mxu0 0.0
    %v1356 = vand.u32 %v89, 4294901760
    %1357 = vmatmul.mubr.f32.gmra.mrb[0].mxu0 %v1356
    %v1358 = vpop.f32.mrb[0].mxu0
    %v1359 = vadd.f32 %v1182, %v1358
    %v1360 = vpop.f32.mrb[0].mxu0
    %1361 = vmatprep.mubr.f32.mxu0 0.0
    %v1362 = vand.u32 %v92, 4294901760
    %1363 = vmatmul.mubr.f32.gmra.mrb[0].mxu0 %v1362
    %v1364 = vpop.f32.mrb[0].mxu0
    %v1365 = vadd.f32 %v1188, %v1364
    %v1366 = vpop.f32.mrb[0].mxu0
    %1367 = vmatprep.mubr.f32.mxu0 0.0
    %v1368 = vand.u32 %v95, 4294901760
    %1369 = vmatmul.mubr.f32.gmra.mrb[0].mxu0 %v1368
    %v1370 = vpop.f32.mrb[0].mxu0
    %v1371 = vadd.f32 %v1194, %v1370
    %v1372 = vpop.f32.mrb[0].mxu0
    %1373 = vmatprep.mubr.f32.mxu0 0.0
    %v1374 = vand.u32 %v98, 4294901760
    %1375 = vmatmul.mubr.f32.gmra.mrb[0].mxu0 %v1374
    %v1376 = vpop.f32.mrb[0].mxu0
    %v1377 = vadd.f32 %v1200, %v1376
    %v1378 = vpop.f32.mrb[0].mxu0
    %1379 = vmatprep.mubr.f32.mxu0 0.0
    %v1380 = vand.u32 %v101, 4294901760
    %1381 = vmatmul.mubr.f32.gmra.mrb[0].mxu0 %v1380
    %v1382 = vpop.f32.mrb[0].mxu0
    %v1383 = vadd.f32 %v1206, %v1382
    %v1384 = vpop.f32.mrb[0].mxu0
    %1385 = vmatprep.mubr.f32.mxu0 0.0
    %v1386 = vand.u32 %v104, 4294901760
    %1387 = vmatmul.mubr.f32.gmra.mrb[0].mxu0 %v1386
    %v1388 = vpop.f32.mrb[0].mxu0
    %v1389 = vadd.f32 %v1212, %v1388
    %v1390 = vpop.f32.mrb[0].mxu0
    %1391 = vdwg.mxu0
    %v1392 = vmax.f32 %v1299, %v1323
    %v1393 = vmax.f32 %v1305, %v1329
    %v1394 = vmax.f32 %v1311, %v1335
    %v1395 = vmax.f32 %v1317, %v1341
    %v1396 = vmax.f32 %v1392, %v1347
    %v1397 = vmax.f32 %v1393, %v1353
    %v1398 = vmax.f32 %v1394, %v1359
    %v1399 = vmax.f32 %v1395, %v1365
    %v1400 = vmax.f32 %v1396, %v1371
    %v1401 = vmax.f32 %v1397, %v1377
    %v1402 = vmax.f32 %v1398, %v1383
    %v1403 = vmax.f32 %v1399, %v1389
    %v1404 = vmax.f32 %v1400, %v1401
    %v1405 = vmax.f32 %v1402, %v1403
    %v1406 = vmax.f32 %v1404, %v1405
    %v1407 = vrot.slane %v1406, 4
    %v1408 = vmax.f32 %v1406, %v1407
    %v1409 = vrot.slane %v1408, 2
    %v1410 = vmax.f32 %v1408, %v1409
    %v1411 = vrot.slane %v1410, 1
    %v1412 = vmax.f32 %v1410, %v1411
    %v1413 = vsub.f32 %v1299, %v1412
    %v1414 = vsub.f32 %v1305, %v1412
    %v1415 = vsub.f32 %v1311, %v1412
    %v1416 = vsub.f32 %v1317, %v1412
    %v1417 = vsub.f32 %v1323, %v1412
    %v1418 = vsub.f32 %v1329, %v1412
    %v1419 = vsub.f32 %v1335, %v1412
    %v1420 = vsub.f32 %v1341, %v1412
    %v1421 = vsub.f32 %v1347, %v1412
    %v1422 = vsub.f32 %v1353, %v1412
    %v1423 = vsub.f32 %v1359, %v1412
    %v1424 = vsub.f32 %v1365, %v1412
    %v1425 = vsub.f32 %v1371, %v1412
    %v1426 = vsub.f32 %v1377, %v1412
    %v1427 = vsub.f32 %v1383, %v1412
    %v1428 = vsub.f32 %v1389, %v1412
    %v1429 = vmul.f32 %v1413, 1.442695
    %v1430 = vpow.pop %v1429
    %v1431 = vmul.f32 %v1414, 1.442695
    %v1432 = vpow.pop %v1431
    %v1433 = vmul.f32 %v1415, 1.442695
    %v1434 = vpow.pop %v1433
    %v1435 = vmul.f32 %v1416, 1.442695
    %v1436 = vpow.pop %v1435
    %v1437 = vmul.f32 %v1417, 1.442695
    %v1438 = vpow.pop %v1437
    %v1439 = vmul.f32 %v1418, 1.442695
    %v1440 = vpow.pop %v1439
    %v1441 = vmul.f32 %v1419, 1.442695
    %v1442 = vpow.pop %v1441
    %v1443 = vmul.f32 %v1420, 1.442695
    %v1444 = vpow.pop %v1443
    %v1445 = vmul.f32 %v1421, 1.442695
    %v1446 = vpow.pop %v1445
    %v1447 = vmul.f32 %v1422, 1.442695
    %v1448 = vpow.pop %v1447
    %v1449 = vmul.f32 %v1423, 1.442695
    %v1450 = vpow.pop %v1449
    %v1451 = vmul.f32 %v1424, 1.442695
    %v1452 = vpow.pop %v1451
    %v1453 = vmul.f32 %v1425, 1.442695
    %v1454 = vpow.pop %v1453
    %v1455 = vmul.f32 %v1426, 1.442695
    %v1456 = vpow.pop %v1455
    %v1457 = vmul.f32 %v1427, 1.442695
    %v1458 = vpow.pop %v1457
    %v1459 = vmul.f32 %v1428, 1.442695
    %v1460 = vpow.pop %v1459
    %v1461 = vadd.f32 %v1430, %v1432
    %v1462 = vadd.f32 %v1461, %v1434
    %v1463 = vadd.f32 %v1462, %v1436
    %v1464 = vadd.f32 %v1463, %v1438
    %v1465 = vadd.f32 %v1464, %v1440
    %v1466 = vadd.f32 %v1465, %v1442
    %v1467 = vadd.f32 %v1466, %v1444
    %v1468 = vadd.f32 %v1467, %v1446
    %v1469 = vadd.f32 %v1468, %v1448
    %v1470 = vadd.f32 %v1469, %v1450
    %v1471 = vadd.f32 %v1470, %v1452
    %v1472 = vadd.f32 %v1471, %v1454
    %v1473 = vadd.f32 %v1472, %v1456
    %v1474 = vadd.f32 %v1473, %v1458
    %v1475 = vadd.f32 %v1474, %v1460
    %v1476 = vrot.slane %v1475, 4
    %v1477 = vadd.f32 %v1475, %v1476
    %v1478 = vrot.slane %v1477, 2
    %v1479 = vadd.f32 %v1477, %v1478
    %v1480 = vrot.slane %v1479, 1
    %v1481 = vadd.f32 %v1479, %v1480
    %v1482 = vrcp.pop %v1481
    %v1483 = vmul.f32 %v1430, %v1482
    %v1484 = vmul.f32 %v1432, %v1482
    %v1485 = vmul.f32 %v1434, %v1482
    %v1486 = vmul.f32 %v1436, %v1482
    %v1487 = vmul.f32 %v1438, %v1482
    %v1488 = vmul.f32 %v1440, %v1482
    %v1489 = vmul.f32 %v1442, %v1482
    %v1490 = vmul.f32 %v1444, %v1482
    %v1491 = vmul.f32 %v1446, %v1482
    %v1492 = vmul.f32 %v1448, %v1482
    %v1493 = vmul.f32 %v1450, %v1482
    %v1494 = vmul.f32 %v1452, %v1482
    %v1495 = vmul.f32 %v1454, %v1482
    %v1496 = vmul.f32 %v1456, %v1482
    %v1497 = vmul.f32 %v1458, %v1482
    %v1498 = vmul.f32 %v1460, %v1482
    %1499 = vmatprep.subr.mxu0 0.0
    %v1500 = vand.u32 %v41, 4294901760
    %1501 = vmatpush1.msra.mxu0 %v1500
    %1502 = vmatprep.subr.mxu0 0.0
    %v1503 = vand.u32 %v42, 4294901760
    %1504 = vmatpush1.msra.mxu0 %v1503
    %1505 = vmatprep.subr.mxu0 0.0
    %v1506 = vand.u32 %v43, 4294901760
    %1507 = vmatpush1.msra.mxu0 %v1506
    %1508 = vmatprep.subr.mxu0 0.0
    %v1509 = vand.u32 %v44, 4294901760
    %1510 = vmatpush1.msra.mxu0 %v1509
    %1511 = vmatprep.subr.mxu0 0.0
    %v1512 = vand.u32 %v45, 4294901760
    %1513 = vmatpush1.msra.mxu0 %v1512
    %1514 = vmatprep.subr.mxu0 0.0
    %v1515 = vand.u32 %v46, 4294901760
    %1516 = vmatpush1.msra.mxu0 %v1515
    %1517 = vmatprep.subr.mxu0 0.0
    %v1518 = vand.u32 %v47, 4294901760
    %1519 = vmatpush1.msra.mxu0 %v1518
    %1520 = vmatprep.subr.mxu0 0.0
    %v1521 = vand.u32 %v48, 4294901760
    %1522 = vmatpush1.msra.mxu0 %v1521
    %1523 = vmatprep.subr.mxu0 0.0
    %v1524 = vand.u32 %v49, 4294901760
    %1525 = vmatpush1.msra.mxu0 %v1524
    %1526 = vmatprep.subr.mxu0 0.0
    %v1527 = vand.u32 %v50, 4294901760
    %1528 = vmatpush1.msra.mxu0 %v1527
    %1529 = vmatprep.subr.mxu0 0.0
    %v1530 = vand.u32 %v51, 4294901760
    %1531 = vmatpush1.msra.mxu0 %v1530
    %1532 = vmatprep.subr.mxu0 0.0
    %v1533 = vand.u32 %v52, 4294901760
    %1534 = vmatpush1.msra.mxu0 %v1533
    %1535 = vmatprep.subr.mxu0 0.0
    %v1536 = vand.u32 %v53, 4294901760
    %1537 = vmatpush1.msra.mxu0 %v1536
    %1538 = vmatprep.subr.mxu0 0.0
    %v1539 = vand.u32 %v54, 4294901760
    %1540 = vmatpush1.msra.mxu0 %v1539
    %1541 = vmatprep.subr.mxu0 0.0
    %v1542 = vand.u32 %v55, 4294901760
    %1543 = vmatpush1.msra.mxu0 %v1542
    %1544 = vmatprep.subr.mxu0 0.0
    %v1545 = vand.u32 %v56, 4294901760
    %1546 = vmatpush1.msra.mxu0 %v1545
    %1547 = vmatprep.subr.mxu0 0.0
    %1548 = vmatpush1.msra.mxu0 0.0
    %1549 = vmatprep.subr.mxu0 0.0
    %1550 = vmatpush1.msra.mxu0 0.0
    %1551 = vmatprep.subr.mxu0 0.0
    %1552 = vmatpush1.msra.mxu0 0.0
    %1553 = vmatprep.subr.mxu0 0.0
    %1554 = vmatpush1.msra.mxu0 0.0
    %1555 = vmatprep.subr.mxu0 0.0
    %1556 = vmatpush1.msra.mxu0 0.0
    %1557 = vmatprep.subr.mxu0 0.0
    %1558 = vmatpush1.msra.mxu0 0.0
    %1559 = vmatprep.subr.mxu0 0.0
    %1560 = vmatpush1.msra.mxu0 0.0
    %1561 = vmatprep.subr.mxu0 0.0
    %1562 = vmatpush1.msra.mxu0 0.0
    %1563 = vmatprep.subr.mxu0 0.0
    %1564 = vmatpush1.msra.mxu0 0.0
    %1565 = vmatprep.subr.mxu0 0.0
    %1566 = vmatpush1.msra.mxu0 0.0
    %1567 = vmatprep.subr.mxu0 0.0
    %1568 = vmatpush1.msra.mxu0 0.0
    %1569 = vmatprep.subr.mxu0 0.0
    %1570 = vmatpush1.msra.mxu0 0.0
    %1571 = vmatprep.subr.mxu0 0.0
    %1572 = vmatpush1.msra.mxu0 0.0
    %1573 = vmatprep.subr.mxu0 0.0
    %1574 = vmatpush1.msra.mxu0 0.0
    %1575 = vmatprep.subr.mxu0 0.0
    %1576 = vmatpush1.msra.mxu0 0.0
    %1577 = vmatprep.subr.mxu0 0.0
    %1578 = vmatpush1.msra.mxu0 0.0
    %1579 = vmatprep.mubr.f32.mxu0 0.0
    %v1580 = vand.u32 %v1483, 4294901760
    %v1581 = vsub.f32 %v1483, %v1580
    %v1582 = vand.u32 %v1581, 4294901760
    %v1583 = vsub.f32 %v1581, %v1582
    %v1584 = vand.u32 %v1583, 4294901760
    %1585 = vmatmul.mubr.f32.gmra.mrb[0].mxu0 %v1584
    %v1586 = vpop.f32.mrb[0].mxu0
    %v1587 = vadd.f32 0.0, %v1586
    %v1588 = vpop.f32.mrb[0].mxu0
    %1589 = vmatprep.mubr.f32.mxu0 0.0
    %v1590 = vand.u32 %v1484, 4294901760
    %v1591 = vsub.f32 %v1484, %v1590
    %v1592 = vand.u32 %v1591, 4294901760
    %v1593 = vsub.f32 %v1591, %v1592
    %v1594 = vand.u32 %v1593, 4294901760
    %1595 = vmatmul.mubr.f32.gmra.mrb[0].mxu0 %v1594
    %v1596 = vpop.f32.mrb[0].mxu0
    %v1597 = vadd.f32 0.0, %v1596
    %v1598 = vpop.f32.mrb[0].mxu0
    %1599 = vmatprep.mubr.f32.mxu0 0.0
    %v1600 = vand.u32 %v1485, 4294901760
    %v1601 = vsub.f32 %v1485, %v1600
    %v1602 = vand.u32 %v1601, 4294901760
    %v1603 = vsub.f32 %v1601, %v1602
    %v1604 = vand.u32 %v1603, 4294901760
    %1605 = vmatmul.mubr.f32.gmra.mrb[0].mxu0 %v1604
    %v1606 = vpop.f32.mrb[0].mxu0
    %v1607 = vadd.f32 0.0, %v1606
    %v1608 = vpop.f32.mrb[0].mxu0
    %1609 = vmatprep.mubr.f32.mxu0 0.0
    %v1610 = vand.u32 %v1486, 4294901760
    %v1611 = vsub.f32 %v1486, %v1610
    %v1612 = vand.u32 %v1611, 4294901760
    %v1613 = vsub.f32 %v1611, %v1612
    %v1614 = vand.u32 %v1613, 4294901760
    %1615 = vmatmul.mubr.f32.gmra.mrb[0].mxu0 %v1614
    %v1616 = vpop.f32.mrb[0].mxu0
    %v1617 = vadd.f32 0.0, %v1616
    %v1618 = vpop.f32.mrb[0].mxu0
    %1619 = vmatprep.mubr.f32.mxu0 0.0
    %v1620 = vand.u32 %v1487, 4294901760
    %v1621 = vsub.f32 %v1487, %v1620
    %v1622 = vand.u32 %v1621, 4294901760
    %v1623 = vsub.f32 %v1621, %v1622
    %v1624 = vand.u32 %v1623, 4294901760
    %1625 = vmatmul.mubr.f32.gmra.mrb[0].mxu0 %v1624
    %v1626 = vpop.f32.mrb[0].mxu0
    %v1627 = vadd.f32 0.0, %v1626
    %v1628 = vpop.f32.mrb[0].mxu0
    %1629 = vmatprep.mubr.f32.mxu0 0.0
    %v1630 = vand.u32 %v1488, 4294901760
    %v1631 = vsub.f32 %v1488, %v1630
    %v1632 = vand.u32 %v1631, 4294901760
    %v1633 = vsub.f32 %v1631, %v1632
    %v1634 = vand.u32 %v1633, 4294901760
    %1635 = vmatmul.mubr.f32.gmra.mrb[0].mxu0 %v1634
    %v1636 = vpop.f32.mrb[0].mxu0
    %v1637 = vadd.f32 0.0, %v1636
    %v1638 = vpop.f32.mrb[0].mxu0
    %1639 = vmatprep.mubr.f32.mxu0 0.0
    %v1640 = vand.u32 %v1489, 4294901760
    %v1641 = vsub.f32 %v1489, %v1640
    %v1642 = vand.u32 %v1641, 4294901760
    %v1643 = vsub.f32 %v1641, %v1642
    %v1644 = vand.u32 %v1643, 4294901760
    %1645 = vmatmul.mubr.f32.gmra.mrb[0].mxu0 %v1644
    %v1646 = vpop.f32.mrb[0].mxu0
    %v1647 = vadd.f32 0.0, %v1646
    %v1648 = vpop.f32.mrb[0].mxu0
    %1649 = vmatprep.mubr.f32.mxu0 0.0
    %v1650 = vand.u32 %v1490, 4294901760
    %v1651 = vsub.f32 %v1490, %v1650
    %v1652 = vand.u32 %v1651, 4294901760
    %v1653 = vsub.f32 %v1651, %v1652
    %v1654 = vand.u32 %v1653, 4294901760
    %1655 = vmatmul.mubr.f32.gmra.mrb[0].mxu0 %v1654
    %v1656 = vpop.f32.mrb[0].mxu0
    %v1657 = vadd.f32 0.0, %v1656
    %v1658 = vpop.f32.mrb[0].mxu0
    %1659 = vmatprep.mubr.f32.mxu0 0.0
    %v1660 = vand.u32 %v1491, 4294901760
    %v1661 = vsub.f32 %v1491, %v1660
    %v1662 = vand.u32 %v1661, 4294901760
    %v1663 = vsub.f32 %v1661, %v1662
    %v1664 = vand.u32 %v1663, 4294901760
    %1665 = vmatmul.mubr.f32.gmra.mrb[0].mxu0 %v1664
    %v1666 = vpop.f32.mrb[0].mxu0
    %v1667 = vadd.f32 0.0, %v1666
    %v1668 = vpop.f32.mrb[0].mxu0
    %1669 = vmatprep.mubr.f32.mxu0 0.0
    %v1670 = vand.u32 %v1492, 4294901760
    %v1671 = vsub.f32 %v1492, %v1670
    %v1672 = vand.u32 %v1671, 4294901760
    %v1673 = vsub.f32 %v1671, %v1672
    %v1674 = vand.u32 %v1673, 4294901760
    %1675 = vmatmul.mubr.f32.gmra.mrb[0].mxu0 %v1674
    %v1676 = vpop.f32.mrb[0].mxu0
    %v1677 = vadd.f32 0.0, %v1676
    %v1678 = vpop.f32.mrb[0].mxu0
    %1679 = vmatprep.mubr.f32.mxu0 0.0
    %v1680 = vand.u32 %v1493, 4294901760
    %v1681 = vsub.f32 %v1493, %v1680
    %v1682 = vand.u32 %v1681, 4294901760
    %v1683 = vsub.f32 %v1681, %v1682
    %v1684 = vand.u32 %v1683, 4294901760
    %1685 = vmatmul.mubr.f32.gmra.mrb[0].mxu0 %v1684
    %v1686 = vpop.f32.mrb[0].mxu0
    %v1687 = vadd.f32 0.0, %v1686
    %v1688 = vpop.f32.mrb[0].mxu0
    %1689 = vmatprep.mubr.f32.mxu0 0.0
    %v1690 = vand.u32 %v1494, 4294901760
    %v1691 = vsub.f32 %v1494, %v1690
    %v1692 = vand.u32 %v1691, 4294901760
    %v1693 = vsub.f32 %v1691, %v1692
    %v1694 = vand.u32 %v1693, 4294901760
    %1695 = vmatmul.mubr.f32.gmra.mrb[0].mxu0 %v1694
    %v1696 = vpop.f32.mrb[0].mxu0
    %v1697 = vadd.f32 0.0, %v1696
    %v1698 = vpop.f32.mrb[0].mxu0
    %1699 = vmatprep.mubr.f32.mxu0 0.0
    %v1700 = vand.u32 %v1495, 4294901760
    %v1701 = vsub.f32 %v1495, %v1700
    %v1702 = vand.u32 %v1701, 4294901760
    %v1703 = vsub.f32 %v1701, %v1702
    %v1704 = vand.u32 %v1703, 4294901760
    %1705 = vmatmul.mubr.f32.gmra.mrb[0].mxu0 %v1704
    %v1706 = vpop.f32.mrb[0].mxu0
    %v1707 = vadd.f32 0.0, %v1706
    %v1708 = vpop.f32.mrb[0].mxu0
    %1709 = vmatprep.mubr.f32.mxu0 0.0
    %v1710 = vand.u32 %v1496, 4294901760
    %v1711 = vsub.f32 %v1496, %v1710
    %v1712 = vand.u32 %v1711, 4294901760
    %v1713 = vsub.f32 %v1711, %v1712
    %v1714 = vand.u32 %v1713, 4294901760
    %1715 = vmatmul.mubr.f32.gmra.mrb[0].mxu0 %v1714
    %v1716 = vpop.f32.mrb[0].mxu0
    %v1717 = vadd.f32 0.0, %v1716
    %v1718 = vpop.f32.mrb[0].mxu0
    %1719 = vmatprep.mubr.f32.mxu0 0.0
    %v1720 = vand.u32 %v1497, 4294901760
    %v1721 = vsub.f32 %v1497, %v1720
    %v1722 = vand.u32 %v1721, 4294901760
    %v1723 = vsub.f32 %v1721, %v1722
    %v1724 = vand.u32 %v1723, 4294901760
    %1725 = vmatmul.mubr.f32.gmra.mrb[0].mxu0 %v1724
    %v1726 = vpop.f32.mrb[0].mxu0
    %v1727 = vadd.f32 0.0, %v1726
    %v1728 = vpop.f32.mrb[0].mxu0
    %1729 = vmatprep.mubr.f32.mxu0 0.0
    %v1730 = vand.u32 %v1498, 4294901760
    %v1731 = vsub.f32 %v1498, %v1730
    %v1732 = vand.u32 %v1731, 4294901760
    %v1733 = vsub.f32 %v1731, %v1732
    %v1734 = vand.u32 %v1733, 4294901760
    %1735 = vmatmul.mubr.f32.gmra.mrb[0].mxu0 %v1734
    %v1736 = vpop.f32.mrb[0].mxu0
    %v1737 = vadd.f32 0.0, %v1736
    %v1738 = vpop.f32.mrb[0].mxu0
    %1739 = vdwg.mxu0
    %1740 = vmatprep.subr.mxu0 0.0
    %v1741 = vand.u32 %v41, 4294901760
    %v1742 = vsub.f32 %v41, %v1741
    %v1743 = vand.u32 %v1742, 4294901760
    %v1744 = vsub.f32 %v1742, %v1743
    %v1745 = vand.u32 %v1744, 4294901760
    %1746 = vmatpush1.msra.mxu0 %v1745
    %1747 = vmatprep.subr.mxu0 0.0
    %v1748 = vand.u32 %v42, 4294901760
    %v1749 = vsub.f32 %v42, %v1748
    %v1750 = vand.u32 %v1749, 4294901760
    %v1751 = vsub.f32 %v1749, %v1750
    %v1752 = vand.u32 %v1751, 4294901760
    %1753 = vmatpush1.msra.mxu0 %v1752
    %1754 = vmatprep.subr.mxu0 0.0
    %v1755 = vand.u32 %v43, 4294901760
    %v1756 = vsub.f32 %v43, %v1755
    %v1757 = vand.u32 %v1756, 4294901760
    %v1758 = vsub.f32 %v1756, %v1757
    %v1759 = vand.u32 %v1758, 4294901760
    %1760 = vmatpush1.msra.mxu0 %v1759
    %1761 = vmatprep.subr.mxu0 0.0
    %v1762 = vand.u32 %v44, 4294901760
    %v1763 = vsub.f32 %v44, %v1762
    %v1764 = vand.u32 %v1763, 4294901760
    %v1765 = vsub.f32 %v1763, %v1764
    %v1766 = vand.u32 %v1765, 4294901760
    %1767 = vmatpush1.msra.mxu0 %v1766
    %1768 = vmatprep.subr.mxu0 0.0
    %v1769 = vand.u32 %v45, 4294901760
    %v1770 = vsub.f32 %v45, %v1769
    %v1771 = vand.u32 %v1770, 4294901760
    %v1772 = vsub.f32 %v1770, %v1771
    %v1773 = vand.u32 %v1772, 4294901760
    %1774 = vmatpush1.msra.mxu0 %v1773
    %1775 = vmatprep.subr.mxu0 0.0
    %v1776 = vand.u32 %v46, 4294901760
    %v1777 = vsub.f32 %v46, %v1776
    %v1778 = vand.u32 %v1777, 4294901760
    %v1779 = vsub.f32 %v1777, %v1778
    %v1780 = vand.u32 %v1779, 4294901760
    %1781 = vmatpush1.msra.mxu0 %v1780
    %1782 = vmatprep.subr.mxu0 0.0
    %v1783 = vand.u32 %v47, 4294901760
    %v1784 = vsub.f32 %v47, %v1783
    %v1785 = vand.u32 %v1784, 4294901760
    %v1786 = vsub.f32 %v1784, %v1785
    %v1787 = vand.u32 %v1786, 4294901760
    %1788 = vmatpush1.msra.mxu0 %v1787
    %1789 = vmatprep.subr.mxu0 0.0
    %v1790 = vand.u32 %v48, 4294901760
    %v1791 = vsub.f32 %v48, %v1790
    %v1792 = vand.u32 %v1791, 4294901760
    %v1793 = vsub.f32 %v1791, %v1792
    %v1794 = vand.u32 %v1793, 4294901760
    %1795 = vmatpush1.msra.mxu0 %v1794
    %1796 = vmatprep.subr.mxu0 0.0
    %v1797 = vand.u32 %v49, 4294901760
    %v1798 = vsub.f32 %v49, %v1797
    %v1799 = vand.u32 %v1798, 4294901760
    %v1800 = vsub.f32 %v1798, %v1799
    %v1801 = vand.u32 %v1800, 4294901760
    %1802 = vmatpush1.msra.mxu0 %v1801
    %1803 = vmatprep.subr.mxu0 0.0
    %v1804 = vand.u32 %v50, 4294901760
    %v1805 = vsub.f32 %v50, %v1804
    %v1806 = vand.u32 %v1805, 4294901760
    %v1807 = vsub.f32 %v1805, %v1806
    %v1808 = vand.u32 %v1807, 4294901760
    %1809 = vmatpush1.msra.mxu0 %v1808
    %1810 = vmatprep.subr.mxu0 0.0
    %v1811 = vand.u32 %v51, 4294901760
    %v1812 = vsub.f32 %v51, %v1811
    %v1813 = vand.u32 %v1812, 4294901760
    %v1814 = vsub.f32 %v1812, %v1813
    %v1815 = vand.u32 %v1814, 4294901760
    %1816 = vmatpush1.msra.mxu0 %v1815
    %1817 = vmatprep.subr.mxu0 0.0
    %v1818 = vand.u32 %v52, 4294901760
    %v1819 = vsub.f32 %v52, %v1818
    %v1820 = vand.u32 %v1819, 4294901760
    %v1821 = vsub.f32 %v1819, %v1820
    %v1822 = vand.u32 %v1821, 4294901760
    %1823 = vmatpush1.msra.mxu0 %v1822
    %1824 = vmatprep.subr.mxu0 0.0
    %v1825 = vand.u32 %v53, 4294901760
    %v1826 = vsub.f32 %v53, %v1825
    %v1827 = vand.u32 %v1826, 4294901760
    %v1828 = vsub.f32 %v1826, %v1827
    %v1829 = vand.u32 %v1828, 4294901760
    %1830 = vmatpush1.msra.mxu0 %v1829
    %1831 = vmatprep.subr.mxu0 0.0
    %v1832 = vand.u32 %v54, 4294901760
    %v1833 = vsub.f32 %v54, %v1832
    %v1834 = vand.u32 %v1833, 4294901760
    %v1835 = vsub.f32 %v1833, %v1834
    %v1836 = vand.u32 %v1835, 4294901760
    %1837 = vmatpush1.msra.mxu0 %v1836
    %1838 = vmatprep.subr.mxu0 0.0
    %v1839 = vand.u32 %v55, 4294901760
    %v1840 = vsub.f32 %v55, %v1839
    %v1841 = vand.u32 %v1840, 4294901760
    %v1842 = vsub.f32 %v1840, %v1841
    %v1843 = vand.u32 %v1842, 4294901760
    %1844 = vmatpush1.msra.mxu0 %v1843
    %1845 = vmatprep.subr.mxu0 0.0
    %v1846 = vand.u32 %v56, 4294901760
    %v1847 = vsub.f32 %v56, %v1846
    %v1848 = vand.u32 %v1847, 4294901760
    %v1849 = vsub.f32 %v1847, %v1848
    %v1850 = vand.u32 %v1849, 4294901760
    %1851 = vmatpush1.msra.mxu0 %v1850
    %1852 = vmatprep.subr.mxu0 0.0
    %1853 = vmatpush1.msra.mxu0 0.0
    %1854 = vmatprep.subr.mxu0 0.0
    %1855 = vmatpush1.msra.mxu0 0.0
    %1856 = vmatprep.subr.mxu0 0.0
    %1857 = vmatpush1.msra.mxu0 0.0
    %1858 = vmatprep.subr.mxu0 0.0
    %1859 = vmatpush1.msra.mxu0 0.0
    %1860 = vmatprep.subr.mxu0 0.0
    %1861 = vmatpush1.msra.mxu0 0.0
    %1862 = vmatprep.subr.mxu0 0.0
    %1863 = vmatpush1.msra.mxu0 0.0
    %1864 = vmatprep.subr.mxu0 0.0
    %1865 = vmatpush1.msra.mxu0 0.0
    %1866 = vmatprep.subr.mxu0 0.0
    %1867 = vmatpush1.msra.mxu0 0.0
    %1868 = vmatprep.subr.mxu0 0.0
    %1869 = vmatpush1.msra.mxu0 0.0
    %1870 = vmatprep.subr.mxu0 0.0
    %1871 = vmatpush1.msra.mxu0 0.0
    %1872 = vmatprep.subr.mxu0 0.0
    %1873 = vmatpush1.msra.mxu0 0.0
    %1874 = vmatprep.subr.mxu0 0.0
    %1875 = vmatpush1.msra.mxu0 0.0
    %1876 = vmatprep.subr.mxu0 0.0
    %1877 = vmatpush1.msra.mxu0 0.0
    %1878 = vmatprep.subr.mxu0 0.0
    %1879 = vmatpush1.msra.mxu0 0.0
    %1880 = vmatprep.subr.mxu0 0.0
    %1881 = vmatpush1.msra.mxu0 0.0
    %1882 = vmatprep.subr.mxu0 0.0
    %1883 = vmatpush1.msra.mxu0 0.0
    %1884 = vmatprep.mubr.f32.mxu0 0.0
    %v1885 = vand.u32 %v1483, 4294901760
    %1886 = vmatmul.mubr.f32.gmra.mrb[0].mxu0 %v1885
    %v1887 = vpop.f32.mrb[0].mxu0
    %v1888 = vadd.f32 %v1587, %v1887
    %v1889 = vpop.f32.mrb[0].mxu0
    %1890 = vmatprep.mubr.f32.mxu0 0.0
    %v1891 = vand.u32 %v1484, 4294901760
    %1892 = vmatmul.mubr.f32.gmra.mrb[0].mxu0 %v1891
    %v1893 = vpop.f32.mrb[0].mxu0
    %v1894 = vadd.f32 %v1597, %v1893
    %v1895 = vpop.f32.mrb[0].mxu0
    %1896 = vmatprep.mubr.f32.mxu0 0.0
    %v1897 = vand.u32 %v1485, 4294901760
    %1898 = vmatmul.mubr.f32.gmra.mrb[0].mxu0 %v1897
    %v1899 = vpop.f32.mrb[0].mxu0
    %v1900 = vadd.f32 %v1607, %v1899
    %v1901 = vpop.f32.mrb[0].mxu0
    %1902 = vmatprep.mubr.f32.mxu0 0.0
    %v1903 = vand.u32 %v1486, 4294901760
    %1904 = vmatmul.mubr.f32.gmra.mrb[0].mxu0 %v1903
    %v1905 = vpop.f32.mrb[0].mxu0
    %v1906 = vadd.f32 %v1617, %v1905
    %v1907 = vpop.f32.mrb[0].mxu0
    %1908 = vmatprep.mubr.f32.mxu0 0.0
    %v1909 = vand.u32 %v1487, 4294901760
    %1910 = vmatmul.mubr.f32.gmra.mrb[0].mxu0 %v1909
    %v1911 = vpop.f32.mrb[0].mxu0
    %v1912 = vadd.f32 %v1627, %v1911
    %v1913 = vpop.f32.mrb[0].mxu0
    %1914 = vmatprep.mubr.f32.mxu0 0.0
    %v1915 = vand.u32 %v1488, 4294901760
    %1916 = vmatmul.mubr.f32.gmra.mrb[0].mxu0 %v1915
    %v1917 = vpop.f32.mrb[0].mxu0
    %v1918 = vadd.f32 %v1637, %v1917
    %v1919 = vpop.f32.mrb[0].mxu0
    %1920 = vmatprep.mubr.f32.mxu0 0.0
    %v1921 = vand.u32 %v1489, 4294901760
    %1922 = vmatmul.mubr.f32.gmra.mrb[0].mxu0 %v1921
    %v1923 = vpop.f32.mrb[0].mxu0
    %v1924 = vadd.f32 %v1647, %v1923
    %v1925 = vpop.f32.mrb[0].mxu0
    %1926 = vmatprep.mubr.f32.mxu0 0.0
    %v1927 = vand.u32 %v1490, 4294901760
    %1928 = vmatmul.mubr.f32.gmra.mrb[0].mxu0 %v1927
    %v1929 = vpop.f32.mrb[0].mxu0
    %v1930 = vadd.f32 %v1657, %v1929
    %v1931 = vpop.f32.mrb[0].mxu0
    %1932 = vmatprep.mubr.f32.mxu0 0.0
    %v1933 = vand.u32 %v1491, 4294901760
    %1934 = vmatmul.mubr.f32.gmra.mrb[0].mxu0 %v1933
    %v1935 = vpop.f32.mrb[0].mxu0
    %v1936 = vadd.f32 %v1667, %v1935
    %v1937 = vpop.f32.mrb[0].mxu0
    %1938 = vmatprep.mubr.f32.mxu0 0.0
    %v1939 = vand.u32 %v1492, 4294901760
    %1940 = vmatmul.mubr.f32.gmra.mrb[0].mxu0 %v1939
    %v1941 = vpop.f32.mrb[0].mxu0
    %v1942 = vadd.f32 %v1677, %v1941
    %v1943 = vpop.f32.mrb[0].mxu0
    %1944 = vmatprep.mubr.f32.mxu0 0.0
    %v1945 = vand.u32 %v1493, 4294901760
    %1946 = vmatmul.mubr.f32.gmra.mrb[0].mxu0 %v1945
    %v1947 = vpop.f32.mrb[0].mxu0
    %v1948 = vadd.f32 %v1687, %v1947
    %v1949 = vpop.f32.mrb[0].mxu0
    %1950 = vmatprep.mubr.f32.mxu0 0.0
    %v1951 = vand.u32 %v1494, 4294901760
    %1952 = vmatmul.mubr.f32.gmra.mrb[0].mxu0 %v1951
    %v1953 = vpop.f32.mrb[0].mxu0
    %v1954 = vadd.f32 %v1697, %v1953
    %v1955 = vpop.f32.mrb[0].mxu0
    %1956 = vmatprep.mubr.f32.mxu0 0.0
    %v1957 = vand.u32 %v1495, 4294901760
    %1958 = vmatmul.mubr.f32.gmra.mrb[0].mxu0 %v1957
    %v1959 = vpop.f32.mrb[0].mxu0
    %v1960 = vadd.f32 %v1707, %v1959
    %v1961 = vpop.f32.mrb[0].mxu0
    %1962 = vmatprep.mubr.f32.mxu0 0.0
    %v1963 = vand.u32 %v1496, 4294901760
    %1964 = vmatmul.mubr.f32.gmra.mrb[0].mxu0 %v1963
    %v1965 = vpop.f32.mrb[0].mxu0
    %v1966 = vadd.f32 %v1717, %v1965
    %v1967 = vpop.f32.mrb[0].mxu0
    %1968 = vmatprep.mubr.f32.mxu0 0.0
    %v1969 = vand.u32 %v1497, 4294901760
    %1970 = vmatmul.mubr.f32.gmra.mrb[0].mxu0 %v1969
    %v1971 = vpop.f32.mrb[0].mxu0
    %v1972 = vadd.f32 %v1727, %v1971
    %v1973 = vpop.f32.mrb[0].mxu0
    %1974 = vmatprep.mubr.f32.mxu0 0.0
    %v1975 = vand.u32 %v1498, 4294901760
    %1976 = vmatmul.mubr.f32.gmra.mrb[0].mxu0 %v1975
    %v1977 = vpop.f32.mrb[0].mxu0
    %v1978 = vadd.f32 %v1737, %v1977
    %v1979 = vpop.f32.mrb[0].mxu0
    %1980 = vdwg.mxu0
    %1981 = vmatprep.subr.mxu0 0.0
    %v1982 = vand.u32 %v41, 4294901760
    %v1983 = vsub.f32 %v41, %v1982
    %1984 = vmatpush1.msra.mxu0 %v1983
    %1985 = vmatprep.subr.mxu0 0.0
    %v1986 = vand.u32 %v42, 4294901760
    %v1987 = vsub.f32 %v42, %v1986
    %1988 = vmatpush1.msra.mxu0 %v1987
    %1989 = vmatprep.subr.mxu0 0.0
    %v1990 = vand.u32 %v43, 4294901760
    %v1991 = vsub.f32 %v43, %v1990
    %1992 = vmatpush1.msra.mxu0 %v1991
    %1993 = vmatprep.subr.mxu0 0.0
    %v1994 = vand.u32 %v44, 4294901760
    %v1995 = vsub.f32 %v44, %v1994
    %1996 = vmatpush1.msra.mxu0 %v1995
    %1997 = vmatprep.subr.mxu0 0.0
    %v1998 = vand.u32 %v45, 4294901760
    %v1999 = vsub.f32 %v45, %v1998
    %2000 = vmatpush1.msra.mxu0 %v1999
    %2001 = vmatprep.subr.mxu0 0.0
    %v2002 = vand.u32 %v46, 4294901760
    %v2003 = vsub.f32 %v46, %v2002
    %2004 = vmatpush1.msra.mxu0 %v2003
    %2005 = vmatprep.subr.mxu0 0.0
    %v2006 = vand.u32 %v47, 4294901760
    %v2007 = vsub.f32 %v47, %v2006
    %2008 = vmatpush1.msra.mxu0 %v2007
    %2009 = vmatprep.subr.mxu0 0.0
    %v2010 = vand.u32 %v48, 4294901760
    %v2011 = vsub.f32 %v48, %v2010
    %2012 = vmatpush1.msra.mxu0 %v2011
    %2013 = vmatprep.subr.mxu0 0.0
    %v2014 = vand.u32 %v49, 4294901760
    %v2015 = vsub.f32 %v49, %v2014
    %2016 = vmatpush1.msra.mxu0 %v2015
    %2017 = vmatprep.subr.mxu0 0.0
    %v2018 = vand.u32 %v50, 4294901760
    %v2019 = vsub.f32 %v50, %v2018
    %2020 = vmatpush1.msra.mxu0 %v2019
    %2021 = vmatprep.subr.mxu0 0.0
    %v2022 = vand.u32 %v51, 4294901760
    %v2023 = vsub.f32 %v51, %v2022
    %2024 = vmatpush1.msra.mxu0 %v2023
    %2025 = vmatprep.subr.mxu0 0.0
    %v2026 = vand.u32 %v52, 4294901760
    %v2027 = vsub.f32 %v52, %v2026
    %2028 = vmatpush1.msra.mxu0 %v2027
    %2029 = vmatprep.subr.mxu0 0.0
    %v2030 = vand.u32 %v53, 4294901760
    %v2031 = vsub.f32 %v53, %v2030
    %2032 = vmatpush1.msra.mxu0 %v2031
    %2033 = vmatprep.subr.mxu0 0.0
    %v2034 = vand.u32 %v54, 4294901760
    %v2035 = vsub.f32 %v54, %v2034
    %2036 = vmatpush1.msra.mxu0 %v2035
    %2037 = vmatprep.subr.mxu0 0.0
    %v2038 = vand.u32 %v55, 4294901760
    %v2039 = vsub.f32 %v55, %v2038
    %2040 = vmatpush1.msra.mxu0 %v2039
    %2041 = vmatprep.subr.mxu0 0.0
    %v2042 = vand.u32 %v56, 4294901760
    %v2043 = vsub.f32 %v56, %v2042
    %2044 = vmatpush1.msra.mxu0 %v2043
    %2045 = vmatprep.subr.mxu0 0.0
    %2046 = vmatpush1.msra.mxu0 0.0
    %2047 = vmatprep.subr.mxu0 0.0
    %2048 = vmatpush1.msra.mxu0 0.0
    %2049 = vmatprep.subr.mxu0 0.0
    %2050 = vmatpush1.msra.mxu0 0.0
    %2051 = vmatprep.subr.mxu0 0.0
    %2052 = vmatpush1.msra.mxu0 0.0
    %2053 = vmatprep.subr.mxu0 0.0
    %2054 = vmatpush1.msra.mxu0 0.0
    %2055 = vmatprep.subr.mxu0 0.0
    %2056 = vmatpush1.msra.mxu0 0.0
    %2057 = vmatprep.subr.mxu0 0.0
    %2058 = vmatpush1.msra.mxu0 0.0
    %2059 = vmatprep.subr.mxu0 0.0
    %2060 = vmatpush1.msra.mxu0 0.0
    %2061 = vmatprep.subr.mxu0 0.0
    %2062 = vmatpush1.msra.mxu0 0.0
    %2063 = vmatprep.subr.mxu0 0.0
    %2064 = vmatpush1.msra.mxu0 0.0
    %2065 = vmatprep.subr.mxu0 0.0
    %2066 = vmatpush1.msra.mxu0 0.0
    %2067 = vmatprep.subr.mxu0 0.0
    %2068 = vmatpush1.msra.mxu0 0.0
    %2069 = vmatprep.subr.mxu0 0.0
    %2070 = vmatpush1.msra.mxu0 0.0
    %2071 = vmatprep.subr.mxu0 0.0
    %2072 = vmatpush1.msra.mxu0 0.0
    %2073 = vmatprep.subr.mxu0 0.0
    %2074 = vmatpush1.msra.mxu0 0.0
    %2075 = vmatprep.subr.mxu0 0.0
    %2076 = vmatpush1.msra.mxu0 0.0
    %2077 = vmatprep.mubr.f32.mxu0 0.0
    %v2078 = vand.u32 %v1483, 4294901760
    %v2079 = vsub.f32 %v1483, %v2078
    %2080 = vmatmul.mubr.f32.gmra.mrb[0].mxu0 %v2079
    %v2081 = vpop.f32.mrb[0].mxu0
    %v2082 = vadd.f32 %v1888, %v2081
    %v2083 = vpop.f32.mrb[0].mxu0
    %2084 = vmatprep.mubr.f32.mxu0 0.0
    %v2085 = vand.u32 %v1484, 4294901760
    %v2086 = vsub.f32 %v1484, %v2085
    %2087 = vmatmul.mubr.f32.gmra.mrb[0].mxu0 %v2086
    %v2088 = vpop.f32.mrb[0].mxu0
    %v2089 = vadd.f32 %v1894, %v2088
    %v2090 = vpop.f32.mrb[0].mxu0
    %2091 = vmatprep.mubr.f32.mxu0 0.0
    %v2092 = vand.u32 %v1485, 4294901760
    %v2093 = vsub.f32 %v1485, %v2092
    %2094 = vmatmul.mubr.f32.gmra.mrb[0].mxu0 %v2093
    %v2095 = vpop.f32.mrb[0].mxu0
    %v2096 = vadd.f32 %v1900, %v2095
    %v2097 = vpop.f32.mrb[0].mxu0
    %2098 = vmatprep.mubr.f32.mxu0 0.0
    %v2099 = vand.u32 %v1486, 4294901760
    %v2100 = vsub.f32 %v1486, %v2099
    %2101 = vmatmul.mubr.f32.gmra.mrb[0].mxu0 %v2100
    %v2102 = vpop.f32.mrb[0].mxu0
    %v2103 = vadd.f32 %v1906, %v2102
    %v2104 = vpop.f32.mrb[0].mxu0
    %2105 = vmatprep.mubr.f32.mxu0 0.0
    %v2106 = vand.u32 %v1487, 4294901760
    %v2107 = vsub.f32 %v1487, %v2106
    %2108 = vmatmul.mubr.f32.gmra.mrb[0].mxu0 %v2107
    %v2109 = vpop.f32.mrb[0].mxu0
    %v2110 = vadd.f32 %v1912, %v2109
    %v2111 = vpop.f32.mrb[0].mxu0
    %2112 = vmatprep.mubr.f32.mxu0 0.0
    %v2113 = vand.u32 %v1488, 4294901760
    %v2114 = vsub.f32 %v1488, %v2113
    %2115 = vmatmul.mubr.f32.gmra.mrb[0].mxu0 %v2114
    %v2116 = vpop.f32.mrb[0].mxu0
    %v2117 = vadd.f32 %v1918, %v2116
    %v2118 = vpop.f32.mrb[0].mxu0
    %2119 = vmatprep.mubr.f32.mxu0 0.0
    %v2120 = vand.u32 %v1489, 4294901760
    %v2121 = vsub.f32 %v1489, %v2120
    %2122 = vmatmul.mubr.f32.gmra.mrb[0].mxu0 %v2121
    %v2123 = vpop.f32.mrb[0].mxu0
    %v2124 = vadd.f32 %v1924, %v2123
    %v2125 = vpop.f32.mrb[0].mxu0
    %2126 = vmatprep.mubr.f32.mxu0 0.0
    %v2127 = vand.u32 %v1490, 4294901760
    %v2128 = vsub.f32 %v1490, %v2127
    %2129 = vmatmul.mubr.f32.gmra.mrb[0].mxu0 %v2128
    %v2130 = vpop.f32.mrb[0].mxu0
    %v2131 = vadd.f32 %v1930, %v2130
    %v2132 = vpop.f32.mrb[0].mxu0
    %2133 = vmatprep.mubr.f32.mxu0 0.0
    %v2134 = vand.u32 %v1491, 4294901760
    %v2135 = vsub.f32 %v1491, %v2134
    %2136 = vmatmul.mubr.f32.gmra.mrb[0].mxu0 %v2135
    %v2137 = vpop.f32.mrb[0].mxu0
    %v2138 = vadd.f32 %v1936, %v2137
    %v2139 = vpop.f32.mrb[0].mxu0
    %2140 = vmatprep.mubr.f32.mxu0 0.0
    %v2141 = vand.u32 %v1492, 4294901760
    %v2142 = vsub.f32 %v1492, %v2141
    %2143 = vmatmul.mubr.f32.gmra.mrb[0].mxu0 %v2142
    %v2144 = vpop.f32.mrb[0].mxu0
    %v2145 = vadd.f32 %v1942, %v2144
    %v2146 = vpop.f32.mrb[0].mxu0
    %2147 = vmatprep.mubr.f32.mxu0 0.0
    %v2148 = vand.u32 %v1493, 4294901760
    %v2149 = vsub.f32 %v1493, %v2148
    %2150 = vmatmul.mubr.f32.gmra.mrb[0].mxu0 %v2149
    %v2151 = vpop.f32.mrb[0].mxu0
    %v2152 = vadd.f32 %v1948, %v2151
    %v2153 = vpop.f32.mrb[0].mxu0
    %2154 = vmatprep.mubr.f32.mxu0 0.0
    %v2155 = vand.u32 %v1494, 4294901760
    %v2156 = vsub.f32 %v1494, %v2155
    %2157 = vmatmul.mubr.f32.gmra.mrb[0].mxu0 %v2156
    %v2158 = vpop.f32.mrb[0].mxu0
    %v2159 = vadd.f32 %v1954, %v2158
    %v2160 = vpop.f32.mrb[0].mxu0
    %2161 = vmatprep.mubr.f32.mxu0 0.0
    %v2162 = vand.u32 %v1495, 4294901760
    %v2163 = vsub.f32 %v1495, %v2162
    %2164 = vmatmul.mubr.f32.gmra.mrb[0].mxu0 %v2163
    %v2165 = vpop.f32.mrb[0].mxu0
    %v2166 = vadd.f32 %v1960, %v2165
    %v2167 = vpop.f32.mrb[0].mxu0
    %2168 = vmatprep.mubr.f32.mxu0 0.0
    %v2169 = vand.u32 %v1496, 4294901760
    %v2170 = vsub.f32 %v1496, %v2169
    %2171 = vmatmul.mubr.f32.gmra.mrb[0].mxu0 %v2170
    %v2172 = vpop.f32.mrb[0].mxu0
    %v2173 = vadd.f32 %v1966, %v2172
    %v2174 = vpop.f32.mrb[0].mxu0
    %2175 = vmatprep.mubr.f32.mxu0 0.0
    %v2176 = vand.u32 %v1497, 4294901760
    %v2177 = vsub.f32 %v1497, %v2176
    %2178 = vmatmul.mubr.f32.gmra.mrb[0].mxu0 %v2177
    %v2179 = vpop.f32.mrb[0].mxu0
    %v2180 = vadd.f32 %v1972, %v2179
    %v2181 = vpop.f32.mrb[0].mxu0
    %2182 = vmatprep.mubr.f32.mxu0 0.0
    %v2183 = vand.u32 %v1498, 4294901760
    %v2184 = vsub.f32 %v1498, %v2183
    %2185 = vmatmul.mubr.f32.gmra.mrb[0].mxu0 %v2184
    %v2186 = vpop.f32.mrb[0].mxu0
    %v2187 = vadd.f32 %v1978, %v2186
    %v2188 = vpop.f32.mrb[0].mxu0
    %2189 = vdwg.mxu0
    %2190 = vmatprep.subr.mxu0 0.0
    %v2191 = vand.u32 %v41, 4294901760
    %2192 = vmatpush1.msra.mxu0 %v2191
    %2193 = vmatprep.subr.mxu0 0.0
    %v2194 = vand.u32 %v42, 4294901760
    %2195 = vmatpush1.msra.mxu0 %v2194
    %2196 = vmatprep.subr.mxu0 0.0
    %v2197 = vand.u32 %v43, 4294901760
    %2198 = vmatpush1.msra.mxu0 %v2197
    %2199 = vmatprep.subr.mxu0 0.0
    %v2200 = vand.u32 %v44, 4294901760
    %2201 = vmatpush1.msra.mxu0 %v2200
    %2202 = vmatprep.subr.mxu0 0.0
    %v2203 = vand.u32 %v45, 4294901760
    %2204 = vmatpush1.msra.mxu0 %v2203
    %2205 = vmatprep.subr.mxu0 0.0
    %v2206 = vand.u32 %v46, 4294901760
    %2207 = vmatpush1.msra.mxu0 %v2206
    %2208 = vmatprep.subr.mxu0 0.0
    %v2209 = vand.u32 %v47, 4294901760
    %2210 = vmatpush1.msra.mxu0 %v2209
    %2211 = vmatprep.subr.mxu0 0.0
    %v2212 = vand.u32 %v48, 4294901760
    %2213 = vmatpush1.msra.mxu0 %v2212
    %2214 = vmatprep.subr.mxu0 0.0
    %v2215 = vand.u32 %v49, 4294901760
    %2216 = vmatpush1.msra.mxu0 %v2215
    %2217 = vmatprep.subr.mxu0 0.0
    %v2218 = vand.u32 %v50, 4294901760
    %2219 = vmatpush1.msra.mxu0 %v2218
    %2220 = vmatprep.subr.mxu0 0.0
    %v2221 = vand.u32 %v51, 4294901760
    %2222 = vmatpush1.msra.mxu0 %v2221
    %2223 = vmatprep.subr.mxu0 0.0
    %v2224 = vand.u32 %v52, 4294901760
    %2225 = vmatpush1.msra.mxu0 %v2224
    %2226 = vmatprep.subr.mxu0 0.0
    %v2227 = vand.u32 %v53, 4294901760
    %2228 = vmatpush1.msra.mxu0 %v2227
    %2229 = vmatprep.subr.mxu0 0.0
    %v2230 = vand.u32 %v54, 4294901760
    %2231 = vmatpush1.msra.mxu0 %v2230
    %2232 = vmatprep.subr.mxu0 0.0
    %v2233 = vand.u32 %v55, 4294901760
    %2234 = vmatpush1.msra.mxu0 %v2233
    %2235 = vmatprep.subr.mxu0 0.0
    %v2236 = vand.u32 %v56, 4294901760
    %2237 = vmatpush1.msra.mxu0 %v2236
    %2238 = vmatprep.subr.mxu0 0.0
    %2239 = vmatpush1.msra.mxu0 0.0
    %2240 = vmatprep.subr.mxu0 0.0
    %2241 = vmatpush1.msra.mxu0 0.0
    %2242 = vmatprep.subr.mxu0 0.0
    %2243 = vmatpush1.msra.mxu0 0.0
    %2244 = vmatprep.subr.mxu0 0.0
    %2245 = vmatpush1.msra.mxu0 0.0
    %2246 = vmatprep.subr.mxu0 0.0
    %2247 = vmatpush1.msra.mxu0 0.0
    %2248 = vmatprep.subr.mxu0 0.0
    %2249 = vmatpush1.msra.mxu0 0.0
    %2250 = vmatprep.subr.mxu0 0.0
    %2251 = vmatpush1.msra.mxu0 0.0
    %2252 = vmatprep.subr.mxu0 0.0
    %2253 = vmatpush1.msra.mxu0 0.0
    %2254 = vmatprep.subr.mxu0 0.0
    %2255 = vmatpush1.msra.mxu0 0.0
    %2256 = vmatprep.subr.mxu0 0.0
    %2257 = vmatpush1.msra.mxu0 0.0
    %2258 = vmatprep.subr.mxu0 0.0
    %2259 = vmatpush1.msra.mxu0 0.0
    %2260 = vmatprep.subr.mxu0 0.0
    %2261 = vmatpush1.msra.mxu0 0.0
    %2262 = vmatprep.subr.mxu0 0.0
    %2263 = vmatpush1.msra.mxu0 0.0
    %2264 = vmatprep.subr.mxu0 0.0
    %2265 = vmatpush1.msra.mxu0 0.0
    %2266 = vmatprep.subr.mxu0 0.0
    %2267 = vmatpush1.msra.mxu0 0.0
    %2268 = vmatprep.subr.mxu0 0.0
    %2269 = vmatpush1.msra.mxu0 0.0
    %2270 = vmatprep.mubr.f32.mxu0 0.0
    %v2271 = vand.u32 %v1483, 4294901760
    %v2272 = vsub.f32 %v1483, %v2271
    %v2273 = vand.u32 %v2272, 4294901760
    %2274 = vmatmul.mubr.f32.gmra.mrb[0].mxu0 %v2273
    %v2275 = vpop.f32.mrb[0].mxu0
    %v2276 = vadd.f32 %v2082, %v2275
    %v2277 = vpop.f32.mrb[0].mxu0
    %2278 = vmatprep.mubr.f32.mxu0 0.0
    %v2279 = vand.u32 %v1484, 4294901760
    %v2280 = vsub.f32 %v1484, %v2279
    %v2281 = vand.u32 %v2280, 4294901760
    %2282 = vmatmul.mubr.f32.gmra.mrb[0].mxu0 %v2281
    %v2283 = vpop.f32.mrb[0].mxu0
    %v2284 = vadd.f32 %v2089, %v2283
    %v2285 = vpop.f32.mrb[0].mxu0
    %2286 = vmatprep.mubr.f32.mxu0 0.0
    %v2287 = vand.u32 %v1485, 4294901760
    %v2288 = vsub.f32 %v1485, %v2287
    %v2289 = vand.u32 %v2288, 4294901760
    %2290 = vmatmul.mubr.f32.gmra.mrb[0].mxu0 %v2289
    %v2291 = vpop.f32.mrb[0].mxu0
    %v2292 = vadd.f32 %v2096, %v2291
    %v2293 = vpop.f32.mrb[0].mxu0
    %2294 = vmatprep.mubr.f32.mxu0 0.0
    %v2295 = vand.u32 %v1486, 4294901760
    %v2296 = vsub.f32 %v1486, %v2295
    %v2297 = vand.u32 %v2296, 4294901760
    %2298 = vmatmul.mubr.f32.gmra.mrb[0].mxu0 %v2297
    %v2299 = vpop.f32.mrb[0].mxu0
    %v2300 = vadd.f32 %v2103, %v2299
    %v2301 = vpop.f32.mrb[0].mxu0
    %2302 = vmatprep.mubr.f32.mxu0 0.0
    %v2303 = vand.u32 %v1487, 4294901760
    %v2304 = vsub.f32 %v1487, %v2303
    %v2305 = vand.u32 %v2304, 4294901760
    %2306 = vmatmul.mubr.f32.gmra.mrb[0].mxu0 %v2305
    %v2307 = vpop.f32.mrb[0].mxu0
    %v2308 = vadd.f32 %v2110, %v2307
    %v2309 = vpop.f32.mrb[0].mxu0
    %2310 = vmatprep.mubr.f32.mxu0 0.0
    %v2311 = vand.u32 %v1488, 4294901760
    %v2312 = vsub.f32 %v1488, %v2311
    %v2313 = vand.u32 %v2312, 4294901760
    %2314 = vmatmul.mubr.f32.gmra.mrb[0].mxu0 %v2313
    %v2315 = vpop.f32.mrb[0].mxu0
    %v2316 = vadd.f32 %v2117, %v2315
    %v2317 = vpop.f32.mrb[0].mxu0
    %2318 = vmatprep.mubr.f32.mxu0 0.0
    %v2319 = vand.u32 %v1489, 4294901760
    %v2320 = vsub.f32 %v1489, %v2319
    %v2321 = vand.u32 %v2320, 4294901760
    %2322 = vmatmul.mubr.f32.gmra.mrb[0].mxu0 %v2321
    %v2323 = vpop.f32.mrb[0].mxu0
    %v2324 = vadd.f32 %v2124, %v2323
    %v2325 = vpop.f32.mrb[0].mxu0
    %2326 = vmatprep.mubr.f32.mxu0 0.0
    %v2327 = vand.u32 %v1490, 4294901760
    %v2328 = vsub.f32 %v1490, %v2327
    %v2329 = vand.u32 %v2328, 4294901760
    %2330 = vmatmul.mubr.f32.gmra.mrb[0].mxu0 %v2329
    %v2331 = vpop.f32.mrb[0].mxu0
    %v2332 = vadd.f32 %v2131, %v2331
    %v2333 = vpop.f32.mrb[0].mxu0
    %2334 = vmatprep.mubr.f32.mxu0 0.0
    %v2335 = vand.u32 %v1491, 4294901760
    %v2336 = vsub.f32 %v1491, %v2335
    %v2337 = vand.u32 %v2336, 4294901760
    %2338 = vmatmul.mubr.f32.gmra.mrb[0].mxu0 %v2337
    %v2339 = vpop.f32.mrb[0].mxu0
    %v2340 = vadd.f32 %v2138, %v2339
    %v2341 = vpop.f32.mrb[0].mxu0
    %2342 = vmatprep.mubr.f32.mxu0 0.0
    %v2343 = vand.u32 %v1492, 4294901760
    %v2344 = vsub.f32 %v1492, %v2343
    %v2345 = vand.u32 %v2344, 4294901760
    %2346 = vmatmul.mubr.f32.gmra.mrb[0].mxu0 %v2345
    %v2347 = vpop.f32.mrb[0].mxu0
    %v2348 = vadd.f32 %v2145, %v2347
    %v2349 = vpop.f32.mrb[0].mxu0
    %2350 = vmatprep.mubr.f32.mxu0 0.0
    %v2351 = vand.u32 %v1493, 4294901760
    %v2352 = vsub.f32 %v1493, %v2351
    %v2353 = vand.u32 %v2352, 4294901760
    %2354 = vmatmul.mubr.f32.gmra.mrb[0].mxu0 %v2353
    %v2355 = vpop.f32.mrb[0].mxu0
    %v2356 = vadd.f32 %v2152, %v2355
    %v2357 = vpop.f32.mrb[0].mxu0
    %2358 = vmatprep.mubr.f32.mxu0 0.0
    %v2359 = vand.u32 %v1494, 4294901760
    %v2360 = vsub.f32 %v1494, %v2359
    %v2361 = vand.u32 %v2360, 4294901760
    %2362 = vmatmul.mubr.f32.gmra.mrb[0].mxu0 %v2361
    %v2363 = vpop.f32.mrb[0].mxu0
    %v2364 = vadd.f32 %v2159, %v2363
    %v2365 = vpop.f32.mrb[0].mxu0
    %2366 = vmatprep.mubr.f32.mxu0 0.0
    %v2367 = vand.u32 %v1495, 4294901760
    %v2368 = vsub.f32 %v1495, %v2367
    %v2369 = vand.u32 %v2368, 4294901760
    %2370 = vmatmul.mubr.f32.gmra.mrb[0].mxu0 %v2369
    %v2371 = vpop.f32.mrb[0].mxu0
    %v2372 = vadd.f32 %v2166, %v2371
    %v2373 = vpop.f32.mrb[0].mxu0
    %2374 = vmatprep.mubr.f32.mxu0 0.0
    %v2375 = vand.u32 %v1496, 4294901760
    %v2376 = vsub.f32 %v1496, %v2375
    %v2377 = vand.u32 %v2376, 4294901760
    %2378 = vmatmul.mubr.f32.gmra.mrb[0].mxu0 %v2377
    %v2379 = vpop.f32.mrb[0].mxu0
    %v2380 = vadd.f32 %v2173, %v2379
    %v2381 = vpop.f32.mrb[0].mxu0
    %2382 = vmatprep.mubr.f32.mxu0 0.0
    %v2383 = vand.u32 %v1497, 4294901760
    %v2384 = vsub.f32 %v1497, %v2383
    %v2385 = vand.u32 %v2384, 4294901760
    %2386 = vmatmul.mubr.f32.gmra.mrb[0].mxu0 %v2385
    %v2387 = vpop.f32.mrb[0].mxu0
    %v2388 = vadd.f32 %v2180, %v2387
    %v2389 = vpop.f32.mrb[0].mxu0
    %2390 = vmatprep.mubr.f32.mxu0 0.0
    %v2391 = vand.u32 %v1498, 4294901760
    %v2392 = vsub.f32 %v1498, %v2391
    %v2393 = vand.u32 %v2392, 4294901760
    %2394 = vmatmul.mubr.f32.gmra.mrb[0].mxu0 %v2393
    %v2395 = vpop.f32.mrb[0].mxu0
    %v2396 = vadd.f32 %v2187, %v2395
    %v2397 = vpop.f32.mrb[0].mxu0
    %2398 = vdwg.mxu0
    %2399 = vmatprep.subr.mxu0 0.0
    %v2400 = vand.u32 %v41, 4294901760
    %v2401 = vsub.f32 %v41, %v2400
    %v2402 = vand.u32 %v2401, 4294901760
    %2403 = vmatpush1.msra.mxu0 %v2402
    %2404 = vmatprep.subr.mxu0 0.0
    %v2405 = vand.u32 %v42, 4294901760
    %v2406 = vsub.f32 %v42, %v2405
    %v2407 = vand.u32 %v2406, 4294901760
    %2408 = vmatpush1.msra.mxu0 %v2407
    %2409 = vmatprep.subr.mxu0 0.0
    %v2410 = vand.u32 %v43, 4294901760
    %v2411 = vsub.f32 %v43, %v2410
    %v2412 = vand.u32 %v2411, 4294901760
    %2413 = vmatpush1.msra.mxu0 %v2412
    %2414 = vmatprep.subr.mxu0 0.0
    %v2415 = vand.u32 %v44, 4294901760
    %v2416 = vsub.f32 %v44, %v2415
    %v2417 = vand.u32 %v2416, 4294901760
    %2418 = vmatpush1.msra.mxu0 %v2417
    %2419 = vmatprep.subr.mxu0 0.0
    %v2420 = vand.u32 %v45, 4294901760
    %v2421 = vsub.f32 %v45, %v2420
    %v2422 = vand.u32 %v2421, 4294901760
    %2423 = vmatpush1.msra.mxu0 %v2422
    %2424 = vmatprep.subr.mxu0 0.0
    %v2425 = vand.u32 %v46, 4294901760
    %v2426 = vsub.f32 %v46, %v2425
    %v2427 = vand.u32 %v2426, 4294901760
    %2428 = vmatpush1.msra.mxu0 %v2427
    %2429 = vmatprep.subr.mxu0 0.0
    %v2430 = vand.u32 %v47, 4294901760
    %v2431 = vsub.f32 %v47, %v2430
    %v2432 = vand.u32 %v2431, 4294901760
    %2433 = vmatpush1.msra.mxu0 %v2432
    %2434 = vmatprep.subr.mxu0 0.0
    %v2435 = vand.u32 %v48, 4294901760
    %v2436 = vsub.f32 %v48, %v2435
    %v2437 = vand.u32 %v2436, 4294901760
    %2438 = vmatpush1.msra.mxu0 %v2437
    %2439 = vmatprep.subr.mxu0 0.0
    %v2440 = vand.u32 %v49, 4294901760
    %v2441 = vsub.f32 %v49, %v2440
    %v2442 = vand.u32 %v2441, 4294901760
    %2443 = vmatpush1.msra.mxu0 %v2442
    %2444 = vmatprep.subr.mxu0 0.0
    %v2445 = vand.u32 %v50, 4294901760
    %v2446 = vsub.f32 %v50, %v2445
    %v2447 = vand.u32 %v2446, 4294901760
    %2448 = vmatpush1.msra.mxu0 %v2447
    %2449 = vmatprep.subr.mxu0 0.0
    %v2450 = vand.u32 %v51, 4294901760
    %v2451 = vsub.f32 %v51, %v2450
    %v2452 = vand.u32 %v2451, 4294901760
    %2453 = vmatpush1.msra.mxu0 %v2452
    %2454 = vmatprep.subr.mxu0 0.0
    %v2455 = vand.u32 %v52, 4294901760
    %v2456 = vsub.f32 %v52, %v2455
    %v2457 = vand.u32 %v2456, 4294901760
    %2458 = vmatpush1.msra.mxu0 %v2457
    %2459 = vmatprep.subr.mxu0 0.0
    %v2460 = vand.u32 %v53, 4294901760
    %v2461 = vsub.f32 %v53, %v2460
    %v2462 = vand.u32 %v2461, 4294901760
    %2463 = vmatpush1.msra.mxu0 %v2462
    %2464 = vmatprep.subr.mxu0 0.0
    %v2465 = vand.u32 %v54, 4294901760
    %v2466 = vsub.f32 %v54, %v2465
    %v2467 = vand.u32 %v2466, 4294901760
    %2468 = vmatpush1.msra.mxu0 %v2467
    %2469 = vmatprep.subr.mxu0 0.0
    %v2470 = vand.u32 %v55, 4294901760
    %v2471 = vsub.f32 %v55, %v2470
    %v2472 = vand.u32 %v2471, 4294901760
    %2473 = vmatpush1.msra.mxu0 %v2472
    %2474 = vmatprep.subr.mxu0 0.0
    %v2475 = vand.u32 %v56, 4294901760
    %v2476 = vsub.f32 %v56, %v2475
    %v2477 = vand.u32 %v2476, 4294901760
    %2478 = vmatpush1.msra.mxu0 %v2477
    %2479 = vmatprep.subr.mxu0 0.0
    %2480 = vmatpush1.msra.mxu0 0.0
    %2481 = vmatprep.subr.mxu0 0.0
    %2482 = vmatpush1.msra.mxu0 0.0
    %2483 = vmatprep.subr.mxu0 0.0
    %2484 = vmatpush1.msra.mxu0 0.0
    %2485 = vmatprep.subr.mxu0 0.0
    %2486 = vmatpush1.msra.mxu0 0.0
    %2487 = vmatprep.subr.mxu0 0.0
    %2488 = vmatpush1.msra.mxu0 0.0
    %2489 = vmatprep.subr.mxu0 0.0
    %2490 = vmatpush1.msra.mxu0 0.0
    %2491 = vmatprep.subr.mxu0 0.0
    %2492 = vmatpush1.msra.mxu0 0.0
    %2493 = vmatprep.subr.mxu0 0.0
    %2494 = vmatpush1.msra.mxu0 0.0
    %2495 = vmatprep.subr.mxu0 0.0
    %2496 = vmatpush1.msra.mxu0 0.0
    %2497 = vmatprep.subr.mxu0 0.0
    %2498 = vmatpush1.msra.mxu0 0.0
    %2499 = vmatprep.subr.mxu0 0.0
    %2500 = vmatpush1.msra.mxu0 0.0
    %2501 = vmatprep.subr.mxu0 0.0
    %2502 = vmatpush1.msra.mxu0 0.0
    %2503 = vmatprep.subr.mxu0 0.0
    %2504 = vmatpush1.msra.mxu0 0.0
    %2505 = vmatprep.subr.mxu0 0.0
    %2506 = vmatpush1.msra.mxu0 0.0
    %2507 = vmatprep.subr.mxu0 0.0
    %2508 = vmatpush1.msra.mxu0 0.0
    %2509 = vmatprep.subr.mxu0 0.0
    %2510 = vmatpush1.msra.mxu0 0.0
    %2511 = vmatprep.mubr.f32.mxu0 0.0
    %v2512 = vand.u32 %v1483, 4294901760
    %2513 = vmatmul.mubr.f32.gmra.mrb[0].mxu0 %v2512
    %v2514 = vpop.f32.mrb[0].mxu0
    %v2515 = vadd.f32 %v2276, %v2514
    %v2516 = vpop.f32.mrb[0].mxu0
    %2517 = vmatprep.mubr.f32.mxu0 0.0
    %v2518 = vand.u32 %v1484, 4294901760
    %2519 = vmatmul.mubr.f32.gmra.mrb[0].mxu0 %v2518
    %v2520 = vpop.f32.mrb[0].mxu0
    %v2521 = vadd.f32 %v2284, %v2520
    %v2522 = vpop.f32.mrb[0].mxu0
    %2523 = vmatprep.mubr.f32.mxu0 0.0
    %v2524 = vand.u32 %v1485, 4294901760
    %2525 = vmatmul.mubr.f32.gmra.mrb[0].mxu0 %v2524
    %v2526 = vpop.f32.mrb[0].mxu0
    %v2527 = vadd.f32 %v2292, %v2526
    %v2528 = vpop.f32.mrb[0].mxu0
    %2529 = vmatprep.mubr.f32.mxu0 0.0
    %v2530 = vand.u32 %v1486, 4294901760
    %2531 = vmatmul.mubr.f32.gmra.mrb[0].mxu0 %v2530
    %v2532 = vpop.f32.mrb[0].mxu0
    %v2533 = vadd.f32 %v2300, %v2532
    %v2534 = vpop.f32.mrb[0].mxu0
    %2535 = vmatprep.mubr.f32.mxu0 0.0
    %v2536 = vand.u32 %v1487, 4294901760
    %2537 = vmatmul.mubr.f32.gmra.mrb[0].mxu0 %v2536
    %v2538 = vpop.f32.mrb[0].mxu0
    %v2539 = vadd.f32 %v2308, %v2538
    %v2540 = vpop.f32.mrb[0].mxu0
    %2541 = vmatprep.mubr.f32.mxu0 0.0
    %v2542 = vand.u32 %v1488, 4294901760
    %2543 = vmatmul.mubr.f32.gmra.mrb[0].mxu0 %v2542
    %v2544 = vpop.f32.mrb[0].mxu0
    %v2545 = vadd.f32 %v2316, %v2544
    %v2546 = vpop.f32.mrb[0].mxu0
    %2547 = vmatprep.mubr.f32.mxu0 0.0
    %v2548 = vand.u32 %v1489, 4294901760
    %2549 = vmatmul.mubr.f32.gmra.mrb[0].mxu0 %v2548
    %v2550 = vpop.f32.mrb[0].mxu0
    %v2551 = vadd.f32 %v2324, %v2550
    %v2552 = vpop.f32.mrb[0].mxu0
    %2553 = vmatprep.mubr.f32.mxu0 0.0
    %v2554 = vand.u32 %v1490, 4294901760
    %2555 = vmatmul.mubr.f32.gmra.mrb[0].mxu0 %v2554
    %v2556 = vpop.f32.mrb[0].mxu0
    %v2557 = vadd.f32 %v2332, %v2556
    %v2558 = vpop.f32.mrb[0].mxu0
    %2559 = vmatprep.mubr.f32.mxu0 0.0
    %v2560 = vand.u32 %v1491, 4294901760
    %2561 = vmatmul.mubr.f32.gmra.mrb[0].mxu0 %v2560
    %v2562 = vpop.f32.mrb[0].mxu0
    %v2563 = vadd.f32 %v2340, %v2562
    %v2564 = vpop.f32.mrb[0].mxu0
    %2565 = vmatprep.mubr.f32.mxu0 0.0
    %v2566 = vand.u32 %v1492, 4294901760
    %2567 = vmatmul.mubr.f32.gmra.mrb[0].mxu0 %v2566
    %v2568 = vpop.f32.mrb[0].mxu0
    %v2569 = vadd.f32 %v2348, %v2568
    %v2570 = vpop.f32.mrb[0].mxu0
    %2571 = vmatprep.mubr.f32.mxu0 0.0
    %v2572 = vand.u32 %v1493, 4294901760
    %2573 = vmatmul.mubr.f32.gmra.mrb[0].mxu0 %v2572
    %v2574 = vpop.f32.mrb[0].mxu0
    %v2575 = vadd.f32 %v2356, %v2574
    %v2576 = vpop.f32.mrb[0].mxu0
    %2577 = vmatprep.mubr.f32.mxu0 0.0
    %v2578 = vand.u32 %v1494, 4294901760
    %2579 = vmatmul.mubr.f32.gmra.mrb[0].mxu0 %v2578
    %v2580 = vpop.f32.mrb[0].mxu0
    %v2581 = vadd.f32 %v2364, %v2580
    %v2582 = vpop.f32.mrb[0].mxu0
    %2583 = vmatprep.mubr.f32.mxu0 0.0
    %v2584 = vand.u32 %v1495, 4294901760
    %2585 = vmatmul.mubr.f32.gmra.mrb[0].mxu0 %v2584
    %v2586 = vpop.f32.mrb[0].mxu0
    %v2587 = vadd.f32 %v2372, %v2586
    %v2588 = vpop.f32.mrb[0].mxu0
    %2589 = vmatprep.mubr.f32.mxu0 0.0
    %v2590 = vand.u32 %v1496, 4294901760
    %2591 = vmatmul.mubr.f32.gmra.mrb[0].mxu0 %v2590
    %v2592 = vpop.f32.mrb[0].mxu0
    %v2593 = vadd.f32 %v2380, %v2592
    %v2594 = vpop.f32.mrb[0].mxu0
    %2595 = vmatprep.mubr.f32.mxu0 0.0
    %v2596 = vand.u32 %v1497, 4294901760
    %2597 = vmatmul.mubr.f32.gmra.mrb[0].mxu0 %v2596
    %v2598 = vpop.f32.mrb[0].mxu0
    %v2599 = vadd.f32 %v2388, %v2598
    %v2600 = vpop.f32.mrb[0].mxu0
    %2601 = vmatprep.mubr.f32.mxu0 0.0
    %v2602 = vand.u32 %v1498, 4294901760
    %2603 = vmatmul.mubr.f32.gmra.mrb[0].mxu0 %v2602
    %v2604 = vpop.f32.mrb[0].mxu0
    %v2605 = vadd.f32 %v2396, %v2604
    %v2606 = vpop.f32.mrb[0].mxu0
    %2607 = vdwg.mxu0
    %2608 = vmatprep.subr.mxu0 0.0
    %v2609 = vand.u32 %v41, 4294901760
    %2610 = vmatpush1.msra.mxu0 %v2609
    %2611 = vmatprep.subr.mxu0 0.0
    %v2612 = vand.u32 %v42, 4294901760
    %2613 = vmatpush1.msra.mxu0 %v2612
    %2614 = vmatprep.subr.mxu0 0.0
    %v2615 = vand.u32 %v43, 4294901760
    %2616 = vmatpush1.msra.mxu0 %v2615
    %2617 = vmatprep.subr.mxu0 0.0
    %v2618 = vand.u32 %v44, 4294901760
    %2619 = vmatpush1.msra.mxu0 %v2618
    %2620 = vmatprep.subr.mxu0 0.0
    %v2621 = vand.u32 %v45, 4294901760
    %2622 = vmatpush1.msra.mxu0 %v2621
    %2623 = vmatprep.subr.mxu0 0.0
    %v2624 = vand.u32 %v46, 4294901760
    %2625 = vmatpush1.msra.mxu0 %v2624
    %2626 = vmatprep.subr.mxu0 0.0
    %v2627 = vand.u32 %v47, 4294901760
    %2628 = vmatpush1.msra.mxu0 %v2627
    %2629 = vmatprep.subr.mxu0 0.0
    %v2630 = vand.u32 %v48, 4294901760
    %2631 = vmatpush1.msra.mxu0 %v2630
    %2632 = vmatprep.subr.mxu0 0.0
    %v2633 = vand.u32 %v49, 4294901760
    %2634 = vmatpush1.msra.mxu0 %v2633
    %2635 = vmatprep.subr.mxu0 0.0
    %v2636 = vand.u32 %v50, 4294901760
    %2637 = vmatpush1.msra.mxu0 %v2636
    %2638 = vmatprep.subr.mxu0 0.0
    %v2639 = vand.u32 %v51, 4294901760
    %2640 = vmatpush1.msra.mxu0 %v2639
    %2641 = vmatprep.subr.mxu0 0.0
    %v2642 = vand.u32 %v52, 4294901760
    %2643 = vmatpush1.msra.mxu0 %v2642
    %2644 = vmatprep.subr.mxu0 0.0
    %v2645 = vand.u32 %v53, 4294901760
    %2646 = vmatpush1.msra.mxu0 %v2645
    %2647 = vmatprep.subr.mxu0 0.0
    %v2648 = vand.u32 %v54, 4294901760
    %2649 = vmatpush1.msra.mxu0 %v2648
    %2650 = vmatprep.subr.mxu0 0.0
    %v2651 = vand.u32 %v55, 4294901760
    %2652 = vmatpush1.msra.mxu0 %v2651
    %2653 = vmatprep.subr.mxu0 0.0
    %v2654 = vand.u32 %v56, 4294901760
    %2655 = vmatpush1.msra.mxu0 %v2654
    %2656 = vmatprep.subr.mxu0 0.0
    %2657 = vmatpush1.msra.mxu0 0.0
    %2658 = vmatprep.subr.mxu0 0.0
    %2659 = vmatpush1.msra.mxu0 0.0
    %2660 = vmatprep.subr.mxu0 0.0
    %2661 = vmatpush1.msra.mxu0 0.0
    %2662 = vmatprep.subr.mxu0 0.0
    %2663 = vmatpush1.msra.mxu0 0.0
    %2664 = vmatprep.subr.mxu0 0.0
    %2665 = vmatpush1.msra.mxu0 0.0
    %2666 = vmatprep.subr.mxu0 0.0
    %2667 = vmatpush1.msra.mxu0 0.0
    %2668 = vmatprep.subr.mxu0 0.0
    %2669 = vmatpush1.msra.mxu0 0.0
    %2670 = vmatprep.subr.mxu0 0.0
    %2671 = vmatpush1.msra.mxu0 0.0
    %2672 = vmatprep.subr.mxu0 0.0
    %2673 = vmatpush1.msra.mxu0 0.0
    %2674 = vmatprep.subr.mxu0 0.0
    %2675 = vmatpush1.msra.mxu0 0.0
    %2676 = vmatprep.subr.mxu0 0.0
    %2677 = vmatpush1.msra.mxu0 0.0
    %2678 = vmatprep.subr.mxu0 0.0
    %2679 = vmatpush1.msra.mxu0 0.0
    %2680 = vmatprep.subr.mxu0 0.0
    %2681 = vmatpush1.msra.mxu0 0.0
    %2682 = vmatprep.subr.mxu0 0.0
    %2683 = vmatpush1.msra.mxu0 0.0
    %2684 = vmatprep.subr.mxu0 0.0
    %2685 = vmatpush1.msra.mxu0 0.0
    %2686 = vmatprep.subr.mxu0 0.0
    %2687 = vmatpush1.msra.mxu0 0.0
    %2688 = vmatprep.mubr.f32.mxu0 0.0
    %v2689 = vand.u32 %v1483, 4294901760
    %2690 = vmatmul.mubr.f32.gmra.mrb[0].mxu0 %v2689
    %v2691 = vpop.f32.mrb[0].mxu0
    %v2692 = vadd.f32 %v2515, %v2691
    %v2693 = vpop.f32.mrb[0].mxu0
    %2694 = vmatprep.mubr.f32.mxu0 0.0
    %v2695 = vand.u32 %v1484, 4294901760
    %2696 = vmatmul.mubr.f32.gmra.mrb[0].mxu0 %v2695
    %v2697 = vpop.f32.mrb[0].mxu0
    %v2698 = vadd.f32 %v2521, %v2697
    %v2699 = vpop.f32.mrb[0].mxu0
    %2700 = vmatprep.mubr.f32.mxu0 0.0
    %v2701 = vand.u32 %v1485, 4294901760
    %2702 = vmatmul.mubr.f32.gmra.mrb[0].mxu0 %v2701
    %v2703 = vpop.f32.mrb[0].mxu0
    %v2704 = vadd.f32 %v2527, %v2703
    %v2705 = vpop.f32.mrb[0].mxu0
    %2706 = vmatprep.mubr.f32.mxu0 0.0
    %v2707 = vand.u32 %v1486, 4294901760
    %2708 = vmatmul.mubr.f32.gmra.mrb[0].mxu0 %v2707
    %v2709 = vpop.f32.mrb[0].mxu0
    %v2710 = vadd.f32 %v2533, %v2709
    %v2711 = vpop.f32.mrb[0].mxu0
    %2712 = vmatprep.mubr.f32.mxu0 0.0
    %v2713 = vand.u32 %v1487, 4294901760
    %2714 = vmatmul.mubr.f32.gmra.mrb[0].mxu0 %v2713
    %v2715 = vpop.f32.mrb[0].mxu0
    %v2716 = vadd.f32 %v2539, %v2715
    %v2717 = vpop.f32.mrb[0].mxu0
    %2718 = vmatprep.mubr.f32.mxu0 0.0
    %v2719 = vand.u32 %v1488, 4294901760
    %2720 = vmatmul.mubr.f32.gmra.mrb[0].mxu0 %v2719
    %v2721 = vpop.f32.mrb[0].mxu0
    %v2722 = vadd.f32 %v2545, %v2721
    %v2723 = vpop.f32.mrb[0].mxu0
    %2724 = vmatprep.mubr.f32.mxu0 0.0
    %v2725 = vand.u32 %v1489, 4294901760
    %2726 = vmatmul.mubr.f32.gmra.mrb[0].mxu0 %v2725
    %v2727 = vpop.f32.mrb[0].mxu0
    %v2728 = vadd.f32 %v2551, %v2727
    %v2729 = vpop.f32.mrb[0].mxu0
    %2730 = vmatprep.mubr.f32.mxu0 0.0
    %v2731 = vand.u32 %v1490, 4294901760
    %2732 = vmatmul.mubr.f32.gmra.mrb[0].mxu0 %v2731
    %v2733 = vpop.f32.mrb[0].mxu0
    %v2734 = vadd.f32 %v2557, %v2733
    %v2735 = vpop.f32.mrb[0].mxu0
    %2736 = vmatprep.mubr.f32.mxu0 0.0
    %v2737 = vand.u32 %v1491, 4294901760
    %2738 = vmatmul.mubr.f32.gmra.mrb[0].mxu0 %v2737
    %v2739 = vpop.f32.mrb[0].mxu0
    %v2740 = vadd.f32 %v2563, %v2739
    %v2741 = vpop.f32.mrb[0].mxu0
    %2742 = vmatprep.mubr.f32.mxu0 0.0
    %v2743 = vand.u32 %v1492, 4294901760
    %2744 = vmatmul.mubr.f32.gmra.mrb[0].mxu0 %v2743
    %v2745 = vpop.f32.mrb[0].mxu0
    %v2746 = vadd.f32 %v2569, %v2745
    %v2747 = vpop.f32.mrb[0].mxu0
    %2748 = vmatprep.mubr.f32.mxu0 0.0
    %v2749 = vand.u32 %v1493, 4294901760
    %2750 = vmatmul.mubr.f32.gmra.mrb[0].mxu0 %v2749
    %v2751 = vpop.f32.mrb[0].mxu0
    %v2752 = vadd.f32 %v2575, %v2751
    %v2753 = vpop.f32.mrb[0].mxu0
    %2754 = vmatprep.mubr.f32.mxu0 0.0
    %v2755 = vand.u32 %v1494, 4294901760
    %2756 = vmatmul.mubr.f32.gmra.mrb[0].mxu0 %v2755
    %v2757 = vpop.f32.mrb[0].mxu0
    %v2758 = vadd.f32 %v2581, %v2757
    %v2759 = vpop.f32.mrb[0].mxu0
    %2760 = vmatprep.mubr.f32.mxu0 0.0
    %v2761 = vand.u32 %v1495, 4294901760
    %2762 = vmatmul.mubr.f32.gmra.mrb[0].mxu0 %v2761
    %v2763 = vpop.f32.mrb[0].mxu0
    %v2764 = vadd.f32 %v2587, %v2763
    %v2765 = vpop.f32.mrb[0].mxu0
    %2766 = vmatprep.mubr.f32.mxu0 0.0
    %v2767 = vand.u32 %v1496, 4294901760
    %2768 = vmatmul.mubr.f32.gmra.mrb[0].mxu0 %v2767
    %v2769 = vpop.f32.mrb[0].mxu0
    %v2770 = vadd.f32 %v2593, %v2769
    %v2771 = vpop.f32.mrb[0].mxu0
    %2772 = vmatprep.mubr.f32.mxu0 0.0
    %v2773 = vand.u32 %v1497, 4294901760
    %2774 = vmatmul.mubr.f32.gmra.mrb[0].mxu0 %v2773
    %v2775 = vpop.f32.mrb[0].mxu0
    %v2776 = vadd.f32 %v2599, %v2775
    %v2777 = vpop.f32.mrb[0].mxu0
    %2778 = vmatprep.mubr.f32.mxu0 0.0
    %v2779 = vand.u32 %v1498, 4294901760
    %2780 = vmatmul.mubr.f32.gmra.mrb[0].mxu0 %v2779
    %v2781 = vpop.f32.mrb[0].mxu0
    %v2782 = vadd.f32 %v2605, %v2781
    %v2783 = vpop.f32.mrb[0].mxu0
    %2784 = vdwg.mxu0
    %2785 = vst.msk [vmem:[%s9] sm:$0xff] %vm57, %v2692
    %2786 = vst.msk [vmem:[%s9 + $0x8] sm:$0xff] %vm57, %v2698
    %2787 = vst.msk [vmem:[%s9 + $0x10] sm:$0xff] %vm57, %v2704
    %2788 = vst.msk [vmem:[%s9 + $0x18] sm:$0xff] %vm57, %v2710
    %2789 = vst.msk [vmem:[%s9 + $0x20] sm:$0xff] %vm57, %v2716
    %2790 = vst.msk [vmem:[%s9 + $0x28] sm:$0xff] %vm57, %v2722
    %2791 = vst.msk [vmem:[%s9 + $0x30] sm:$0xff] %vm57, %v2728
    %2792 = vst.msk [vmem:[%s9 + $0x38] sm:$0xff] %vm57, %v2734
    %2793 = vst.msk [vmem:[%s9 + $0x40] sm:$0xff] %vm57, %v2740
    %2794 = vst.msk [vmem:[%s9 + $0x48] sm:$0xff] %vm57, %v2746
    %2795 = vst.msk [vmem:[%s9 + $0x50] sm:$0xff] %vm57, %v2752
    %2796 = vst.msk [vmem:[%s9 + $0x58] sm:$0xff] %vm57, %v2758
    %2797 = vst.msk [vmem:[%s9 + $0x60] sm:$0xff] %vm57, %v2764
    %2798 = vst.msk [vmem:[%s9 + $0x68] sm:$0xff] %vm57, %v2770
    %2799 = vst.msk [vmem:[%s9 + $0x70] sm:$0xff] %vm57, %v2776
    %2800 = vst.msk [vmem:[%s9 + $0x78] sm:$0xff] %vm57, %v2782
    %v2802 = vsel %vm57, %v2692, 0
    %v2805 = vsel %vm57, %v2698, 0
    %v2808 = vsel %vm57, %v2704, 0
    %v2811 = vsel %vm57, %v2710, 0
    %v2814 = vsel %vm57, %v2716, 0
    %v2817 = vsel %vm57, %v2722, 0
    %v2820 = vsel %vm57, %v2728, 0
    %v2823 = vsel %vm57, %v2734, 0
    %v2826 = vsel %vm57, %v2740, 0
    %v2829 = vsel %vm57, %v2746, 0
    %v2832 = vsel %vm57, %v2752, 0
    %v2835 = vsel %vm57, %v2758, 0
    %v2838 = vsel %vm57, %v2764, 0
    %v2841 = vsel %vm57, %v2770, 0
    %v2844 = vsel %vm57, %v2776, 0
    %v2847 = vsel %vm57, %v2782, 0
    %2849 = vmatprep.subr.mxu0 0.0
    %v2850 = vand.u32 %v2802, 4294901760
    %2851 = vmatpush1.xpose.msra.mxu0 %v2850
    %2852 = vmatprep.subr.mxu0 0.0
    %v2853 = vand.u32 %v2805, 4294901760
    %2854 = vmatpush1.xpose.msra.mxu0 %v2853
    %2855 = vmatprep.subr.mxu0 0.0
    %v2856 = vand.u32 %v2808, 4294901760
    %2857 = vmatpush1.xpose.msra.mxu0 %v2856
    %2858 = vmatprep.subr.mxu0 0.0
    %v2859 = vand.u32 %v2811, 4294901760
    %2860 = vmatpush1.xpose.msra.mxu0 %v2859
    %2861 = vmatprep.subr.mxu0 0.0
    %v2862 = vand.u32 %v2814, 4294901760
    %2863 = vmatpush1.xpose.msra.mxu0 %v2862
    %2864 = vmatprep.subr.mxu0 0.0
    %v2865 = vand.u32 %v2817, 4294901760
    %2866 = vmatpush1.xpose.msra.mxu0 %v2865
    %2867 = vmatprep.subr.mxu0 0.0
    %v2868 = vand.u32 %v2820, 4294901760
    %2869 = vmatpush1.xpose.msra.mxu0 %v2868
    %2870 = vmatprep.subr.mxu0 0.0
    %v2871 = vand.u32 %v2823, 4294901760
    %2872 = vmatpush1.xpose.msra.mxu0 %v2871
    %2873 = vmatprep.subr.mxu0 0.0
    %v2874 = vand.u32 %v2826, 4294901760
    %2875 = vmatpush1.xpose.msra.mxu0 %v2874
    %2876 = vmatprep.subr.mxu0 0.0
    %v2877 = vand.u32 %v2829, 4294901760
    %2878 = vmatpush1.xpose.msra.mxu0 %v2877
    %2879 = vmatprep.subr.mxu0 0.0
    %v2880 = vand.u32 %v2832, 4294901760
    %2881 = vmatpush1.xpose.msra.mxu0 %v2880
    %2882 = vmatprep.subr.mxu0 0.0
    %v2883 = vand.u32 %v2835, 4294901760
    %2884 = vmatpush1.xpose.msra.mxu0 %v2883
    %2885 = vmatprep.subr.mxu0 0.0
    %v2886 = vand.u32 %v2838, 4294901760
    %2887 = vmatpush1.xpose.msra.mxu0 %v2886
    %2888 = vmatprep.subr.mxu0 0.0
    %v2889 = vand.u32 %v2841, 4294901760
    %2890 = vmatpush1.xpose.msra.mxu0 %v2889
    %2891 = vmatprep.subr.mxu0 0.0
    %v2892 = vand.u32 %v2844, 4294901760
    %2893 = vmatpush1.xpose.msra.mxu0 %v2892
    %2894 = vmatprep.subr.mxu0 0.0
    %v2895 = vand.u32 %v2847, 4294901760
    %2896 = vmatpush1.xpose.msra.mxu0 %v2895
    %2897 = vmatprep.subr.mxu0 0.0
    %2898 = vmatpush1.xpose.msra.mxu0 0.0
    %2899 = vmatprep.subr.mxu0 0.0
    %2900 = vmatpush1.xpose.msra.mxu0 0.0
    %2901 = vmatprep.subr.mxu0 0.0
    %2902 = vmatpush1.xpose.msra.mxu0 0.0
    %2903 = vmatprep.subr.mxu0 0.0
    %2904 = vmatpush1.xpose.msra.mxu0 0.0
    %2905 = vmatprep.subr.mxu0 0.0
    %2906 = vmatpush1.xpose.msra.mxu0 0.0
    %2907 = vmatprep.subr.mxu0 0.0
    %2908 = vmatpush1.xpose.msra.mxu0 0.0
    %2909 = vmatprep.subr.mxu0 0.0
    %2910 = vmatpush1.xpose.msra.mxu0 0.0
    %2911 = vmatprep.subr.mxu0 0.0
    %2912 = vmatpush1.xpose.msra.mxu0 0.0
    %2913 = vmatprep.subr.mxu0 0.0
    %2914 = vmatpush1.xpose.msra.mxu0 0.0
    %2915 = vmatprep.subr.mxu0 0.0
    %2916 = vmatpush1.xpose.msra.mxu0 0.0
    %2917 = vmatprep.subr.mxu0 0.0
    %2918 = vmatpush1.xpose.msra.mxu0 0.0
    %2919 = vmatprep.subr.mxu0 0.0
    %2920 = vmatpush1.xpose.msra.mxu0 0.0
    %2921 = vmatprep.subr.mxu0 0.0
    %2922 = vmatpush1.xpose.msra.mxu0 0.0
    %2923 = vmatprep.subr.mxu0 0.0
    %2924 = vmatpush1.xpose.msra.mxu0 0.0
    %2925 = vmatprep.subr.mxu0 0.0
    %2926 = vmatpush1.xpose.msra.mxu0 0.0
    %2927 = vmatprep.subr.mxu0 0.0
    %2928 = vmatpush1.xpose.msra.mxu0 0.0
    %2929 = vmatprep.mubr.f32.mxu0 0.0
    %v2930 = vand.u32 %v2802, 4294901760
    %v2931 = vsub.f32 %v2802, %v2930
    %v2932 = vand.u32 %v2931, 4294901760
    %v2933 = vsub.f32 %v2931, %v2932
    %v2934 = vand.u32 %v2933, 4294901760
    %2935 = vmatmul.mubr.f32.gmra.mrb[0].mxu0 %v2934
    %v2936 = vpop.f32.mrb[0].mxu0
    %v2937 = vadd.f32 0.0, %v2936
    %v2938 = vpop.f32.mrb[0].mxu0
    %2939 = vmatprep.mubr.f32.mxu0 0.0
    %v2940 = vand.u32 %v2805, 4294901760
    %v2941 = vsub.f32 %v2805, %v2940
    %v2942 = vand.u32 %v2941, 4294901760
    %v2943 = vsub.f32 %v2941, %v2942
    %v2944 = vand.u32 %v2943, 4294901760
    %2945 = vmatmul.mubr.f32.gmra.mrb[0].mxu0 %v2944
    %v2946 = vpop.f32.mrb[0].mxu0
    %v2947 = vadd.f32 0.0, %v2946
    %v2948 = vpop.f32.mrb[0].mxu0
    %2949 = vmatprep.mubr.f32.mxu0 0.0
    %v2950 = vand.u32 %v2808, 4294901760
    %v2951 = vsub.f32 %v2808, %v2950
    %v2952 = vand.u32 %v2951, 4294901760
    %v2953 = vsub.f32 %v2951, %v2952
    %v2954 = vand.u32 %v2953, 4294901760
    %2955 = vmatmul.mubr.f32.gmra.mrb[0].mxu0 %v2954
    %v2956 = vpop.f32.mrb[0].mxu0
    %v2957 = vadd.f32 0.0, %v2956
    %v2958 = vpop.f32.mrb[0].mxu0
    %2959 = vmatprep.mubr.f32.mxu0 0.0
    %v2960 = vand.u32 %v2811, 4294901760
    %v2961 = vsub.f32 %v2811, %v2960
    %v2962 = vand.u32 %v2961, 4294901760
    %v2963 = vsub.f32 %v2961, %v2962
    %v2964 = vand.u32 %v2963, 4294901760
    %2965 = vmatmul.mubr.f32.gmra.mrb[0].mxu0 %v2964
    %v2966 = vpop.f32.mrb[0].mxu0
    %v2967 = vadd.f32 0.0, %v2966
    %v2968 = vpop.f32.mrb[0].mxu0
    %2969 = vmatprep.mubr.f32.mxu0 0.0
    %v2970 = vand.u32 %v2814, 4294901760
    %v2971 = vsub.f32 %v2814, %v2970
    %v2972 = vand.u32 %v2971, 4294901760
    %v2973 = vsub.f32 %v2971, %v2972
    %v2974 = vand.u32 %v2973, 4294901760
    %2975 = vmatmul.mubr.f32.gmra.mrb[0].mxu0 %v2974
    %v2976 = vpop.f32.mrb[0].mxu0
    %v2977 = vadd.f32 0.0, %v2976
    %v2978 = vpop.f32.mrb[0].mxu0
    %2979 = vmatprep.mubr.f32.mxu0 0.0
    %v2980 = vand.u32 %v2817, 4294901760
    %v2981 = vsub.f32 %v2817, %v2980
    %v2982 = vand.u32 %v2981, 4294901760
    %v2983 = vsub.f32 %v2981, %v2982
    %v2984 = vand.u32 %v2983, 4294901760
    %2985 = vmatmul.mubr.f32.gmra.mrb[0].mxu0 %v2984
    %v2986 = vpop.f32.mrb[0].mxu0
    %v2987 = vadd.f32 0.0, %v2986
    %v2988 = vpop.f32.mrb[0].mxu0
    %2989 = vmatprep.mubr.f32.mxu0 0.0
    %v2990 = vand.u32 %v2820, 4294901760
    %v2991 = vsub.f32 %v2820, %v2990
    %v2992 = vand.u32 %v2991, 4294901760
    %v2993 = vsub.f32 %v2991, %v2992
    %v2994 = vand.u32 %v2993, 4294901760
    %2995 = vmatmul.mubr.f32.gmra.mrb[0].mxu0 %v2994
    %v2996 = vpop.f32.mrb[0].mxu0
    %v2997 = vadd.f32 0.0, %v2996
    %v2998 = vpop.f32.mrb[0].mxu0
    %2999 = vmatprep.mubr.f32.mxu0 0.0
    %v3000 = vand.u32 %v2823, 4294901760
    %v3001 = vsub.f32 %v2823, %v3000
    %v3002 = vand.u32 %v3001, 4294901760
    %v3003 = vsub.f32 %v3001, %v3002
    %v3004 = vand.u32 %v3003, 4294901760
    %3005 = vmatmul.mubr.f32.gmra.mrb[0].mxu0 %v3004
    %v3006 = vpop.f32.mrb[0].mxu0
    %v3007 = vadd.f32 0.0, %v3006
    %v3008 = vpop.f32.mrb[0].mxu0
    %3009 = vmatprep.mubr.f32.mxu0 0.0
    %v3010 = vand.u32 %v2826, 4294901760
    %v3011 = vsub.f32 %v2826, %v3010
    %v3012 = vand.u32 %v3011, 4294901760
    %v3013 = vsub.f32 %v3011, %v3012
    %v3014 = vand.u32 %v3013, 4294901760
    %3015 = vmatmul.mubr.f32.gmra.mrb[0].mxu0 %v3014
    %v3016 = vpop.f32.mrb[0].mxu0
    %v3017 = vadd.f32 0.0, %v3016
    %v3018 = vpop.f32.mrb[0].mxu0
    %3019 = vmatprep.mubr.f32.mxu0 0.0
    %v3020 = vand.u32 %v2829, 4294901760
    %v3021 = vsub.f32 %v2829, %v3020
    %v3022 = vand.u32 %v3021, 4294901760
    %v3023 = vsub.f32 %v3021, %v3022
    %v3024 = vand.u32 %v3023, 4294901760
    %3025 = vmatmul.mubr.f32.gmra.mrb[0].mxu0 %v3024
    %v3026 = vpop.f32.mrb[0].mxu0
    %v3027 = vadd.f32 0.0, %v3026
    %v3028 = vpop.f32.mrb[0].mxu0
    %3029 = vmatprep.mubr.f32.mxu0 0.0
    %v3030 = vand.u32 %v2832, 4294901760
    %v3031 = vsub.f32 %v2832, %v3030
    %v3032 = vand.u32 %v3031, 4294901760
    %v3033 = vsub.f32 %v3031, %v3032
    %v3034 = vand.u32 %v3033, 4294901760
    %3035 = vmatmul.mubr.f32.gmra.mrb[0].mxu0 %v3034
    %v3036 = vpop.f32.mrb[0].mxu0
    %v3037 = vadd.f32 0.0, %v3036
    %v3038 = vpop.f32.mrb[0].mxu0
    %3039 = vmatprep.mubr.f32.mxu0 0.0
    %v3040 = vand.u32 %v2835, 4294901760
    %v3041 = vsub.f32 %v2835, %v3040
    %v3042 = vand.u32 %v3041, 4294901760
    %v3043 = vsub.f32 %v3041, %v3042
    %v3044 = vand.u32 %v3043, 4294901760
    %3045 = vmatmul.mubr.f32.gmra.mrb[0].mxu0 %v3044
    %v3046 = vpop.f32.mrb[0].mxu0
    %v3047 = vadd.f32 0.0, %v3046
    %v3048 = vpop.f32.mrb[0].mxu0
    %3049 = vmatprep.mubr.f32.mxu0 0.0
    %v3050 = vand.u32 %v2838, 4294901760
    %v3051 = vsub.f32 %v2838, %v3050
    %v3052 = vand.u32 %v3051, 4294901760
    %v3053 = vsub.f32 %v3051, %v3052
    %v3054 = vand.u32 %v3053, 4294901760
    %3055 = vmatmul.mubr.f32.gmra.mrb[0].mxu0 %v3054
    %v3056 = vpop.f32.mrb[0].mxu0
    %v3057 = vadd.f32 0.0, %v3056
    %v3058 = vpop.f32.mrb[0].mxu0
    %3059 = vmatprep.mubr.f32.mxu0 0.0
    %v3060 = vand.u32 %v2841, 4294901760
    %v3061 = vsub.f32 %v2841, %v3060
    %v3062 = vand.u32 %v3061, 4294901760
    %v3063 = vsub.f32 %v3061, %v3062
    %v3064 = vand.u32 %v3063, 4294901760
    %3065 = vmatmul.mubr.f32.gmra.mrb[0].mxu0 %v3064
    %v3066 = vpop.f32.mrb[0].mxu0
    %v3067 = vadd.f32 0.0, %v3066
    %v3068 = vpop.f32.mrb[0].mxu0
    %3069 = vmatprep.mubr.f32.mxu0 0.0
    %v3070 = vand.u32 %v2844, 4294901760
    %v3071 = vsub.f32 %v2844, %v3070
    %v3072 = vand.u32 %v3071, 4294901760
    %v3073 = vsub.f32 %v3071, %v3072
    %v3074 = vand.u32 %v3073, 4294901760
    %3075 = vmatmul.mubr.f32.gmra.mrb[0].mxu0 %v3074
    %v3076 = vpop.f32.mrb[0].mxu0
    %v3077 = vadd.f32 0.0, %v3076
    %v3078 = vpop.f32.mrb[0].mxu0
    %3079 = vmatprep.mubr.f32.mxu0 0.0
    %v3080 = vand.u32 %v2847, 4294901760
    %v3081 = vsub.f32 %v2847, %v3080
    %v3082 = vand.u32 %v3081, 4294901760
    %v3083 = vsub.f32 %v3081, %v3082
    %v3084 = vand.u32 %v3083, 4294901760
    %3085 = vmatmul.mubr.f32.gmra.mrb[0].mxu0 %v3084
    %v3086 = vpop.f32.mrb[0].mxu0
    %v3087 = vadd.f32 0.0, %v3086
    %v3088 = vpop.f32.mrb[0].mxu0
    %3089 = vdwg.mxu0
    %3090 = vmatprep.subr.mxu0 0.0
    %v3091 = vand.u32 %v2802, 4294901760
    %v3092 = vsub.f32 %v2802, %v3091
    %v3093 = vand.u32 %v3092, 4294901760
    %v3094 = vsub.f32 %v3092, %v3093
    %v3095 = vand.u32 %v3094, 4294901760
    %3096 = vmatpush1.xpose.msra.mxu0 %v3095
    %3097 = vmatprep.subr.mxu0 0.0
    %v3098 = vand.u32 %v2805, 4294901760
    %v3099 = vsub.f32 %v2805, %v3098
    %v3100 = vand.u32 %v3099, 4294901760
    %v3101 = vsub.f32 %v3099, %v3100
    %v3102 = vand.u32 %v3101, 4294901760
    %3103 = vmatpush1.xpose.msra.mxu0 %v3102
    %3104 = vmatprep.subr.mxu0 0.0
    %v3105 = vand.u32 %v2808, 4294901760
    %v3106 = vsub.f32 %v2808, %v3105
    %v3107 = vand.u32 %v3106, 4294901760
    %v3108 = vsub.f32 %v3106, %v3107
    %v3109 = vand.u32 %v3108, 4294901760
    %3110 = vmatpush1.xpose.msra.mxu0 %v3109
    %3111 = vmatprep.subr.mxu0 0.0
    %v3112 = vand.u32 %v2811, 4294901760
    %v3113 = vsub.f32 %v2811, %v3112
    %v3114 = vand.u32 %v3113, 4294901760
    %v3115 = vsub.f32 %v3113, %v3114
    %v3116 = vand.u32 %v3115, 4294901760
    %3117 = vmatpush1.xpose.msra.mxu0 %v3116
    %3118 = vmatprep.subr.mxu0 0.0
    %v3119 = vand.u32 %v2814, 4294901760
    %v3120 = vsub.f32 %v2814, %v3119
    %v3121 = vand.u32 %v3120, 4294901760
    %v3122 = vsub.f32 %v3120, %v3121
    %v3123 = vand.u32 %v3122, 4294901760
    %3124 = vmatpush1.xpose.msra.mxu0 %v3123
    %3125 = vmatprep.subr.mxu0 0.0
    %v3126 = vand.u32 %v2817, 4294901760
    %v3127 = vsub.f32 %v2817, %v3126
    %v3128 = vand.u32 %v3127, 4294901760
    %v3129 = vsub.f32 %v3127, %v3128
    %v3130 = vand.u32 %v3129, 4294901760
    %3131 = vmatpush1.xpose.msra.mxu0 %v3130
    %3132 = vmatprep.subr.mxu0 0.0
    %v3133 = vand.u32 %v2820, 4294901760
    %v3134 = vsub.f32 %v2820, %v3133
    %v3135 = vand.u32 %v3134, 4294901760
    %v3136 = vsub.f32 %v3134, %v3135
    %v3137 = vand.u32 %v3136, 4294901760
    %3138 = vmatpush1.xpose.msra.mxu0 %v3137
    %3139 = vmatprep.subr.mxu0 0.0
    %v3140 = vand.u32 %v2823, 4294901760
    %v3141 = vsub.f32 %v2823, %v3140
    %v3142 = vand.u32 %v3141, 4294901760
    %v3143 = vsub.f32 %v3141, %v3142
    %v3144 = vand.u32 %v3143, 4294901760
    %3145 = vmatpush1.xpose.msra.mxu0 %v3144
    %3146 = vmatprep.subr.mxu0 0.0
    %v3147 = vand.u32 %v2826, 4294901760
    %v3148 = vsub.f32 %v2826, %v3147
    %v3149 = vand.u32 %v3148, 4294901760
    %v3150 = vsub.f32 %v3148, %v3149
    %v3151 = vand.u32 %v3150, 4294901760
    %3152 = vmatpush1.xpose.msra.mxu0 %v3151
    %3153 = vmatprep.subr.mxu0 0.0
    %v3154 = vand.u32 %v2829, 4294901760
    %v3155 = vsub.f32 %v2829, %v3154
    %v3156 = vand.u32 %v3155, 4294901760
    %v3157 = vsub.f32 %v3155, %v3156
    %v3158 = vand.u32 %v3157, 4294901760
    %3159 = vmatpush1.xpose.msra.mxu0 %v3158
    %3160 = vmatprep.subr.mxu0 0.0
    %v3161 = vand.u32 %v2832, 4294901760
    %v3162 = vsub.f32 %v2832, %v3161
    %v3163 = vand.u32 %v3162, 4294901760
    %v3164 = vsub.f32 %v3162, %v3163
    %v3165 = vand.u32 %v3164, 4294901760
    %3166 = vmatpush1.xpose.msra.mxu0 %v3165
    %3167 = vmatprep.subr.mxu0 0.0
    %v3168 = vand.u32 %v2835, 4294901760
    %v3169 = vsub.f32 %v2835, %v3168
    %v3170 = vand.u32 %v3169, 4294901760
    %v3171 = vsub.f32 %v3169, %v3170
    %v3172 = vand.u32 %v3171, 4294901760
    %3173 = vmatpush1.xpose.msra.mxu0 %v3172
    %3174 = vmatprep.subr.mxu0 0.0
    %v3175 = vand.u32 %v2838, 4294901760
    %v3176 = vsub.f32 %v2838, %v3175
    %v3177 = vand.u32 %v3176, 4294901760
    %v3178 = vsub.f32 %v3176, %v3177
    %v3179 = vand.u32 %v3178, 4294901760
    %3180 = vmatpush1.xpose.msra.mxu0 %v3179
    %3181 = vmatprep.subr.mxu0 0.0
    %v3182 = vand.u32 %v2841, 4294901760
    %v3183 = vsub.f32 %v2841, %v3182
    %v3184 = vand.u32 %v3183, 4294901760
    %v3185 = vsub.f32 %v3183, %v3184
    %v3186 = vand.u32 %v3185, 4294901760
    %3187 = vmatpush1.xpose.msra.mxu0 %v3186
    %3188 = vmatprep.subr.mxu0 0.0
    %v3189 = vand.u32 %v2844, 4294901760
    %v3190 = vsub.f32 %v2844, %v3189
    %v3191 = vand.u32 %v3190, 4294901760
    %v3192 = vsub.f32 %v3190, %v3191
    %v3193 = vand.u32 %v3192, 4294901760
    %3194 = vmatpush1.xpose.msra.mxu0 %v3193
    %3195 = vmatprep.subr.mxu0 0.0
    %v3196 = vand.u32 %v2847, 4294901760
    %v3197 = vsub.f32 %v2847, %v3196
    %v3198 = vand.u32 %v3197, 4294901760
    %v3199 = vsub.f32 %v3197, %v3198
    %v3200 = vand.u32 %v3199, 4294901760
    %3201 = vmatpush1.xpose.msra.mxu0 %v3200
    %3202 = vmatprep.subr.mxu0 0.0
    %3203 = vmatpush1.xpose.msra.mxu0 0.0
    %3204 = vmatprep.subr.mxu0 0.0
    %3205 = vmatpush1.xpose.msra.mxu0 0.0
    %3206 = vmatprep.subr.mxu0 0.0
    %3207 = vmatpush1.xpose.msra.mxu0 0.0
    %3208 = vmatprep.subr.mxu0 0.0
    %3209 = vmatpush1.xpose.msra.mxu0 0.0
    %3210 = vmatprep.subr.mxu0 0.0
    %3211 = vmatpush1.xpose.msra.mxu0 0.0
    %3212 = vmatprep.subr.mxu0 0.0
    %3213 = vmatpush1.xpose.msra.mxu0 0.0
    %3214 = vmatprep.subr.mxu0 0.0
    %3215 = vmatpush1.xpose.msra.mxu0 0.0
    %3216 = vmatprep.subr.mxu0 0.0
    %3217 = vmatpush1.xpose.msra.mxu0 0.0
    %3218 = vmatprep.subr.mxu0 0.0
    %3219 = vmatpush1.xpose.msra.mxu0 0.0
    %3220 = vmatprep.subr.mxu0 0.0
    %3221 = vmatpush1.xpose.msra.mxu0 0.0
    %3222 = vmatprep.subr.mxu0 0.0
    %3223 = vmatpush1.xpose.msra.mxu0 0.0
    %3224 = vmatprep.subr.mxu0 0.0
    %3225 = vmatpush1.xpose.msra.mxu0 0.0
    %3226 = vmatprep.subr.mxu0 0.0
    %3227 = vmatpush1.xpose.msra.mxu0 0.0
    %3228 = vmatprep.subr.mxu0 0.0
    %3229 = vmatpush1.xpose.msra.mxu0 0.0
    %3230 = vmatprep.subr.mxu0 0.0
    %3231 = vmatpush1.xpose.msra.mxu0 0.0
    %3232 = vmatprep.subr.mxu0 0.0
    %3233 = vmatpush1.xpose.msra.mxu0 0.0
    %3234 = vmatprep.mubr.f32.mxu0 0.0
    %v3235 = vand.u32 %v2802, 4294901760
    %3236 = vmatmul.mubr.f32.gmra.mrb[0].mxu0 %v3235
    %v3237 = vpop.f32.mrb[0].mxu0
    %v3238 = vadd.f32 %v2937, %v3237
    %v3239 = vpop.f32.mrb[0].mxu0
    %3240 = vmatprep.mubr.f32.mxu0 0.0
    %v3241 = vand.u32 %v2805, 4294901760
    %3242 = vmatmul.mubr.f32.gmra.mrb[0].mxu0 %v3241
    %v3243 = vpop.f32.mrb[0].mxu0
    %v3244 = vadd.f32 %v2947, %v3243
    %v3245 = vpop.f32.mrb[0].mxu0
    %3246 = vmatprep.mubr.f32.mxu0 0.0
    %v3247 = vand.u32 %v2808, 4294901760
    %3248 = vmatmul.mubr.f32.gmra.mrb[0].mxu0 %v3247
    %v3249 = vpop.f32.mrb[0].mxu0
    %v3250 = vadd.f32 %v2957, %v3249
    %v3251 = vpop.f32.mrb[0].mxu0
    %3252 = vmatprep.mubr.f32.mxu0 0.0
    %v3253 = vand.u32 %v2811, 4294901760
    %3254 = vmatmul.mubr.f32.gmra.mrb[0].mxu0 %v3253
    %v3255 = vpop.f32.mrb[0].mxu0
    %v3256 = vadd.f32 %v2967, %v3255
    %v3257 = vpop.f32.mrb[0].mxu0
    %3258 = vmatprep.mubr.f32.mxu0 0.0
    %v3259 = vand.u32 %v2814, 4294901760
    %3260 = vmatmul.mubr.f32.gmra.mrb[0].mxu0 %v3259
    %v3261 = vpop.f32.mrb[0].mxu0
    %v3262 = vadd.f32 %v2977, %v3261
    %v3263 = vpop.f32.mrb[0].mxu0
    %3264 = vmatprep.mubr.f32.mxu0 0.0
    %v3265 = vand.u32 %v2817, 4294901760
    %3266 = vmatmul.mubr.f32.gmra.mrb[0].mxu0 %v3265
    %v3267 = vpop.f32.mrb[0].mxu0
    %v3268 = vadd.f32 %v2987, %v3267
    %v3269 = vpop.f32.mrb[0].mxu0
    %3270 = vmatprep.mubr.f32.mxu0 0.0
    %v3271 = vand.u32 %v2820, 4294901760
    %3272 = vmatmul.mubr.f32.gmra.mrb[0].mxu0 %v3271
    %v3273 = vpop.f32.mrb[0].mxu0
    %v3274 = vadd.f32 %v2997, %v3273
    %v3275 = vpop.f32.mrb[0].mxu0
    %3276 = vmatprep.mubr.f32.mxu0 0.0
    %v3277 = vand.u32 %v2823, 4294901760
    %3278 = vmatmul.mubr.f32.gmra.mrb[0].mxu0 %v3277
    %v3279 = vpop.f32.mrb[0].mxu0
    %v3280 = vadd.f32 %v3007, %v3279
    %v3281 = vpop.f32.mrb[0].mxu0
    %3282 = vmatprep.mubr.f32.mxu0 0.0
    %v3283 = vand.u32 %v2826, 4294901760
    %3284 = vmatmul.mubr.f32.gmra.mrb[0].mxu0 %v3283
    %v3285 = vpop.f32.mrb[0].mxu0
    %v3286 = vadd.f32 %v3017, %v3285
    %v3287 = vpop.f32.mrb[0].mxu0
    %3288 = vmatprep.mubr.f32.mxu0 0.0
    %v3289 = vand.u32 %v2829, 4294901760
    %3290 = vmatmul.mubr.f32.gmra.mrb[0].mxu0 %v3289
    %v3291 = vpop.f32.mrb[0].mxu0
    %v3292 = vadd.f32 %v3027, %v3291
    %v3293 = vpop.f32.mrb[0].mxu0
    %3294 = vmatprep.mubr.f32.mxu0 0.0
    %v3295 = vand.u32 %v2832, 4294901760
    %3296 = vmatmul.mubr.f32.gmra.mrb[0].mxu0 %v3295
    %v3297 = vpop.f32.mrb[0].mxu0
    %v3298 = vadd.f32 %v3037, %v3297
    %v3299 = vpop.f32.mrb[0].mxu0
    %3300 = vmatprep.mubr.f32.mxu0 0.0
    %v3301 = vand.u32 %v2835, 4294901760
    %3302 = vmatmul.mubr.f32.gmra.mrb[0].mxu0 %v3301
    %v3303 = vpop.f32.mrb[0].mxu0
    %v3304 = vadd.f32 %v3047, %v3303
    %v3305 = vpop.f32.mrb[0].mxu0
    %3306 = vmatprep.mubr.f32.mxu0 0.0
    %v3307 = vand.u32 %v2838, 4294901760
    %3308 = vmatmul.mubr.f32.gmra.mrb[0].mxu0 %v3307
    %v3309 = vpop.f32.mrb[0].mxu0
    %v3310 = vadd.f32 %v3057, %v3309
    %v3311 = vpop.f32.mrb[0].mxu0
    %3312 = vmatprep.mubr.f32.mxu0 0.0
    %v3313 = vand.u32 %v2841, 4294901760
    %3314 = vmatmul.mubr.f32.gmra.mrb[0].mxu0 %v3313
    %v3315 = vpop.f32.mrb[0].mxu0
    %v3316 = vadd.f32 %v3067, %v3315
    %v3317 = vpop.f32.mrb[0].mxu0
    %3318 = vmatprep.mubr.f32.mxu0 0.0
    %v3319 = vand.u32 %v2844, 4294901760
    %3320 = vmatmul.mubr.f32.gmra.mrb[0].mxu0 %v3319
    %v3321 = vpop.f32.mrb[0].mxu0
    %v3322 = vadd.f32 %v3077, %v3321
    %v3323 = vpop.f32.mrb[0].mxu0
    %3324 = vmatprep.mubr.f32.mxu0 0.0
    %v3325 = vand.u32 %v2847, 4294901760
    %3326 = vmatmul.mubr.f32.gmra.mrb[0].mxu0 %v3325
    %v3327 = vpop.f32.mrb[0].mxu0
    %v3328 = vadd.f32 %v3087, %v3327
    %v3329 = vpop.f32.mrb[0].mxu0
    %3330 = vdwg.mxu0
    %3331 = vmatprep.subr.mxu0 0.0
    %v3332 = vand.u32 %v2802, 4294901760
    %v3333 = vsub.f32 %v2802, %v3332
    %3334 = vmatpush1.xpose.msra.mxu0 %v3333
    %3335 = vmatprep.subr.mxu0 0.0
    %v3336 = vand.u32 %v2805, 4294901760
    %v3337 = vsub.f32 %v2805, %v3336
    %3338 = vmatpush1.xpose.msra.mxu0 %v3337
    %3339 = vmatprep.subr.mxu0 0.0
    %v3340 = vand.u32 %v2808, 4294901760
    %v3341 = vsub.f32 %v2808, %v3340
    %3342 = vmatpush1.xpose.msra.mxu0 %v3341
    %3343 = vmatprep.subr.mxu0 0.0
    %v3344 = vand.u32 %v2811, 4294901760
    %v3345 = vsub.f32 %v2811, %v3344
    %3346 = vmatpush1.xpose.msra.mxu0 %v3345
    %3347 = vmatprep.subr.mxu0 0.0
    %v3348 = vand.u32 %v2814, 4294901760
    %v3349 = vsub.f32 %v2814, %v3348
    %3350 = vmatpush1.xpose.msra.mxu0 %v3349
    %3351 = vmatprep.subr.mxu0 0.0
    %v3352 = vand.u32 %v2817, 4294901760
    %v3353 = vsub.f32 %v2817, %v3352
    %3354 = vmatpush1.xpose.msra.mxu0 %v3353
    %3355 = vmatprep.subr.mxu0 0.0
    %v3356 = vand.u32 %v2820, 4294901760
    %v3357 = vsub.f32 %v2820, %v3356
    %3358 = vmatpush1.xpose.msra.mxu0 %v3357
    %3359 = vmatprep.subr.mxu0 0.0
    %v3360 = vand.u32 %v2823, 4294901760
    %v3361 = vsub.f32 %v2823, %v3360
    %3362 = vmatpush1.xpose.msra.mxu0 %v3361
    %3363 = vmatprep.subr.mxu0 0.0
    %v3364 = vand.u32 %v2826, 4294901760
    %v3365 = vsub.f32 %v2826, %v3364
    %3366 = vmatpush1.xpose.msra.mxu0 %v3365
    %3367 = vmatprep.subr.mxu0 0.0
    %v3368 = vand.u32 %v2829, 4294901760
    %v3369 = vsub.f32 %v2829, %v3368
    %3370 = vmatpush1.xpose.msra.mxu0 %v3369
    %3371 = vmatprep.subr.mxu0 0.0
    %v3372 = vand.u32 %v2832, 4294901760
    %v3373 = vsub.f32 %v2832, %v3372
    %3374 = vmatpush1.xpose.msra.mxu0 %v3373
    %3375 = vmatprep.subr.mxu0 0.0
    %v3376 = vand.u32 %v2835, 4294901760
    %v3377 = vsub.f32 %v2835, %v3376
    %3378 = vmatpush1.xpose.msra.mxu0 %v3377
    %3379 = vmatprep.subr.mxu0 0.0
    %v3380 = vand.u32 %v2838, 4294901760
    %v3381 = vsub.f32 %v2838, %v3380
    %3382 = vmatpush1.xpose.msra.mxu0 %v3381
    %3383 = vmatprep.subr.mxu0 0.0
    %v3384 = vand.u32 %v2841, 4294901760
    %v3385 = vsub.f32 %v2841, %v3384
    %3386 = vmatpush1.xpose.msra.mxu0 %v3385
    %3387 = vmatprep.subr.mxu0 0.0
    %v3388 = vand.u32 %v2844, 4294901760
    %v3389 = vsub.f32 %v2844, %v3388
    %3390 = vmatpush1.xpose.msra.mxu0 %v3389
    %3391 = vmatprep.subr.mxu0 0.0
    %v3392 = vand.u32 %v2847, 4294901760
    %v3393 = vsub.f32 %v2847, %v3392
    %3394 = vmatpush1.xpose.msra.mxu0 %v3393
    %3395 = vmatprep.subr.mxu0 0.0
    %3396 = vmatpush1.xpose.msra.mxu0 0.0
    %3397 = vmatprep.subr.mxu0 0.0
    %3398 = vmatpush1.xpose.msra.mxu0 0.0
    %3399 = vmatprep.subr.mxu0 0.0
    %3400 = vmatpush1.xpose.msra.mxu0 0.0
    %3401 = vmatprep.subr.mxu0 0.0
    %3402 = vmatpush1.xpose.msra.mxu0 0.0
    %3403 = vmatprep.subr.mxu0 0.0
    %3404 = vmatpush1.xpose.msra.mxu0 0.0
    %3405 = vmatprep.subr.mxu0 0.0
    %3406 = vmatpush1.xpose.msra.mxu0 0.0
    %3407 = vmatprep.subr.mxu0 0.0
    %3408 = vmatpush1.xpose.msra.mxu0 0.0
    %3409 = vmatprep.subr.mxu0 0.0
    %3410 = vmatpush1.xpose.msra.mxu0 0.0
    %3411 = vmatprep.subr.mxu0 0.0
    %3412 = vmatpush1.xpose.msra.mxu0 0.0
    %3413 = vmatprep.subr.mxu0 0.0
    %3414 = vmatpush1.xpose.msra.mxu0 0.0
    %3415 = vmatprep.subr.mxu0 0.0
    %3416 = vmatpush1.xpose.msra.mxu0 0.0
    %3417 = vmatprep.subr.mxu0 0.0
    %3418 = vmatpush1.xpose.msra.mxu0 0.0
    %3419 = vmatprep.subr.mxu0 0.0
    %3420 = vmatpush1.xpose.msra.mxu0 0.0
    %3421 = vmatprep.subr.mxu0 0.0
    %3422 = vmatpush1.xpose.msra.mxu0 0.0
    %3423 = vmatprep.subr.mxu0 0.0
    %3424 = vmatpush1.xpose.msra.mxu0 0.0
    %3425 = vmatprep.subr.mxu0 0.0
    %3426 = vmatpush1.xpose.msra.mxu0 0.0
    %3427 = vmatprep.mubr.f32.mxu0 0.0
    %v3428 = vand.u32 %v2802, 4294901760
    %v3429 = vsub.f32 %v2802, %v3428
    %3430 = vmatmul.mubr.f32.gmra.mrb[0].mxu0 %v3429
    %v3431 = vpop.f32.mrb[0].mxu0
    %v3432 = vadd.f32 %v3238, %v3431
    %v3433 = vpop.f32.mrb[0].mxu0
    %3434 = vmatprep.mubr.f32.mxu0 0.0
    %v3435 = vand.u32 %v2805, 4294901760
    %v3436 = vsub.f32 %v2805, %v3435
    %3437 = vmatmul.mubr.f32.gmra.mrb[0].mxu0 %v3436
    %v3438 = vpop.f32.mrb[0].mxu0
    %v3439 = vadd.f32 %v3244, %v3438
    %v3440 = vpop.f32.mrb[0].mxu0
    %3441 = vmatprep.mubr.f32.mxu0 0.0
    %v3442 = vand.u32 %v2808, 4294901760
    %v3443 = vsub.f32 %v2808, %v3442
    %3444 = vmatmul.mubr.f32.gmra.mrb[0].mxu0 %v3443
    %v3445 = vpop.f32.mrb[0].mxu0
    %v3446 = vadd.f32 %v3250, %v3445
    %v3447 = vpop.f32.mrb[0].mxu0
    %3448 = vmatprep.mubr.f32.mxu0 0.0
    %v3449 = vand.u32 %v2811, 4294901760
    %v3450 = vsub.f32 %v2811, %v3449
    %3451 = vmatmul.mubr.f32.gmra.mrb[0].mxu0 %v3450
    %v3452 = vpop.f32.mrb[0].mxu0
    %v3453 = vadd.f32 %v3256, %v3452
    %v3454 = vpop.f32.mrb[0].mxu0
    %3455 = vmatprep.mubr.f32.mxu0 0.0
    %v3456 = vand.u32 %v2814, 4294901760
    %v3457 = vsub.f32 %v2814, %v3456
    %3458 = vmatmul.mubr.f32.gmra.mrb[0].mxu0 %v3457
    %v3459 = vpop.f32.mrb[0].mxu0
    %v3460 = vadd.f32 %v3262, %v3459
    %v3461 = vpop.f32.mrb[0].mxu0
    %3462 = vmatprep.mubr.f32.mxu0 0.0
    %v3463 = vand.u32 %v2817, 4294901760
    %v3464 = vsub.f32 %v2817, %v3463
    %3465 = vmatmul.mubr.f32.gmra.mrb[0].mxu0 %v3464
    %v3466 = vpop.f32.mrb[0].mxu0
    %v3467 = vadd.f32 %v3268, %v3466
    %v3468 = vpop.f32.mrb[0].mxu0
    %3469 = vmatprep.mubr.f32.mxu0 0.0
    %v3470 = vand.u32 %v2820, 4294901760
    %v3471 = vsub.f32 %v2820, %v3470
    %3472 = vmatmul.mubr.f32.gmra.mrb[0].mxu0 %v3471
    %v3473 = vpop.f32.mrb[0].mxu0
    %v3474 = vadd.f32 %v3274, %v3473
    %v3475 = vpop.f32.mrb[0].mxu0
    %3476 = vmatprep.mubr.f32.mxu0 0.0
    %v3477 = vand.u32 %v2823, 4294901760
    %v3478 = vsub.f32 %v2823, %v3477
    %3479 = vmatmul.mubr.f32.gmra.mrb[0].mxu0 %v3478
    %v3480 = vpop.f32.mrb[0].mxu0
    %v3481 = vadd.f32 %v3280, %v3480
    %v3482 = vpop.f32.mrb[0].mxu0
    %3483 = vmatprep.mubr.f32.mxu0 0.0
    %v3484 = vand.u32 %v2826, 4294901760
    %v3485 = vsub.f32 %v2826, %v3484
    %3486 = vmatmul.mubr.f32.gmra.mrb[0].mxu0 %v3485
    %v3487 = vpop.f32.mrb[0].mxu0
    %v3488 = vadd.f32 %v3286, %v3487
    %v3489 = vpop.f32.mrb[0].mxu0
    %3490 = vmatprep.mubr.f32.mxu0 0.0
    %v3491 = vand.u32 %v2829, 4294901760
    %v3492 = vsub.f32 %v2829, %v3491
    %3493 = vmatmul.mubr.f32.gmra.mrb[0].mxu0 %v3492
    %v3494 = vpop.f32.mrb[0].mxu0
    %v3495 = vadd.f32 %v3292, %v3494
    %v3496 = vpop.f32.mrb[0].mxu0
    %3497 = vmatprep.mubr.f32.mxu0 0.0
    %v3498 = vand.u32 %v2832, 4294901760
    %v3499 = vsub.f32 %v2832, %v3498
    %3500 = vmatmul.mubr.f32.gmra.mrb[0].mxu0 %v3499
    %v3501 = vpop.f32.mrb[0].mxu0
    %v3502 = vadd.f32 %v3298, %v3501
    %v3503 = vpop.f32.mrb[0].mxu0
    %3504 = vmatprep.mubr.f32.mxu0 0.0
    %v3505 = vand.u32 %v2835, 4294901760
    %v3506 = vsub.f32 %v2835, %v3505
    %3507 = vmatmul.mubr.f32.gmra.mrb[0].mxu0 %v3506
    %v3508 = vpop.f32.mrb[0].mxu0
    %v3509 = vadd.f32 %v3304, %v3508
    %v3510 = vpop.f32.mrb[0].mxu0
    %3511 = vmatprep.mubr.f32.mxu0 0.0
    %v3512 = vand.u32 %v2838, 4294901760
    %v3513 = vsub.f32 %v2838, %v3512
    %3514 = vmatmul.mubr.f32.gmra.mrb[0].mxu0 %v3513
    %v3515 = vpop.f32.mrb[0].mxu0
    %v3516 = vadd.f32 %v3310, %v3515
    %v3517 = vpop.f32.mrb[0].mxu0
    %3518 = vmatprep.mubr.f32.mxu0 0.0
    %v3519 = vand.u32 %v2841, 4294901760
    %v3520 = vsub.f32 %v2841, %v3519
    %3521 = vmatmul.mubr.f32.gmra.mrb[0].mxu0 %v3520
    %v3522 = vpop.f32.mrb[0].mxu0
    %v3523 = vadd.f32 %v3316, %v3522
    %v3524 = vpop.f32.mrb[0].mxu0
    %3525 = vmatprep.mubr.f32.mxu0 0.0
    %v3526 = vand.u32 %v2844, 4294901760
    %v3527 = vsub.f32 %v2844, %v3526
    %3528 = vmatmul.mubr.f32.gmra.mrb[0].mxu0 %v3527
    %v3529 = vpop.f32.mrb[0].mxu0
    %v3530 = vadd.f32 %v3322, %v3529
    %v3531 = vpop.f32.mrb[0].mxu0
    %3532 = vmatprep.mubr.f32.mxu0 0.0
    %v3533 = vand.u32 %v2847, 4294901760
    %v3534 = vsub.f32 %v2847, %v3533
    %3535 = vmatmul.mubr.f32.gmra.mrb[0].mxu0 %v3534
    %v3536 = vpop.f32.mrb[0].mxu0
    %v3537 = vadd.f32 %v3328, %v3536
    %v3538 = vpop.f32.mrb[0].mxu0
    %3539 = vdwg.mxu0
    %3540 = vmatprep.subr.mxu0 0.0
    %v3541 = vand.u32 %v2802, 4294901760
    %3542 = vmatpush1.xpose.msra.mxu0 %v3541
    %3543 = vmatprep.subr.mxu0 0.0
    %v3544 = vand.u32 %v2805, 4294901760
    %3545 = vmatpush1.xpose.msra.mxu0 %v3544
    %3546 = vmatprep.subr.mxu0 0.0
    %v3547 = vand.u32 %v2808, 4294901760
    %3548 = vmatpush1.xpose.msra.mxu0 %v3547
    %3549 = vmatprep.subr.mxu0 0.0
    %v3550 = vand.u32 %v2811, 4294901760
    %3551 = vmatpush1.xpose.msra.mxu0 %v3550
    %3552 = vmatprep.subr.mxu0 0.0
    %v3553 = vand.u32 %v2814, 4294901760
    %3554 = vmatpush1.xpose.msra.mxu0 %v3553
    %3555 = vmatprep.subr.mxu0 0.0
    %v3556 = vand.u32 %v2817, 4294901760
    %3557 = vmatpush1.xpose.msra.mxu0 %v3556
    %3558 = vmatprep.subr.mxu0 0.0
    %v3559 = vand.u32 %v2820, 4294901760
    %3560 = vmatpush1.xpose.msra.mxu0 %v3559
    %3561 = vmatprep.subr.mxu0 0.0
    %v3562 = vand.u32 %v2823, 4294901760
    %3563 = vmatpush1.xpose.msra.mxu0 %v3562
    %3564 = vmatprep.subr.mxu0 0.0
    %v3565 = vand.u32 %v2826, 4294901760
    %3566 = vmatpush1.xpose.msra.mxu0 %v3565
    %3567 = vmatprep.subr.mxu0 0.0
    %v3568 = vand.u32 %v2829, 4294901760
    %3569 = vmatpush1.xpose.msra.mxu0 %v3568
    %3570 = vmatprep.subr.mxu0 0.0
    %v3571 = vand.u32 %v2832, 4294901760
    %3572 = vmatpush1.xpose.msra.mxu0 %v3571
    %3573 = vmatprep.subr.mxu0 0.0
    %v3574 = vand.u32 %v2835, 4294901760
    %3575 = vmatpush1.xpose.msra.mxu0 %v3574
    %3576 = vmatprep.subr.mxu0 0.0
    %v3577 = vand.u32 %v2838, 4294901760
    %3578 = vmatpush1.xpose.msra.mxu0 %v3577
    %3579 = vmatprep.subr.mxu0 0.0
    %v3580 = vand.u32 %v2841, 4294901760
    %3581 = vmatpush1.xpose.msra.mxu0 %v3580
    %3582 = vmatprep.subr.mxu0 0.0
    %v3583 = vand.u32 %v2844, 4294901760
    %3584 = vmatpush1.xpose.msra.mxu0 %v3583
    %3585 = vmatprep.subr.mxu0 0.0
    %v3586 = vand.u32 %v2847, 4294901760
    %3587 = vmatpush1.xpose.msra.mxu0 %v3586
    %3588 = vmatprep.subr.mxu0 0.0
    %3589 = vmatpush1.xpose.msra.mxu0 0.0
    %3590 = vmatprep.subr.mxu0 0.0
    %3591 = vmatpush1.xpose.msra.mxu0 0.0
    %3592 = vmatprep.subr.mxu0 0.0
    %3593 = vmatpush1.xpose.msra.mxu0 0.0
    %3594 = vmatprep.subr.mxu0 0.0
    %3595 = vmatpush1.xpose.msra.mxu0 0.0
    %3596 = vmatprep.subr.mxu0 0.0
    %3597 = vmatpush1.xpose.msra.mxu0 0.0
    %3598 = vmatprep.subr.mxu0 0.0
    %3599 = vmatpush1.xpose.msra.mxu0 0.0
    %3600 = vmatprep.subr.mxu0 0.0
    %3601 = vmatpush1.xpose.msra.mxu0 0.0
    %3602 = vmatprep.subr.mxu0 0.0
    %3603 = vmatpush1.xpose.msra.mxu0 0.0
    %3604 = vmatprep.subr.mxu0 0.0
    %3605 = vmatpush1.xpose.msra.mxu0 0.0
    %3606 = vmatprep.subr.mxu0 0.0
    %3607 = vmatpush1.xpose.msra.mxu0 0.0
    %3608 = vmatprep.subr.mxu0 0.0
    %3609 = vmatpush1.xpose.msra.mxu0 0.0
    %3610 = vmatprep.subr.mxu0 0.0
    %3611 = vmatpush1.xpose.msra.mxu0 0.0
    %3612 = vmatprep.subr.mxu0 0.0
    %3613 = vmatpush1.xpose.msra.mxu0 0.0
    %3614 = vmatprep.subr.mxu0 0.0
    %3615 = vmatpush1.xpose.msra.mxu0 0.0
    %3616 = vmatprep.subr.mxu0 0.0
    %3617 = vmatpush1.xpose.msra.mxu0 0.0
    %3618 = vmatprep.subr.mxu0 0.0
    %3619 = vmatpush1.xpose.msra.mxu0 0.0
    %3620 = vmatprep.mubr.f32.mxu0 0.0
    %v3621 = vand.u32 %v2802, 4294901760
    %v3622 = vsub.f32 %v2802, %v3621
    %v3623 = vand.u32 %v3622, 4294901760
    %3624 = vmatmul.mubr.f32.gmra.mrb[0].mxu0 %v3623
    %v3625 = vpop.f32.mrb[0].mxu0
    %v3626 = vadd.f32 %v3432, %v3625
    %v3627 = vpop.f32.mrb[0].mxu0
    %3628 = vmatprep.mubr.f32.mxu0 0.0
    %v3629 = vand.u32 %v2805, 4294901760
    %v3630 = vsub.f32 %v2805, %v3629
    %v3631 = vand.u32 %v3630, 4294901760
    %3632 = vmatmul.mubr.f32.gmra.mrb[0].mxu0 %v3631
    %v3633 = vpop.f32.mrb[0].mxu0
    %v3634 = vadd.f32 %v3439, %v3633
    %v3635 = vpop.f32.mrb[0].mxu0
    %3636 = vmatprep.mubr.f32.mxu0 0.0
    %v3637 = vand.u32 %v2808, 4294901760
    %v3638 = vsub.f32 %v2808, %v3637
    %v3639 = vand.u32 %v3638, 4294901760
    %3640 = vmatmul.mubr.f32.gmra.mrb[0].mxu0 %v3639
    %v3641 = vpop.f32.mrb[0].mxu0
    %v3642 = vadd.f32 %v3446, %v3641
    %v3643 = vpop.f32.mrb[0].mxu0
    %3644 = vmatprep.mubr.f32.mxu0 0.0
    %v3645 = vand.u32 %v2811, 4294901760
    %v3646 = vsub.f32 %v2811, %v3645
    %v3647 = vand.u32 %v3646, 4294901760
    %3648 = vmatmul.mubr.f32.gmra.mrb[0].mxu0 %v3647
    %v3649 = vpop.f32.mrb[0].mxu0
    %v3650 = vadd.f32 %v3453, %v3649
    %v3651 = vpop.f32.mrb[0].mxu0
    %3652 = vmatprep.mubr.f32.mxu0 0.0
    %v3653 = vand.u32 %v2814, 4294901760
    %v3654 = vsub.f32 %v2814, %v3653
    %v3655 = vand.u32 %v3654, 4294901760
    %3656 = vmatmul.mubr.f32.gmra.mrb[0].mxu0 %v3655
    %v3657 = vpop.f32.mrb[0].mxu0
    %v3658 = vadd.f32 %v3460, %v3657
    %v3659 = vpop.f32.mrb[0].mxu0
    %3660 = vmatprep.mubr.f32.mxu0 0.0
    %v3661 = vand.u32 %v2817, 4294901760
    %v3662 = vsub.f32 %v2817, %v3661
    %v3663 = vand.u32 %v3662, 4294901760
    %3664 = vmatmul.mubr.f32.gmra.mrb[0].mxu0 %v3663
    %v3665 = vpop.f32.mrb[0].mxu0
    %v3666 = vadd.f32 %v3467, %v3665
    %v3667 = vpop.f32.mrb[0].mxu0
    %3668 = vmatprep.mubr.f32.mxu0 0.0
    %v3669 = vand.u32 %v2820, 4294901760
    %v3670 = vsub.f32 %v2820, %v3669
    %v3671 = vand.u32 %v3670, 4294901760
    %3672 = vmatmul.mubr.f32.gmra.mrb[0].mxu0 %v3671
    %v3673 = vpop.f32.mrb[0].mxu0
    %v3674 = vadd.f32 %v3474, %v3673
    %v3675 = vpop.f32.mrb[0].mxu0
    %3676 = vmatprep.mubr.f32.mxu0 0.0
    %v3677 = vand.u32 %v2823, 4294901760
    %v3678 = vsub.f32 %v2823, %v3677
    %v3679 = vand.u32 %v3678, 4294901760
    %3680 = vmatmul.mubr.f32.gmra.mrb[0].mxu0 %v3679
    %v3681 = vpop.f32.mrb[0].mxu0
    %v3682 = vadd.f32 %v3481, %v3681
    %v3683 = vpop.f32.mrb[0].mxu0
    %3684 = vmatprep.mubr.f32.mxu0 0.0
    %v3685 = vand.u32 %v2826, 4294901760
    %v3686 = vsub.f32 %v2826, %v3685
    %v3687 = vand.u32 %v3686, 4294901760
    %3688 = vmatmul.mubr.f32.gmra.mrb[0].mxu0 %v3687
    %v3689 = vpop.f32.mrb[0].mxu0
    %v3690 = vadd.f32 %v3488, %v3689
    %v3691 = vpop.f32.mrb[0].mxu0
    %3692 = vmatprep.mubr.f32.mxu0 0.0
    %v3693 = vand.u32 %v2829, 4294901760
    %v3694 = vsub.f32 %v2829, %v3693
    %v3695 = vand.u32 %v3694, 4294901760
    %3696 = vmatmul.mubr.f32.gmra.mrb[0].mxu0 %v3695
    %v3697 = vpop.f32.mrb[0].mxu0
    %v3698 = vadd.f32 %v3495, %v3697
    %v3699 = vpop.f32.mrb[0].mxu0
    %3700 = vmatprep.mubr.f32.mxu0 0.0
    %v3701 = vand.u32 %v2832, 4294901760
    %v3702 = vsub.f32 %v2832, %v3701
    %v3703 = vand.u32 %v3702, 4294901760
    %3704 = vmatmul.mubr.f32.gmra.mrb[0].mxu0 %v3703
    %v3705 = vpop.f32.mrb[0].mxu0
    %v3706 = vadd.f32 %v3502, %v3705
    %v3707 = vpop.f32.mrb[0].mxu0
    %3708 = vmatprep.mubr.f32.mxu0 0.0
    %v3709 = vand.u32 %v2835, 4294901760
    %v3710 = vsub.f32 %v2835, %v3709
    %v3711 = vand.u32 %v3710, 4294901760
    %3712 = vmatmul.mubr.f32.gmra.mrb[0].mxu0 %v3711
    %v3713 = vpop.f32.mrb[0].mxu0
    %v3714 = vadd.f32 %v3509, %v3713
    %v3715 = vpop.f32.mrb[0].mxu0
    %3716 = vmatprep.mubr.f32.mxu0 0.0
    %v3717 = vand.u32 %v2838, 4294901760
    %v3718 = vsub.f32 %v2838, %v3717
    %v3719 = vand.u32 %v3718, 4294901760
    %3720 = vmatmul.mubr.f32.gmra.mrb[0].mxu0 %v3719
    %v3721 = vpop.f32.mrb[0].mxu0
    %v3722 = vadd.f32 %v3516, %v3721
    %v3723 = vpop.f32.mrb[0].mxu0
    %3724 = vmatprep.mubr.f32.mxu0 0.0
    %v3725 = vand.u32 %v2841, 4294901760
    %v3726 = vsub.f32 %v2841, %v3725
    %v3727 = vand.u32 %v3726, 4294901760
    %3728 = vmatmul.mubr.f32.gmra.mrb[0].mxu0 %v3727
    %v3729 = vpop.f32.mrb[0].mxu0
    %v3730 = vadd.f32 %v3523, %v3729
    %v3731 = vpop.f32.mrb[0].mxu0
    %3732 = vmatprep.mubr.f32.mxu0 0.0
    %v3733 = vand.u32 %v2844, 4294901760
    %v3734 = vsub.f32 %v2844, %v3733
    %v3735 = vand.u32 %v3734, 4294901760
    %3736 = vmatmul.mubr.f32.gmra.mrb[0].mxu0 %v3735
    %v3737 = vpop.f32.mrb[0].mxu0
    %v3738 = vadd.f32 %v3530, %v3737
    %v3739 = vpop.f32.mrb[0].mxu0
    %3740 = vmatprep.mubr.f32.mxu0 0.0
    %v3741 = vand.u32 %v2847, 4294901760
    %v3742 = vsub.f32 %v2847, %v3741
    %v3743 = vand.u32 %v3742, 4294901760
    %3744 = vmatmul.mubr.f32.gmra.mrb[0].mxu0 %v3743
    %v3745 = vpop.f32.mrb[0].mxu0
    %v3746 = vadd.f32 %v3537, %v3745
    %v3747 = vpop.f32.mrb[0].mxu0
    %3748 = vdwg.mxu0
    %3749 = vmatprep.subr.mxu0 0.0
    %v3750 = vand.u32 %v2802, 4294901760
    %v3751 = vsub.f32 %v2802, %v3750
    %v3752 = vand.u32 %v3751, 4294901760
    %3753 = vmatpush1.xpose.msra.mxu0 %v3752
    %3754 = vmatprep.subr.mxu0 0.0
    %v3755 = vand.u32 %v2805, 4294901760
    %v3756 = vsub.f32 %v2805, %v3755
    %v3757 = vand.u32 %v3756, 4294901760
    %3758 = vmatpush1.xpose.msra.mxu0 %v3757
    %3759 = vmatprep.subr.mxu0 0.0
    %v3760 = vand.u32 %v2808, 4294901760
    %v3761 = vsub.f32 %v2808, %v3760
    %v3762 = vand.u32 %v3761, 4294901760
    %3763 = vmatpush1.xpose.msra.mxu0 %v3762
    %3764 = vmatprep.subr.mxu0 0.0
    %v3765 = vand.u32 %v2811, 4294901760
    %v3766 = vsub.f32 %v2811, %v3765
    %v3767 = vand.u32 %v3766, 4294901760
    %3768 = vmatpush1.xpose.msra.mxu0 %v3767
    %3769 = vmatprep.subr.mxu0 0.0
    %v3770 = vand.u32 %v2814, 4294901760
    %v3771 = vsub.f32 %v2814, %v3770
    %v3772 = vand.u32 %v3771, 4294901760
    %3773 = vmatpush1.xpose.msra.mxu0 %v3772
    %3774 = vmatprep.subr.mxu0 0.0
    %v3775 = vand.u32 %v2817, 4294901760
    %v3776 = vsub.f32 %v2817, %v3775
    %v3777 = vand.u32 %v3776, 4294901760
    %3778 = vmatpush1.xpose.msra.mxu0 %v3777
    %3779 = vmatprep.subr.mxu0 0.0
    %v3780 = vand.u32 %v2820, 4294901760
    %v3781 = vsub.f32 %v2820, %v3780
    %v3782 = vand.u32 %v3781, 4294901760
    %3783 = vmatpush1.xpose.msra.mxu0 %v3782
    %3784 = vmatprep.subr.mxu0 0.0
    %v3785 = vand.u32 %v2823, 4294901760
    %v3786 = vsub.f32 %v2823, %v3785
    %v3787 = vand.u32 %v3786, 4294901760
    %3788 = vmatpush1.xpose.msra.mxu0 %v3787
    %3789 = vmatprep.subr.mxu0 0.0
    %v3790 = vand.u32 %v2826, 4294901760
    %v3791 = vsub.f32 %v2826, %v3790
    %v3792 = vand.u32 %v3791, 4294901760
    %3793 = vmatpush1.xpose.msra.mxu0 %v3792
    %3794 = vmatprep.subr.mxu0 0.0
    %v3795 = vand.u32 %v2829, 4294901760
    %v3796 = vsub.f32 %v2829, %v3795
    %v3797 = vand.u32 %v3796, 4294901760
    %3798 = vmatpush1.xpose.msra.mxu0 %v3797
    %3799 = vmatprep.subr.mxu0 0.0
    %v3800 = vand.u32 %v2832, 4294901760
    %v3801 = vsub.f32 %v2832, %v3800
    %v3802 = vand.u32 %v3801, 4294901760
    %3803 = vmatpush1.xpose.msra.mxu0 %v3802
    %3804 = vmatprep.subr.mxu0 0.0
    %v3805 = vand.u32 %v2835, 4294901760
    %v3806 = vsub.f32 %v2835, %v3805
    %v3807 = vand.u32 %v3806, 4294901760
    %3808 = vmatpush1.xpose.msra.mxu0 %v3807
    %3809 = vmatprep.subr.mxu0 0.0
    %v3810 = vand.u32 %v2838, 4294901760
    %v3811 = vsub.f32 %v2838, %v3810
    %v3812 = vand.u32 %v3811, 4294901760
    %3813 = vmatpush1.xpose.msra.mxu0 %v3812
    %3814 = vmatprep.subr.mxu0 0.0
    %v3815 = vand.u32 %v2841, 4294901760
    %v3816 = vsub.f32 %v2841, %v3815
    %v3817 = vand.u32 %v3816, 4294901760
    %3818 = vmatpush1.xpose.msra.mxu0 %v3817
    %3819 = vmatprep.subr.mxu0 0.0
    %v3820 = vand.u32 %v2844, 4294901760
    %v3821 = vsub.f32 %v2844, %v3820
    %v3822 = vand.u32 %v3821, 4294901760
    %3823 = vmatpush1.xpose.msra.mxu0 %v3822
    %3824 = vmatprep.subr.mxu0 0.0
    %v3825 = vand.u32 %v2847, 4294901760
    %v3826 = vsub.f32 %v2847, %v3825
    %v3827 = vand.u32 %v3826, 4294901760
    %3828 = vmatpush1.xpose.msra.mxu0 %v3827
    %3829 = vmatprep.subr.mxu0 0.0
    %3830 = vmatpush1.xpose.msra.mxu0 0.0
    %3831 = vmatprep.subr.mxu0 0.0
    %3832 = vmatpush1.xpose.msra.mxu0 0.0
    %3833 = vmatprep.subr.mxu0 0.0
    %3834 = vmatpush1.xpose.msra.mxu0 0.0
    %3835 = vmatprep.subr.mxu0 0.0
    %3836 = vmatpush1.xpose.msra.mxu0 0.0
    %3837 = vmatprep.subr.mxu0 0.0
    %3838 = vmatpush1.xpose.msra.mxu0 0.0
    %3839 = vmatprep.subr.mxu0 0.0
    %3840 = vmatpush1.xpose.msra.mxu0 0.0
    %3841 = vmatprep.subr.mxu0 0.0
    %3842 = vmatpush1.xpose.msra.mxu0 0.0
    %3843 = vmatprep.subr.mxu0 0.0
    %3844 = vmatpush1.xpose.msra.mxu0 0.0
    %3845 = vmatprep.subr.mxu0 0.0
    %3846 = vmatpush1.xpose.msra.mxu0 0.0
    %3847 = vmatprep.subr.mxu0 0.0
    %3848 = vmatpush1.xpose.msra.mxu0 0.0
    %3849 = vmatprep.subr.mxu0 0.0
    %3850 = vmatpush1.xpose.msra.mxu0 0.0
    %3851 = vmatprep.subr.mxu0 0.0
    %3852 = vmatpush1.xpose.msra.mxu0 0.0
    %3853 = vmatprep.subr.mxu0 0.0
    %3854 = vmatpush1.xpose.msra.mxu0 0.0
    %3855 = vmatprep.subr.mxu0 0.0
    %3856 = vmatpush1.xpose.msra.mxu0 0.0
    %3857 = vmatprep.subr.mxu0 0.0
    %3858 = vmatpush1.xpose.msra.mxu0 0.0
    %3859 = vmatprep.subr.mxu0 0.0
    %3860 = vmatpush1.xpose.msra.mxu0 0.0
    %3861 = vmatprep.mubr.f32.mxu0 0.0
    %v3862 = vand.u32 %v2802, 4294901760
    %3863 = vmatmul.mubr.f32.gmra.mrb[0].mxu0 %v3862
    %v3864 = vpop.f32.mrb[0].mxu0
    %v3865 = vadd.f32 %v3626, %v3864
    %v3866 = vpop.f32.mrb[0].mxu0
    %3867 = vmatprep.mubr.f32.mxu0 0.0
    %v3868 = vand.u32 %v2805, 4294901760
    %3869 = vmatmul.mubr.f32.gmra.mrb[0].mxu0 %v3868
    %v3870 = vpop.f32.mrb[0].mxu0
    %v3871 = vadd.f32 %v3634, %v3870
    %v3872 = vpop.f32.mrb[0].mxu0
    %3873 = vmatprep.mubr.f32.mxu0 0.0
    %v3874 = vand.u32 %v2808, 4294901760
    %3875 = vmatmul.mubr.f32.gmra.mrb[0].mxu0 %v3874
    %v3876 = vpop.f32.mrb[0].mxu0
    %v3877 = vadd.f32 %v3642, %v3876
    %v3878 = vpop.f32.mrb[0].mxu0
    %3879 = vmatprep.mubr.f32.mxu0 0.0
    %v3880 = vand.u32 %v2811, 4294901760
    %3881 = vmatmul.mubr.f32.gmra.mrb[0].mxu0 %v3880
    %v3882 = vpop.f32.mrb[0].mxu0
    %v3883 = vadd.f32 %v3650, %v3882
    %v3884 = vpop.f32.mrb[0].mxu0
    %3885 = vmatprep.mubr.f32.mxu0 0.0
    %v3886 = vand.u32 %v2814, 4294901760
    %3887 = vmatmul.mubr.f32.gmra.mrb[0].mxu0 %v3886
    %v3888 = vpop.f32.mrb[0].mxu0
    %v3889 = vadd.f32 %v3658, %v3888
    %v3890 = vpop.f32.mrb[0].mxu0
    %3891 = vmatprep.mubr.f32.mxu0 0.0
    %v3892 = vand.u32 %v2817, 4294901760
    %3893 = vmatmul.mubr.f32.gmra.mrb[0].mxu0 %v3892
    %v3894 = vpop.f32.mrb[0].mxu0
    %v3895 = vadd.f32 %v3666, %v3894
    %v3896 = vpop.f32.mrb[0].mxu0
    %3897 = vmatprep.mubr.f32.mxu0 0.0
    %v3898 = vand.u32 %v2820, 4294901760
    %3899 = vmatmul.mubr.f32.gmra.mrb[0].mxu0 %v3898
    %v3900 = vpop.f32.mrb[0].mxu0
    %v3901 = vadd.f32 %v3674, %v3900
    %v3902 = vpop.f32.mrb[0].mxu0
    %3903 = vmatprep.mubr.f32.mxu0 0.0
    %v3904 = vand.u32 %v2823, 4294901760
    %3905 = vmatmul.mubr.f32.gmra.mrb[0].mxu0 %v3904
    %v3906 = vpop.f32.mrb[0].mxu0
    %v3907 = vadd.f32 %v3682, %v3906
    %v3908 = vpop.f32.mrb[0].mxu0
    %3909 = vmatprep.mubr.f32.mxu0 0.0
    %v3910 = vand.u32 %v2826, 4294901760
    %3911 = vmatmul.mubr.f32.gmra.mrb[0].mxu0 %v3910
    %v3912 = vpop.f32.mrb[0].mxu0
    %v3913 = vadd.f32 %v3690, %v3912
    %v3914 = vpop.f32.mrb[0].mxu0
    %3915 = vmatprep.mubr.f32.mxu0 0.0
    %v3916 = vand.u32 %v2829, 4294901760
    %3917 = vmatmul.mubr.f32.gmra.mrb[0].mxu0 %v3916
    %v3918 = vpop.f32.mrb[0].mxu0
    %v3919 = vadd.f32 %v3698, %v3918
    %v3920 = vpop.f32.mrb[0].mxu0
    %3921 = vmatprep.mubr.f32.mxu0 0.0
    %v3922 = vand.u32 %v2832, 4294901760
    %3923 = vmatmul.mubr.f32.gmra.mrb[0].mxu0 %v3922
    %v3924 = vpop.f32.mrb[0].mxu0
    %v3925 = vadd.f32 %v3706, %v3924
    %v3926 = vpop.f32.mrb[0].mxu0
    %3927 = vmatprep.mubr.f32.mxu0 0.0
    %v3928 = vand.u32 %v2835, 4294901760
    %3929 = vmatmul.mubr.f32.gmra.mrb[0].mxu0 %v3928
    %v3930 = vpop.f32.mrb[0].mxu0
    %v3931 = vadd.f32 %v3714, %v3930
    %v3932 = vpop.f32.mrb[0].mxu0
    %3933 = vmatprep.mubr.f32.mxu0 0.0
    %v3934 = vand.u32 %v2838, 4294901760
    %3935 = vmatmul.mubr.f32.gmra.mrb[0].mxu0 %v3934
    %v3936 = vpop.f32.mrb[0].mxu0
    %v3937 = vadd.f32 %v3722, %v3936
    %v3938 = vpop.f32.mrb[0].mxu0
    %3939 = vmatprep.mubr.f32.mxu0 0.0
    %v3940 = vand.u32 %v2841, 4294901760
    %3941 = vmatmul.mubr.f32.gmra.mrb[0].mxu0 %v3940
    %v3942 = vpop.f32.mrb[0].mxu0
    %v3943 = vadd.f32 %v3730, %v3942
    %v3944 = vpop.f32.mrb[0].mxu0
    %3945 = vmatprep.mubr.f32.mxu0 0.0
    %v3946 = vand.u32 %v2844, 4294901760
    %3947 = vmatmul.mubr.f32.gmra.mrb[0].mxu0 %v3946
    %v3948 = vpop.f32.mrb[0].mxu0
    %v3949 = vadd.f32 %v3738, %v3948
    %v3950 = vpop.f32.mrb[0].mxu0
    %3951 = vmatprep.mubr.f32.mxu0 0.0
    %v3952 = vand.u32 %v2847, 4294901760
    %3953 = vmatmul.mubr.f32.gmra.mrb[0].mxu0 %v3952
    %v3954 = vpop.f32.mrb[0].mxu0
    %v3955 = vadd.f32 %v3746, %v3954
    %v3956 = vpop.f32.mrb[0].mxu0
    %3957 = vdwg.mxu0
    %3958 = vmatprep.subr.mxu0 0.0
    %v3959 = vand.u32 %v2802, 4294901760
    %3960 = vmatpush1.xpose.msra.mxu0 %v3959
    %3961 = vmatprep.subr.mxu0 0.0
    %v3962 = vand.u32 %v2805, 4294901760
    %3963 = vmatpush1.xpose.msra.mxu0 %v3962
    %3964 = vmatprep.subr.mxu0 0.0
    %v3965 = vand.u32 %v2808, 4294901760
    %3966 = vmatpush1.xpose.msra.mxu0 %v3965
    %3967 = vmatprep.subr.mxu0 0.0
    %v3968 = vand.u32 %v2811, 4294901760
    %3969 = vmatpush1.xpose.msra.mxu0 %v3968
    %3970 = vmatprep.subr.mxu0 0.0
    %v3971 = vand.u32 %v2814, 4294901760
    %3972 = vmatpush1.xpose.msra.mxu0 %v3971
    %3973 = vmatprep.subr.mxu0 0.0
    %v3974 = vand.u32 %v2817, 4294901760
    %3975 = vmatpush1.xpose.msra.mxu0 %v3974
    %3976 = vmatprep.subr.mxu0 0.0
    %v3977 = vand.u32 %v2820, 4294901760
    %3978 = vmatpush1.xpose.msra.mxu0 %v3977
    %3979 = vmatprep.subr.mxu0 0.0
    %v3980 = vand.u32 %v2823, 4294901760
    %3981 = vmatpush1.xpose.msra.mxu0 %v3980
    %3982 = vmatprep.subr.mxu0 0.0
    %v3983 = vand.u32 %v2826, 4294901760
    %3984 = vmatpush1.xpose.msra.mxu0 %v3983
    %3985 = vmatprep.subr.mxu0 0.0
    %v3986 = vand.u32 %v2829, 4294901760
    %3987 = vmatpush1.xpose.msra.mxu0 %v3986
    %3988 = vmatprep.subr.mxu0 0.0
    %v3989 = vand.u32 %v2832, 4294901760
    %3990 = vmatpush1.xpose.msra.mxu0 %v3989
    %3991 = vmatprep.subr.mxu0 0.0
    %v3992 = vand.u32 %v2835, 4294901760
    %3993 = vmatpush1.xpose.msra.mxu0 %v3992
    %3994 = vmatprep.subr.mxu0 0.0
    %v3995 = vand.u32 %v2838, 4294901760
    %3996 = vmatpush1.xpose.msra.mxu0 %v3995
    %3997 = vmatprep.subr.mxu0 0.0
    %v3998 = vand.u32 %v2841, 4294901760
    %3999 = vmatpush1.xpose.msra.mxu0 %v3998
    %4000 = vmatprep.subr.mxu0 0.0
    %v4001 = vand.u32 %v2844, 4294901760
    %4002 = vmatpush1.xpose.msra.mxu0 %v4001
    %4003 = vmatprep.subr.mxu0 0.0
    %v4004 = vand.u32 %v2847, 4294901760
    %4005 = vmatpush1.xpose.msra.mxu0 %v4004
    %4006 = vmatprep.subr.mxu0 0.0
    %4007 = vmatpush1.xpose.msra.mxu0 0.0
    %4008 = vmatprep.subr.mxu0 0.0
    %4009 = vmatpush1.xpose.msra.mxu0 0.0
    %4010 = vmatprep.subr.mxu0 0.0
    %4011 = vmatpush1.xpose.msra.mxu0 0.0
    %4012 = vmatprep.subr.mxu0 0.0
    %4013 = vmatpush1.xpose.msra.mxu0 0.0
    %4014 = vmatprep.subr.mxu0 0.0
    %4015 = vmatpush1.xpose.msra.mxu0 0.0
    %4016 = vmatprep.subr.mxu0 0.0
    %4017 = vmatpush1.xpose.msra.mxu0 0.0
    %4018 = vmatprep.subr.mxu0 0.0
    %4019 = vmatpush1.xpose.msra.mxu0 0.0
    %4020 = vmatprep.subr.mxu0 0.0
    %4021 = vmatpush1.xpose.msra.mxu0 0.0
    %4022 = vmatprep.subr.mxu0 0.0
    %4023 = vmatpush1.xpose.msra.mxu0 0.0
    %4024 = vmatprep.subr.mxu0 0.0
    %4025 = vmatpush1.xpose.msra.mxu0 0.0
    %4026 = vmatprep.subr.mxu0 0.0
    %4027 = vmatpush1.xpose.msra.mxu0 0.0
    %4028 = vmatprep.subr.mxu0 0.0
    %4029 = vmatpush1.xpose.msra.mxu0 0.0
    %4030 = vmatprep.subr.mxu0 0.0
    %4031 = vmatpush1.xpose.msra.mxu0 0.0
    %4032 = vmatprep.subr.mxu0 0.0
    %4033 = vmatpush1.xpose.msra.mxu0 0.0
    %4034 = vmatprep.subr.mxu0 0.0
    %4035 = vmatpush1.xpose.msra.mxu0 0.0
    %4036 = vmatprep.subr.mxu0 0.0
    %4037 = vmatpush1.xpose.msra.mxu0 0.0
    %4038 = vmatprep.mubr.f32.mxu0 0.0
    %v4039 = vand.u32 %v2802, 4294901760
    %4040 = vmatmul.mubr.f32.gmra.mrb[0].mxu0 %v4039
    %v4041 = vpop.f32.mrb[0].mxu0
    %v4042 = vadd.f32 %v3865, %v4041
    %v4043 = vpop.f32.mrb[0].mxu0
    %4044 = vmatprep.mubr.f32.mxu0 0.0
    %v4045 = vand.u32 %v2805, 4294901760
    %4046 = vmatmul.mubr.f32.gmra.mrb[0].mxu0 %v4045
    %v4047 = vpop.f32.mrb[0].mxu0
    %v4048 = vadd.f32 %v3871, %v4047
    %v4049 = vpop.f32.mrb[0].mxu0
    %4050 = vmatprep.mubr.f32.mxu0 0.0
    %v4051 = vand.u32 %v2808, 4294901760
    %4052 = vmatmul.mubr.f32.gmra.mrb[0].mxu0 %v4051
    %v4053 = vpop.f32.mrb[0].mxu0
    %v4054 = vadd.f32 %v3877, %v4053
    %v4055 = vpop.f32.mrb[0].mxu0
    %4056 = vmatprep.mubr.f32.mxu0 0.0
    %v4057 = vand.u32 %v2811, 4294901760
    %4058 = vmatmul.mubr.f32.gmra.mrb[0].mxu0 %v4057
    %v4059 = vpop.f32.mrb[0].mxu0
    %v4060 = vadd.f32 %v3883, %v4059
    %v4061 = vpop.f32.mrb[0].mxu0
    %4062 = vmatprep.mubr.f32.mxu0 0.0
    %v4063 = vand.u32 %v2814, 4294901760
    %4064 = vmatmul.mubr.f32.gmra.mrb[0].mxu0 %v4063
    %v4065 = vpop.f32.mrb[0].mxu0
    %v4066 = vadd.f32 %v3889, %v4065
    %v4067 = vpop.f32.mrb[0].mxu0
    %4068 = vmatprep.mubr.f32.mxu0 0.0
    %v4069 = vand.u32 %v2817, 4294901760
    %4070 = vmatmul.mubr.f32.gmra.mrb[0].mxu0 %v4069
    %v4071 = vpop.f32.mrb[0].mxu0
    %v4072 = vadd.f32 %v3895, %v4071
    %v4073 = vpop.f32.mrb[0].mxu0
    %4074 = vmatprep.mubr.f32.mxu0 0.0
    %v4075 = vand.u32 %v2820, 4294901760
    %4076 = vmatmul.mubr.f32.gmra.mrb[0].mxu0 %v4075
    %v4077 = vpop.f32.mrb[0].mxu0
    %v4078 = vadd.f32 %v3901, %v4077
    %v4079 = vpop.f32.mrb[0].mxu0
    %4080 = vmatprep.mubr.f32.mxu0 0.0
    %v4081 = vand.u32 %v2823, 4294901760
    %4082 = vmatmul.mubr.f32.gmra.mrb[0].mxu0 %v4081
    %v4083 = vpop.f32.mrb[0].mxu0
    %v4084 = vadd.f32 %v3907, %v4083
    %v4085 = vpop.f32.mrb[0].mxu0
    %4086 = vmatprep.mubr.f32.mxu0 0.0
    %v4087 = vand.u32 %v2826, 4294901760
    %4088 = vmatmul.mubr.f32.gmra.mrb[0].mxu0 %v4087
    %v4089 = vpop.f32.mrb[0].mxu0
    %v4090 = vadd.f32 %v3913, %v4089
    %v4091 = vpop.f32.mrb[0].mxu0
    %4092 = vmatprep.mubr.f32.mxu0 0.0
    %v4093 = vand.u32 %v2829, 4294901760
    %4094 = vmatmul.mubr.f32.gmra.mrb[0].mxu0 %v4093
    %v4095 = vpop.f32.mrb[0].mxu0
    %v4096 = vadd.f32 %v3919, %v4095
    %v4097 = vpop.f32.mrb[0].mxu0
    %4098 = vmatprep.mubr.f32.mxu0 0.0
    %v4099 = vand.u32 %v2832, 4294901760
    %4100 = vmatmul.mubr.f32.gmra.mrb[0].mxu0 %v4099
    %v4101 = vpop.f32.mrb[0].mxu0
    %v4102 = vadd.f32 %v3925, %v4101
    %v4103 = vpop.f32.mrb[0].mxu0
    %4104 = vmatprep.mubr.f32.mxu0 0.0
    %v4105 = vand.u32 %v2835, 4294901760
    %4106 = vmatmul.mubr.f32.gmra.mrb[0].mxu0 %v4105
    %v4107 = vpop.f32.mrb[0].mxu0
    %v4108 = vadd.f32 %v3931, %v4107
    %v4109 = vpop.f32.mrb[0].mxu0
    %4110 = vmatprep.mubr.f32.mxu0 0.0
    %v4111 = vand.u32 %v2838, 4294901760
    %4112 = vmatmul.mubr.f32.gmra.mrb[0].mxu0 %v4111
    %v4113 = vpop.f32.mrb[0].mxu0
    %v4114 = vadd.f32 %v3937, %v4113
    %v4115 = vpop.f32.mrb[0].mxu0
    %4116 = vmatprep.mubr.f32.mxu0 0.0
    %v4117 = vand.u32 %v2841, 4294901760
    %4118 = vmatmul.mubr.f32.gmra.mrb[0].mxu0 %v4117
    %v4119 = vpop.f32.mrb[0].mxu0
    %v4120 = vadd.f32 %v3943, %v4119
    %v4121 = vpop.f32.mrb[0].mxu0
    %4122 = vmatprep.mubr.f32.mxu0 0.0
    %v4123 = vand.u32 %v2844, 4294901760
    %4124 = vmatmul.mubr.f32.gmra.mrb[0].mxu0 %v4123
    %v4125 = vpop.f32.mrb[0].mxu0
    %v4126 = vadd.f32 %v3949, %v4125
    %v4127 = vpop.f32.mrb[0].mxu0
    %4128 = vmatprep.mubr.f32.mxu0 0.0
    %v4129 = vand.u32 %v2847, 4294901760
    %4130 = vmatmul.mubr.f32.gmra.mrb[0].mxu0 %v4129
    %v4131 = vpop.f32.mrb[0].mxu0
    %v4132 = vadd.f32 %v3955, %v4131
    %v4133 = vpop.f32.mrb[0].mxu0
    %4134 = vdwg.mxu0
    %v4135 = vmul.f32 %v2692, %v2692
    %v4136 = vmul.f32 %v2698, %v2698
    %v4137 = vmul.f32 %v2704, %v2704
    %v4138 = vmul.f32 %v2710, %v2710
    %v4139 = vmul.f32 %v2716, %v2716
    %v4140 = vmul.f32 %v2722, %v2722
    %v4141 = vmul.f32 %v2728, %v2728
    %v4142 = vmul.f32 %v2734, %v2734
    %v4143 = vmul.f32 %v2740, %v2740
    %v4144 = vmul.f32 %v2746, %v2746
    %v4145 = vmul.f32 %v2752, %v2752
    %v4146 = vmul.f32 %v2758, %v2758
    %v4147 = vmul.f32 %v2764, %v2764
    %v4148 = vmul.f32 %v2770, %v2770
    %v4149 = vmul.f32 %v2776, %v2776
    %v4150 = vmul.f32 %v2782, %v2782
    %v4151 = vsel %vm57, %v4135, 0.0
    %4152 = vadd.xlane.f32.xlu0 %v4151
    %v4153 = vpop.xlane.xlu0 %4152
    %v4154 = vsel %vm57, %v4136, 0.0
    %4155 = vadd.xlane.f32.xlu0 %v4154
    %v4156 = vpop.xlane.xlu0 %4155
    %v4157 = vsel %vm57, %v4137, 0.0
    %4158 = vadd.xlane.f32.xlu0 %v4157
    %v4159 = vpop.xlane.xlu0 %4158
    %v4160 = vsel %vm57, %v4138, 0.0
    %4161 = vadd.xlane.f32.xlu0 %v4160
    %v4162 = vpop.xlane.xlu0 %4161
    %v4163 = vsel %vm57, %v4139, 0.0
    %4164 = vadd.xlane.f32.xlu0 %v4163
    %v4165 = vpop.xlane.xlu0 %4164
    %v4166 = vsel %vm57, %v4140, 0.0
    %4167 = vadd.xlane.f32.xlu0 %v4166
    %v4168 = vpop.xlane.xlu0 %4167
    %v4169 = vsel %vm57, %v4141, 0.0
    %4170 = vadd.xlane.f32.xlu0 %v4169
    %v4171 = vpop.xlane.xlu0 %4170
    %v4172 = vsel %vm57, %v4142, 0.0
    %4173 = vadd.xlane.f32.xlu0 %v4172
    %v4174 = vpop.xlane.xlu0 %4173
    %v4175 = vsel %vm57, %v4143, 0.0
    %4176 = vadd.xlane.f32.xlu0 %v4175
    %v4177 = vpop.xlane.xlu0 %4176
    %v4178 = vsel %vm57, %v4144, 0.0
    %4179 = vadd.xlane.f32.xlu0 %v4178
    %v4180 = vpop.xlane.xlu0 %4179
    %v4181 = vsel %vm57, %v4145, 0.0
    %4182 = vadd.xlane.f32.xlu0 %v4181
    %v4183 = vpop.xlane.xlu0 %4182
    %v4184 = vsel %vm57, %v4146, 0.0
    %4185 = vadd.xlane.f32.xlu0 %v4184
    %v4186 = vpop.xlane.xlu0 %4185
    %v4187 = vsel %vm57, %v4147, 0.0
    %4188 = vadd.xlane.f32.xlu0 %v4187
    %v4189 = vpop.xlane.xlu0 %4188
    %v4190 = vsel %vm57, %v4148, 0.0
    %4191 = vadd.xlane.f32.xlu0 %v4190
    %v4192 = vpop.xlane.xlu0 %4191
    %v4193 = vsel %vm57, %v4149, 0.0
    %4194 = vadd.xlane.f32.xlu0 %v4193
    %v4195 = vpop.xlane.xlu0 %4194
    %v4196 = vsel %vm57, %v4150, 0.0
    %4197 = vadd.xlane.f32.xlu0 %v4196
    %v4198 = vpop.xlane.xlu0 %4197
    %v4199 = vadd.f32 %v4153, %v4156
    %v4200 = vadd.f32 %v4199, %v4159
    %v4201 = vadd.f32 %v4200, %v4162
    %v4202 = vadd.f32 %v4201, %v4165
    %v4203 = vadd.f32 %v4202, %v4168
    %v4204 = vadd.f32 %v4203, %v4171
    %v4205 = vadd.f32 %v4204, %v4174
    %v4206 = vadd.f32 %v4205, %v4177
    %v4207 = vadd.f32 %v4206, %v4180
    %v4208 = vadd.f32 %v4207, %v4183
    %v4209 = vadd.f32 %v4208, %v4186
    %v4210 = vadd.f32 %v4209, %v4189
    %v4211 = vadd.f32 %v4210, %v4192
    %v4212 = vadd.f32 %v4211, %v4195
    %v4213 = vadd.f32 %v4212, %v4198
    %v4214 = vrot.slane %v4213, 4
    %v4215 = vadd.f32 %v4213, %v4214
    %v4216 = vrot.slane %v4215, 2
    %v4217 = vadd.f32 %v4215, %v4216
    %v4218 = vrot.slane %v4217, 1
    %v4219 = vadd.f32 %v4217, %v4218
    %4220 = vadd.xlane.f32.xlu0 %v4042
    %v4221 = vpop.xlane.xlu0 %4220
    %4222 = vadd.xlane.f32.xlu0 %v4048
    %v4223 = vpop.xlane.xlu0 %4222
    %4224 = vadd.xlane.f32.xlu0 %v4054
    %v4225 = vpop.xlane.xlu0 %4224
    %4226 = vadd.xlane.f32.xlu0 %v4060
    %v4227 = vpop.xlane.xlu0 %4226
    %4228 = vadd.xlane.f32.xlu0 %v4066
    %v4229 = vpop.xlane.xlu0 %4228
    %4230 = vadd.xlane.f32.xlu0 %v4072
    %v4231 = vpop.xlane.xlu0 %4230
    %4232 = vadd.xlane.f32.xlu0 %v4078
    %v4233 = vpop.xlane.xlu0 %4232
    %4234 = vadd.xlane.f32.xlu0 %v4084
    %v4235 = vpop.xlane.xlu0 %4234
    %4236 = vadd.xlane.f32.xlu0 %v4090
    %v4237 = vpop.xlane.xlu0 %4236
    %4238 = vadd.xlane.f32.xlu0 %v4096
    %v4239 = vpop.xlane.xlu0 %4238
    %4240 = vadd.xlane.f32.xlu0 %v4102
    %v4241 = vpop.xlane.xlu0 %4240
    %4242 = vadd.xlane.f32.xlu0 %v4108
    %v4243 = vpop.xlane.xlu0 %4242
    %4244 = vadd.xlane.f32.xlu0 %v4114
    %v4245 = vpop.xlane.xlu0 %4244
    %4246 = vadd.xlane.f32.xlu0 %v4120
    %v4247 = vpop.xlane.xlu0 %4246
    %4248 = vadd.xlane.f32.xlu0 %v4126
    %v4249 = vpop.xlane.xlu0 %4248
    %4250 = vadd.xlane.f32.xlu0 %v4132
    %v4251 = vpop.xlane.xlu0 %4250
    %v4252 = vadd.f32 %v4221, %v4223
    %v4253 = vadd.f32 %v4252, %v4225
    %v4254 = vadd.f32 %v4253, %v4227
    %v4255 = vadd.f32 %v4254, %v4229
    %v4256 = vadd.f32 %v4255, %v4231
    %v4257 = vadd.f32 %v4256, %v4233
    %v4258 = vadd.f32 %v4257, %v4235
    %v4259 = vadd.f32 %v4258, %v4237
    %v4260 = vadd.f32 %v4259, %v4239
    %v4261 = vadd.f32 %v4260, %v4241
    %v4262 = vadd.f32 %v4261, %v4243
    %v4263 = vadd.f32 %v4262, %v4245
    %v4264 = vadd.f32 %v4263, %v4247
    %v4265 = vadd.f32 %v4264, %v4249
    %v4266 = vadd.f32 %v4265, %v4251
    %v4267 = vrot.slane %v4266, 4
    %v4268 = vadd.f32 %v4266, %v4267
    %v4269 = vrot.slane %v4268, 2
    %v4270 = vadd.f32 %v4268, %v4269
    %v4271 = vrot.slane %v4270, 1
    %v4272 = vadd.f32 %v4270, %v4271
    %v4273 = vrcp.pop 128.0
    %v4274 = vmul.f32 %v4219, %v4273
    %v4275 = vmul.f32 %v4274, 2.0
    %v4276 = vrcp.pop 16384.0
    %v4277 = vmul.f32 %v4272, %v4276
    %v4278 = vmul.f32 %v4277, 2.0
    %v4279 = vsub.f32 %v4275, %v4278
    %v4280 = vld [vmem:[%s1] sm:$0x3]
    %v4281 = vld [vmem:[%s2] sm:$0x3]
    %v4282 = vld [vmem:[%s3] sm:$0x3]
    %v4283 = vld [vmem:[#allocation2] sm:$0x1]
    %v4284 = vmul.f32 %v4280, %v4279
    %v4285 = vadd.f32 %v4284, %v4281
    %v4286 = vtanh.pop %v4285
    %v4287 = vmul.f32 %v4282, %v4286
    %vm4288 = vcmask 1024
    %v4289 = vsel %vm4288, %v4287, 0.0
    %v4290 = vrot.slane %v4289, 4
    %v4291 = vadd.f32 %v4289, %v4290
    %v4292 = vrot.slane %v4291, 2
    %v4293 = vadd.f32 %v4291, %v4292
    %v4294 = vrot.slane %v4293, 1
    %v4295 = vadd.f32 %v4293, %v4294
    %v4296 = vadd.f32 %v4295, %v4283
    %v4297 = vtanh.pop %v4296
    %v4298 = vmul.f32 %v4297, 3.0
    %v4299 = vmul.f32 %v4298, 1.442695
    %v4300 = vpow.pop %v4299
    %vm4301 = vcmask 0
    %4302 = vst.msk [vmem:[#allocation4] sm:$0x1] %vm4301, %v4300
    %v4303 = vld [vmem:[%s5] sm:$0x3]
    %v4304 = vld [vmem:[%s6] sm:$0x3]
    %v4305 = vld [vmem:[%s7] sm:$0x3]
    %v4306 = vld [vmem:[#allocation3] sm:$0x1]
    %v4307 = vmul.f32 %v4303, %v4279
    %v4308 = vadd.f32 %v4307, %v4304
    %v4309 = vtanh.pop %v4308
    %v4310 = vmul.f32 %v4305, %v4309
    %v4311 = vsel %vm4288, %v4310, 0.0
    %v4312 = vrot.slane %v4311, 4
    %v4313 = vadd.f32 %v4311, %v4312
    %v4314 = vrot.slane %v4313, 2
    %v4315 = vadd.f32 %v4313, %v4314
    %v4316 = vrot.slane %v4315, 1
    %v4317 = vadd.f32 %v4315, %v4316
    %v4318 = vadd.f32 %v4317, %v4306
    %v4319 = vtanh.pop %v4318
    %v4320 = vmul.f32 %v4319, -3.0
    %v4321 = vmul.f32 %v4320, 1.442695
    %v4322 = vpow.pop %v4321
    %4323 = vst.msk [vmem:[#allocation6] sm:$0x1] %vm4301, %v4322
    // Predicated region
    $region38: #{_lambda_.3} parent=1 // pred_check
      _
    $region39: #{_lambda_.3} parent=1 // pred_check_branch
      %4325 = sbr.rel (0) target = $region41
    $region40: #{_lambda_.3} parent=1 // pred_region
      _
    $region41: #{_lambda_.3} parent=1 // pred_fallthru
      _
    // Predicated region
    $region42: #{_lambda_.3} parent=1 // pred_check
      _
    $region43: #{_lambda_.3} parent=1 // pred_check_branch
      %4327 = sbr.rel (0) target = $region45
    $region44: #{_lambda_.3} parent=1 // pred_region
      %s4329 = ssub.s32 16, 16
      %4330 = vsyncadd [#allocation5], %s4329
      %s4332 = sshll.u32 [#allocation4], 4
      %s4333 = int_to_ptr.vmem [resolvable:$true] %s4332
      %4335 = dma.vmem_to_hbm [thread:$0]  %s4333, 16, %s10, [#allocation5]
    $region45: #{_lambda_.3} parent=1 // pred_fallthru
      _
    // Predicated region
    $region46: #{_lambda_.3} parent=1 // pred_check
      _
    $region47: #{_lambda_.3} parent=1 // pred_check_branch
      %4337 = sbr.rel (0) target = $region49
    $region48: #{_lambda_.3} parent=1 // pred_region
      %s4339 = ssub.s32 16, 16
      %4340 = vsyncadd [#allocation7], %s4339
      %s4342 = sshll.u32 [#allocation6], 4
      %s4343 = int_to_ptr.vmem [resolvable:$true] %s4342
      %4345 = dma.vmem_to_hbm [thread:$0]  %s4343, 16, %s11, [#allocation7]
    $region49: #{_lambda_.3} parent=1 // pred_fallthru
      _
    // Predicated region
    $region50: #{_lambda_.3} parent=1 // pred_check
      _
    $region51: #{_lambda_.3} parent=1 // pred_check_branch
      %4347 = sbr.rel (0) target = $region53
    $region52: #{_lambda_.3} parent=1 // pred_region
      _
    $region53: #{_lambda_.3} parent=1 // pred_fallthru
      _
    // Predicated region
    $region54: #{_lambda_.3} parent=1 // pred_check
      _
    $region55: #{_lambda_.3} parent=1 // pred_check_branch
      %4349 = sbr.rel (0) target = $region57
    $region56: #{_lambda_.3} parent=1 // pred_region
      %4350 = dma.done [#allocation5], 16
    $region57: #{_lambda_.3} parent=1 // pred_fallthru
      _
    // Predicated region
    $region58: #{_lambda_.3} parent=1 // pred_check
      _
    $region59: #{_lambda_.3} parent=1 // pred_check_branch
      %4352 = sbr.rel (0) target = $region61
    $region60: #{_lambda_.3} parent=1 // pred_region
      %4353 = dma.done [#allocation7], 16
    $region61: #{_lambda_.3} parent=1 // pred_fallthru
      _
    %4354 = vsyncpa [#allocation5], 1
    %4355 = vsyncpa [#allocation7], 1

</llo_original>
